<compile_context>
chip_gen: v6e
topology: v6e:2x2x1
jax: 0.10.0
libtpu: 0.0.40
codegen_flags: <defaults>
</compile_context>

<pallas_src>
import functools

import jax
import jax.numpy as jnp
from jax.experimental import pallas as pl
from jax.experimental.pallas import tpu as pltpu


# ------------------------------- helpers ----------------------------------- #

def _round_up(x, m):
    return ((x + m - 1) // m) * m


def _pick_tile(m, target=512):
    """Row tile: multiple of 8, at most `target`, and (after padding) divides M."""
    tm = min(target, _round_up(m, 8))
    return tm, _round_up(m, tm)


# ----------------------------- Pallas kernels ------------------------------ #

def conv_relu_pool_kernel(p_ref, w_ref, b_ref, o_ref, *, c_store):
    """Fused conv-as-matmul + bias + ReLU + 2x2 max-pool.

    p_ref : (4, TM, Kpad)  im2col patches for the four pool-window corners
    w_ref : (Kpad, 128)    conv weight, K and N zero-padded
    b_ref : (1, 128)       bias, zero-padded
    o_ref : (TM, c_store)  pooled output (logical channels only)
    """
    w = w_ref[...]
    b = b_ref[...]
    pooled = None
    for corner in range(4):                       # unrolled at trace time
        y = jnp.dot(p_ref[corner], w, preferred_element_type=jnp.float32)
        y = jnp.maximum(y + b, 0.0)
        pooled = y if pooled is None else jnp.maximum(pooled, y)
    o_ref[...] = pooled[:, :c_store].astype(o_ref.dtype)


def fc_stack_kernel(x_ref, w1_ref, b1_ref, w2_ref, b2_ref, w3_ref, b3_ref, o_ref):
    """Fused fc1+ReLU -> fc2+ReLU -> fc3.  Intermediates never leave the chip."""
    h = jnp.dot(x_ref[...], w1_ref[...], preferred_element_type=jnp.float32)
    h = jnp.maximum(h + b1_ref[...], 0.0)
    h = jnp.dot(h, w2_ref[...], preferred_element_type=jnp.float32)
    h = jnp.maximum(h + b2_ref[...], 0.0)
    h = jnp.dot(h, w3_ref[...], preferred_element_type=jnp.float32) + b3_ref[...]
    o_ref[...] = h.astype(o_ref.dtype)


# ----------------------------- kernel wrappers ----------------------------- #

def _conv_relu_pool(patches, w, b, *, c_store, k_pad, tm_target=512):
    """patches: (4, M, K) -> pooled (M_pad, c_store); caller slices [:M]."""
    _, m, k = patches.shape
    tm, m_pad = _pick_tile(m, tm_target)
    patches = jnp.pad(patches, ((0, 0), (0, m_pad - m), (0, k_pad - k)))
    return pl.pallas_call(
        functools.partial(conv_relu_pool_kernel, c_store=c_store),
        out_shape=jax.ShapeDtypeStruct((m_pad, c_store), jnp.float32),
        grid=(m_pad // tm,),
        in_specs=[pl.BlockSpec((4, tm, k_pad), lambda i: (0, i, 0)),
                  pl.BlockSpec((k_pad, 128), lambda i: (0, 0)),
                  pl.BlockSpec((1, 128), lambda i: (0, 0))],
        out_specs=pl.BlockSpec((tm, c_store), lambda i: (i, 0)),
        compiler_params=pltpu.CompilerParams(
            dimension_semantics=("parallel",)),
    )(patches, w, b)


def _fc_stack(flat, prep, *, tm_target=512):
    """flat: (N, 400) -> logits padded to (N_pad, 128); caller slices [:N, :10]."""
    n, kf = flat.shape
    k_pad = prep["wf1"].shape[0]                  # 512
    tm, n_pad = _pick_tile(n, tm_target)
    xp = jnp.pad(flat, ((0, n_pad - n), (0, k_pad - kf)))
    return pl.pallas_call(
        fc_stack_kernel,
        out_shape=jax.ShapeDtypeStruct((n_pad, 128), jnp.float32),
        grid=(n_pad // tm,),
        in_specs=[pl.BlockSpec((tm, k_pad), lambda i: (i, 0)),
                  pl.BlockSpec((k_pad, 128), lambda i: (0, 0)),
                  pl.BlockSpec((1, 128), lambda i: (0, 0)),
                  pl.BlockSpec((128, 128), lambda i: (0, 0)),
                  pl.BlockSpec((1, 128), lambda i: (0, 0)),
                  pl.BlockSpec((128, 128), lambda i: (0, 0)),
                  pl.BlockSpec((1, 128), lambda i: (0, 0))],
        out_specs=pl.BlockSpec((tm, 128), lambda i: (i, 0)),
        compiler_params=pltpu.CompilerParams(
            dimension_semantics=("parallel",)),
    )(xp, prep["wf1"], prep["bf1"], prep["wf2"], prep["bf2"],
      prep["wf3"], prep["bf3"])


# --------------------------------- glue ------------------------------------ #

def _corner_pool_patches(x, k):
    """x: (N,H,W,C) NHWC -> (4, N*PH*PW, k*k*C) im2col patches, one per pool corner.

    Corner (di, dj) row (n, i, j) holds the conv patch for conv position
    (2i+di, 2j+dj); lane order is (kh, kw, ci) to match the prepared weights.
    """
    n, h, w, c = x.shape
    oh, ow = h - k + 1, w - k + 1
    ph, pw = oh // 2, ow // 2
    corners = []
    for di in range(2):
        for dj in range(2):
            cols = []
            for kh in range(k):
                for kw in range(k):
                    r0, c0 = di + kh, dj + kw
                    cols.append(x[:, r0:r0 + 2 * ph:2, c0:c0 + 2 * pw:2, :])
            p = jnp.concatenate(cols, axis=-1)            # (n, ph, pw, k*k*c)
            corners.append(p.reshape(n * ph * pw, k * k * c))
    return jnp.stack(corners, axis=0), ph, pw


def init_params(key):
    ks = jax.random.split(key, 10)

    def u(k, shape, fan_in):
        bound = 1.0 / jnp.sqrt(float(fan_in))
        return jax.random.uniform(k, shape, jnp.float32, -bound, bound)

    return {
        "w1": u(ks[0], (6, 3, 5, 5), 3 * 25),      # PyTorch OIHW
        "b1": u(ks[1], (6,), 3 * 25),
        "w2": u(ks[2], (16, 6, 5, 5), 6 * 25),
        "b2": u(ks[3], (16,), 6 * 25),
        "wf1": u(ks[4], (120, 400), 400),          # PyTorch (out, in)
        "bf1": u(ks[5], (120,), 400),
        "wf2": u(ks[6], (84, 120), 120),
        "bf2": u(ks[7], (84,), 120),
        "wf3": u(ks[8], (10, 84), 84),
        "bf3": u(ks[9], (10,), 84),
    }


def prepare_params(params):
    """One-time weight prep: transpose to matmul form, zero-pad K/N, permute fc1
    columns so the NHWC flatten matches PyTorch's NCHW out.view(N, -1)."""

    def conv_prep(w_oihw, b, cin_pad, k_pad):
        co, ci, kh, kw = w_oihw.shape
        wt = jnp.transpose(w_oihw, (2, 3, 1, 0))                  # (kh,kw,ci,co)
        wt = jnp.pad(wt, ((0, 0), (0, 0), (0, cin_pad - ci), (0, 128 - co)))
        wm = wt.reshape(kh * kw * cin_pad, 128)
        wm = jnp.pad(wm, ((0, k_pad - kh * kw * cin_pad), (0, 0)))
        bp = jnp.pad(b, (0, 128 - co)).reshape(1, 128)
        return wm, bp

    def fc_prep(w, b, k_pad, col_perm=None):
        wt = w if col_perm is None else w[:, col_perm]
        out_f, in_f = wt.shape
        wm = jnp.zeros((k_pad, 128), jnp.float32).at[:in_f, :out_f].set(wt.T)
        bp = jnp.zeros((1, 128), jnp.float32).at[0, :out_f].set(b)
        return wm, bp

    # NHWC flatten index (h*80 + w*16 + c) -> PyTorch NCHW flatten index (c*25 + h*5 + w)
    perm = []
    for h in range(5):
        for w_ in range(5):
            for c in range(16):
                perm.append(c * 25 + h * 5 + w_)
    perm = jnp.array(perm, jnp.int32)

    w1, b1 = conv_prep(params["w1"], params["b1"], cin_pad=3, k_pad=128)
    w2, b2 = conv_prep(params["w2"], params["b2"], cin_pad=8, k_pad=256)
    wf1, bf1 = fc_prep(params["wf1"], params["bf1"], k_pad=512, col_perm=perm)
    wf2, bf2 = fc_prep(params["wf2"], params["bf2"], k_pad=128)
    wf3, bf3 = fc_prep(params["wf3"], params["bf3"], k_pad=128)
    return {"w1": w1, "b1": b1, "w2": w2, "b2": b2,
            "wf1": wf1, "bf1": bf1, "wf2": wf2, "bf2": bf2,
            "wf3": wf3, "bf3": bf3}


def lenet3d_forward(prep, x_nchw):
    n = x_nchw.shape[0]
    x = jnp.transpose(x_nchw, (0, 2, 3, 1)).astype(jnp.float32)   # NCHW -> NHWC

    # conv1 (3->6, k5) + ReLU + 2x2 max-pool, fused in one Pallas kernel
    p1, ph1, pw1 = _corner_pool_patches(x, 5)                     # (4, n*196, 75)
    y1 = _conv_relu_pool(p1, prep["w1"], prep["b1"], c_store=8, k_pad=128)
    y1 = y1[: n * ph1 * pw1].reshape(n, ph1, pw1, 8)              # (n,14,14,8) ch 6-7 == 0

    # conv2 (6->16, k5) + ReLU + 2x2 max-pool, fused
    p2, ph2, pw2 = _corner_pool_patches(y1, 5)                    # (4, n*25, 200)
    y2 = _conv_relu_pool(p2, prep["w2"], prep["b2"], c_store=16, k_pad=256)
    y2 = y2[: n * ph2 * pw2].reshape(n, ph2, pw2, 16)             # (n,5,5,16)

    # NHWC flatten (fc1 columns were permuted at prep time to match PyTorch NCHW view)
    flat = y2.reshape(n, ph2 * pw2 * 16)                          # (n, 400)

    out = _fc_stack(flat, prep)                                   # (n_pad, 128)
    return out[:n, :10]


def reference_forward(params, x_nchw):
    """Pure-JAX reference (lax conv / reduce_window) for a sanity check."""
    dn1 = jax.lax.conv_dimension_numbers(x_nchw.shape, params["w1"].shape,
                                         ("NCHW", "OIHW", "NCHW"))
    y = jax.lax.conv_general_dilated(x_nchw, params["w1"], (1, 1), "VALID",
                                     dimension_numbers=dn1)
    y = jax.nn.relu(y + params["b1"][None, :, None, None])
    y = jax.lax.reduce_window(y, -jnp.inf, jax.lax.max,
                              (1, 1, 2, 2), (1, 1, 2, 2), "VALID")
    dn2 = jax.lax.conv_dimension_numbers(y.shape, params["w2"].shape,
                                         ("NCHW", "OIHW", "NCHW"))
    y = jax.lax.conv_general_dilated(y, params["w2"], (1, 1), "VALID",
                                     dimension_numbers=dn2)
    y = jax.nn.relu(y + params["b2"][None, :, None, None])
    y = jax.lax.reduce_window(y, -jnp.inf, jax.lax.max,
                              (1, 1, 2, 2), (1, 1, 2, 2), "VALID")
    flat = y.reshape(y.shape[0], -1)
    h = jax.nn.relu(flat @ params["wf1"].T + params["bf1"])
    h = jax.nn.relu(h @ params["wf2"].T + params["bf2"])
    return h @ params["wf3"].T + params["bf3"]


if __name__ == "__main__":
    key = jax.random.PRNGKey(0)
    pkey, xkey = jax.random.split(key)
    params = init_params(pkey)
    prep = prepare_params(params)            # one-time weight prep (hoisted)

    # CIFAR-shaped input implied by fc1 = Linear(16*5*5, 120): (N, 3, 32, 32)
    x = jax.random.normal(xkey, (2, 3, 32, 32), jnp.float32)

    fwd = jax.jit(lenet3d_forward)
    out = jax.block_until_ready(fwd(prep, x))
    ref = jax.block_until_ready(reference_forward(params, x))

    assert out.shape == (2, 10), out.shape
    assert jnp.allclose(out, ref, atol=1e-4, rtol=1e-4), (
        "Pallas output mismatch, max abs diff = %e" % float(jnp.max(jnp.abs(out - ref))))
    print("KERNEL_OK")
</pallas_src>

<mosaic_0001>
module attributes {stable_mosaic.version = 11 : i64} {
  func.func @conv_relu_pool_kernel(%arg0: i32, %arg1: memref<4x392x128xf32, #tpu.memory_space<vmem>>, %arg2: memref<128x128xf32, #tpu.memory_space<vmem>>, %arg3: memref<1x128xf32, #tpu.memory_space<vmem>>, %arg4: memref<392x8xf32, #tpu.memory_space<vmem>>) attributes {dimension_semantics = [#tpu.dimension_semantics<parallel>], iteration_bounds = array<i64: 1>, scalar_prefetch = 0 : i64, scratch_operands = 0 : i64, tpu.core_type = #tpu.core_type<tc>, window_params = [{transform_indices = @transform_0, window_bounds = array<i64: 4, 392, 128>}, {pipeline_mode = #tpu.pipeline_mode<synchronous>, transform_indices = @transform_1, window_bounds = array<i64: 128, 128>}, {pipeline_mode = #tpu.pipeline_mode<synchronous>, transform_indices = @transform_2, window_bounds = array<i64: 1, 128>}, {transform_indices = @transform_3, window_bounds = array<i64: 392, 8>}]} {
    %c0 = arith.constant 0 : index
    %c0_0 = arith.constant 0 : index
    %0 = vector.load %arg2[%c0, %c0_0] : memref<128x128xf32, #tpu.memory_space<vmem>>, vector<128x128xf32>
    %c0_1 = arith.constant 0 : index
    %c0_2 = arith.constant 0 : index
    %1 = vector.load %arg3[%c0_1, %c0_2] : memref<1x128xf32, #tpu.memory_space<vmem>>, vector<1x128xf32>
    %c0_3 = arith.constant 0 : index
    %c0_4 = arith.constant 0 : index
    %c0_5 = arith.constant 0 : index
    %2 = vector.load %arg1[%c0_3, %c0_4, %c0_5] : memref<4x392x128xf32, #tpu.memory_space<vmem>>, vector<1x392x128xf32>
    %3 = vector.shape_cast %2 : vector<1x392x128xf32> to vector<392x128xf32>
    %cst = arith.constant dense<0.000000e+00> : vector<392x128xf32>
    %4 = tpu.matmul %3, %0, %cst {dimension_numbers = #tpu.dot_dimension_numbers<[1], [0], [0], [1], [0, 0, 1, 1], [], []>} : vector<392x128xf32>, vector<128x128xf32>, vector<392x128xf32> -> vector<392x128xf32>
    %5 = vector.broadcast %1 : vector<1x128xf32> to vector<392x128xf32>
    %6 = arith.addf %4, %5 : vector<392x128xf32>
    %cst_6 = arith.constant 0.000000e+00 : f32
    %7 = vector.broadcast %cst_6 : f32 to vector<392x128xf32>
    %8 = arith.maximumf %6, %7 : vector<392x128xf32>
    %c1 = arith.constant 1 : index
    %c0_7 = arith.constant 0 : index
    %c0_8 = arith.constant 0 : index
    %9 = vector.load %arg1[%c1, %c0_7, %c0_8] : memref<4x392x128xf32, #tpu.memory_space<vmem>>, vector<1x392x128xf32>
    %10 = vector.shape_cast %9 : vector<1x392x128xf32> to vector<392x128xf32>
    %cst_9 = arith.constant dense<0.000000e+00> : vector<392x128xf32>
    %11 = tpu.matmul %10, %0, %cst_9 {dimension_numbers = #tpu.dot_dimension_numbers<[1], [0], [0], [1], [0, 0, 1, 1], [], []>} : vector<392x128xf32>, vector<128x128xf32>, vector<392x128xf32> -> vector<392x128xf32>
    %12 = vector.broadcast %1 : vector<1x128xf32> to vector<392x128xf32>
    %13 = arith.addf %11, %12 : vector<392x128xf32>
    %cst_10 = arith.constant 0.000000e+00 : f32
    %14 = vector.broadcast %cst_10 : f32 to vector<392x128xf32>
    %15 = arith.maximumf %13, %14 : vector<392x128xf32>
    %16 = arith.maximumf %8, %15 : vector<392x128xf32>
    %c2 = arith.constant 2 : index
    %c0_11 = arith.constant 0 : index
    %c0_12 = arith.constant 0 : index
    %17 = vector.load %arg1[%c2, %c0_11, %c0_12] : memref<4x392x128xf32, #tpu.memory_space<vmem>>, vector<1x392x128xf32>
    %18 = vector.shape_cast %17 : vector<1x392x128xf32> to vector<392x128xf32>
    %cst_13 = arith.constant dense<0.000000e+00> : vector<392x128xf32>
    %19 = tpu.matmul %18, %0, %cst_13 {dimension_numbers = #tpu.dot_dimension_numbers<[1], [0], [0], [1], [0, 0, 1, 1], [], []>} : vector<392x128xf32>, vector<128x128xf32>, vector<392x128xf32> -> vector<392x128xf32>
    %20 = vector.broadcast %1 : vector<1x128xf32> to vector<392x128xf32>
    %21 = arith.addf %19, %20 : vector<392x128xf32>
    %cst_14 = arith.constant 0.000000e+00 : f32
    %22 = vector.broadcast %cst_14 : f32 to vector<392x128xf32>
    %23 = arith.maximumf %21, %22 : vector<392x128xf32>
    %24 = arith.maximumf %16, %23 : vector<392x128xf32>
    %c3 = arith.constant 3 : index
    %c0_15 = arith.constant 0 : index
    %c0_16 = arith.constant 0 : index
    %25 = vector.load %arg1[%c3, %c0_15, %c0_16] : memref<4x392x128xf32, #tpu.memory_space<vmem>>, vector<1x392x128xf32>
    %26 = vector.shape_cast %25 : vector<1x392x128xf32> to vector<392x128xf32>
    %cst_17 = arith.constant dense<0.000000e+00> : vector<392x128xf32>
    %27 = tpu.matmul %26, %0, %cst_17 {dimension_numbers = #tpu.dot_dimension_numbers<[1], [0], [0], [1], [0, 0, 1, 1], [], []>} : vector<392x128xf32>, vector<128x128xf32>, vector<392x128xf32> -> vector<392x128xf32>
    %28 = vector.broadcast %1 : vector<1x128xf32> to vector<392x128xf32>
    %29 = arith.addf %27, %28 : vector<392x128xf32>
    %cst_18 = arith.constant 0.000000e+00 : f32
    %30 = vector.broadcast %cst_18 : f32 to vector<392x128xf32>
    %31 = arith.maximumf %29, %30 : vector<392x128xf32>
    %32 = arith.maximumf %24, %31 : vector<392x128xf32>
    %33 = vector.extract_strided_slice %32 {offsets = [0, 0], sizes = [392, 8], strides = [1, 1]} : vector<392x128xf32> to vector<392x8xf32>
    %c0_19 = arith.constant 0 : index
    %c0_20 = arith.constant 0 : index
    %34 = vector.load %arg4[%c0_19, %c0_20] : memref<392x8xf32, #tpu.memory_space<vmem>>, vector<392x8xf32>
    tpu.vector_store %arg4[%c0_19, %c0_20], %33 {strides = array<i32>} : memref<392x8xf32, #tpu.memory_space<vmem>>, vector<392x8xf32>,
    return
  }
  func.func @transform_0(%arg0: i32) -> (i32, i32, i32) {
    %c0_i32 = arith.constant 0 : i32
    %c0_i32_0 = arith.constant 0 : i32
    %c0_i32_1 = arith.constant 0 : i32
    return %c0_i32, %arg0, %c0_i32_0 : i32, i32, i32
  }
  func.func @transform_1(%arg0: i32) -> (i32, i32) {
    %c0_i32 = arith.constant 0 : i32
    %c0_i32_0 = arith.constant 0 : i32
    %c0_i32_1 = arith.constant 0 : i32
    return %c0_i32, %c0_i32_0 : i32, i32
  }
  func.func @transform_2(%arg0: i32) -> (i32, i32) {
    %c0_i32 = arith.constant 0 : i32
    %c0_i32_0 = arith.constant 0 : i32
    %c0_i32_1 = arith.constant 0 : i32
    return %c0_i32, %c0_i32_0 : i32, i32
  }
  func.func @transform_3(%arg0: i32) -> (i32, i32) {
    %c0_i32 = arith.constant 0 : i32
    %c0_i32_0 = arith.constant 0 : i32
    return %arg0, %c0_i32 : i32, i32
  }
}

module attributes {stable_mosaic.version = 11 : i64} {
  func.func @conv_relu_pool_kernel(%arg0: i32, %arg1: memref<4x56x256xf32, #tpu.memory_space<vmem>>, %arg2: memref<256x128xf32, #tpu.memory_space<vmem>>, %arg3: memref<1x128xf32, #tpu.memory_space<vmem>>, %arg4: memref<56x16xf32, #tpu.memory_space<vmem>>) attributes {dimension_semantics = [#tpu.dimension_semantics<parallel>], iteration_bounds = array<i64: 1>, scalar_prefetch = 0 : i64, scratch_operands = 0 : i64, tpu.core_type = #tpu.core_type<tc>, window_params = [{transform_indices = @transform_0, window_bounds = array<i64: 4, 56, 256>}, {pipeline_mode = #tpu.pipeline_mode<synchronous>, transform_indices = @transform_1, window_bounds = array<i64: 256, 128>}, {pipeline_mode = #tpu.pipeline_mode<synchronous>, transform_indices = @transform_2, window_bounds = array<i64: 1, 128>}, {transform_indices = @transform_3, window_bounds = array<i64: 56, 16>}]} {
    %c0 = arith.constant 0 : index
    %c0_0 = arith.constant 0 : index
    %0 = vector.load %arg2[%c0, %c0_0] : memref<256x128xf32, #tpu.memory_space<vmem>>, vector<256x128xf32>
    %c0_1 = arith.constant 0 : index
    %c0_2 = arith.constant 0 : index
    %1 = vector.load %arg3[%c0_1, %c0_2] : memref<1x128xf32, #tpu.memory_space<vmem>>, vector<1x128xf32>
    %c0_3 = arith.constant 0 : index
    %c0_4 = arith.constant 0 : index
    %c0_5 = arith.constant 0 : index
    %2 = vector.load %arg1[%c0_3, %c0_4, %c0_5] : memref<4x56x256xf32, #tpu.memory_space<vmem>>, vector<1x56x256xf32>
    %3 = vector.shape_cast %2 : vector<1x56x256xf32> to vector<56x256xf32>
    %cst = arith.constant dense<0.000000e+00> : vector<56x128xf32>
    %4 = tpu.matmul %3, %0, %cst {dimension_numbers = #tpu.dot_dimension_numbers<[1], [0], [0], [1], [0, 0, 1, 1], [], []>} : vector<56x256xf32>, vector<256x128xf32>, vector<56x128xf32> -> vector<56x128xf32>
    %5 = vector.broadcast %1 : vector<1x128xf32> to vector<56x128xf32>
    %6 = arith.addf %4, %5 : vector<56x128xf32>
    %cst_6 = arith.constant 0.000000e+00 : f32
    %7 = vector.broadcast %cst_6 : f32 to vector<56x128xf32>
    %8 = arith.maximumf %6, %7 : vector<56x128xf32>
    %c1 = arith.constant 1 : index
    %c0_7 = arith.constant 0 : index
    %c0_8 = arith.constant 0 : index
    %9 = vector.load %arg1[%c1, %c0_7, %c0_8] : memref<4x56x256xf32, #tpu.memory_space<vmem>>, vector<1x56x256xf32>
    %10 = vector.shape_cast %9 : vector<1x56x256xf32> to vector<56x256xf32>
    %cst_9 = arith.constant dense<0.000000e+00> : vector<56x128xf32>
    %11 = tpu.matmul %10, %0, %cst_9 {dimension_numbers = #tpu.dot_dimension_numbers<[1], [0], [0], [1], [0, 0, 1, 1], [], []>} : vector<56x256xf32>, vector<256x128xf32>, vector<56x128xf32> -> vector<56x128xf32>
    %12 = vector.broadcast %1 : vector<1x128xf32> to vector<56x128xf32>
    %13 = arith.addf %11, %12 : vector<56x128xf32>
    %cst_10 = arith.constant 0.000000e+00 : f32
    %14 = vector.broadcast %cst_10 : f32 to vector<56x128xf32>
    %15 = arith.maximumf %13, %14 : vector<56x128xf32>
    %16 = arith.maximumf %8, %15 : vector<56x128xf32>
    %c2 = arith.constant 2 : index
    %c0_11 = arith.constant 0 : index
    %c0_12 = arith.constant 0 : index
    %17 = vector.load %arg1[%c2, %c0_11, %c0_12] : memref<4x56x256xf32, #tpu.memory_space<vmem>>, vector<1x56x256xf32>
    %18 = vector.shape_cast %17 : vector<1x56x256xf32> to vector<56x256xf32>
    %cst_13 = arith.constant dense<0.000000e+00> : vector<56x128xf32>
    %19 = tpu.matmul %18, %0, %cst_13 {dimension_numbers = #tpu.dot_dimension_numbers<[1], [0], [0], [1], [0, 0, 1, 1], [], []>} : vector<56x256xf32>, vector<256x128xf32>, vector<56x128xf32> -> vector<56x128xf32>
    %20 = vector.broadcast %1 : vector<1x128xf32> to vector<56x128xf32>
    %21 = arith.addf %19, %20 : vector<56x128xf32>
    %cst_14 = arith.constant 0.000000e+00 : f32
    %22 = vector.broadcast %cst_14 : f32 to vector<56x128xf32>
    %23 = arith.maximumf %21, %22 : vector<56x128xf32>
    %24 = arith.maximumf %16, %23 : vector<56x128xf32>
    %c3 = arith.constant 3 : index
    %c0_15 = arith.constant 0 : index
    %c0_16 = arith.constant 0 : index
    %25 = vector.load %arg1[%c3, %c0_15, %c0_16] : memref<4x56x256xf32, #tpu.memory_space<vmem>>, vector<1x56x256xf32>
    %26 = vector.shape_cast %25 : vector<1x56x256xf32> to vector<56x256xf32>
    %cst_17 = arith.constant dense<0.000000e+00> : vector<56x128xf32>
    %27 = tpu.matmul %26, %0, %cst_17 {dimension_numbers = #tpu.dot_dimension_numbers<[1], [0], [0], [1], [0, 0, 1, 1], [], []>} : vector<56x256xf32>, vector<256x128xf32>, vector<56x128xf32> -> vector<56x128xf32>
    %28 = vector.broadcast %1 : vector<1x128xf32> to vector<56x128xf32>
    %29 = arith.addf %27, %28 : vector<56x128xf32>
    %cst_18 = arith.constant 0.000000e+00 : f32
    %30 = vector.broadcast %cst_18 : f32 to vector<56x128xf32>
    %31 = arith.maximumf %29, %30 : vector<56x128xf32>
    %32 = arith.maximumf %24, %31 : vector<56x128xf32>
    %33 = vector.extract_strided_slice %32 {offsets = [0, 0], sizes = [56, 16], strides = [1, 1]} : vector<56x128xf32> to vector<56x16xf32>
    %c0_19 = arith.constant 0 : index
    %c0_20 = arith.constant 0 : index
    %34 = vector.load %arg4[%c0_19, %c0_20] : memref<56x16xf32, #tpu.memory_space<vmem>>, vector<56x16xf32>
    tpu.vector_store %arg4[%c0_19, %c0_20], %33 {strides = array<i32>} : memref<56x16xf32, #tpu.memory_space<vmem>>, vector<56x16xf32>,
    return
  }
  func.func @transform_0(%arg0: i32) -> (i32, i32, i32) {
    %c0_i32 = arith.constant 0 : i32
    %c0_i32_0 = arith.constant 0 : i32
    %c0_i32_1 = arith.constant 0 : i32
    return %c0_i32, %arg0, %c0_i32_0 : i32, i32, i32
  }
  func.func @transform_1(%arg0: i32) -> (i32, i32) {
    %c0_i32 = arith.constant 0 : i32
    %c0_i32_0 = arith.constant 0 : i32
    %c0_i32_1 = arith.constant 0 : i32
    return %c0_i32, %c0_i32_0 : i32, i32
  }
  func.func @transform_2(%arg0: i32) -> (i32, i32) {
    %c0_i32 = arith.constant 0 : i32
    %c0_i32_0 = arith.constant 0 : i32
    %c0_i32_1 = arith.constant 0 : i32
    return %c0_i32, %c0_i32_0 : i32, i32
  }
  func.func @transform_3(%arg0: i32) -> (i32, i32) {
    %c0_i32 = arith.constant 0 : i32
    %c0_i32_0 = arith.constant 0 : i32
    return %arg0, %c0_i32 : i32, i32
  }
}

module attributes {stable_mosaic.version = 11 : i64} {
  func.func @fc_stack_kernel(%arg0: i32, %arg1: memref<8x512xf32, #tpu.memory_space<vmem>>, %arg2: memref<512x128xf32, #tpu.memory_space<vmem>>, %arg3: memref<1x128xf32, #tpu.memory_space<vmem>>, %arg4: memref<128x128xf32, #tpu.memory_space<vmem>>, %arg5: memref<1x128xf32, #tpu.memory_space<vmem>>, %arg6: memref<128x128xf32, #tpu.memory_space<vmem>>, %arg7: memref<1x128xf32, #tpu.memory_space<vmem>>, %arg8: memref<8x128xf32, #tpu.memory_space<vmem>>) attributes {dimension_semantics = [#tpu.dimension_semantics<parallel>], iteration_bounds = array<i64: 1>, scalar_prefetch = 0 : i64, scratch_operands = 0 : i64, tpu.core_type = #tpu.core_type<tc>, window_params = [{transform_indices = @transform_0, window_bounds = array<i64: 8, 512>}, {pipeline_mode = #tpu.pipeline_mode<synchronous>, transform_indices = @transform_1, window_bounds = array<i64: 512, 128>}, {pipeline_mode = #tpu.pipeline_mode<synchronous>, transform_indices = @transform_2, window_bounds = array<i64: 1, 128>}, {pipeline_mode = #tpu.pipeline_mode<synchronous>, transform_indices = @transform_3, window_bounds = array<i64: 128, 128>}, {pipeline_mode = #tpu.pipeline_mode<synchronous>, transform_indices = @transform_4, window_bounds = array<i64: 1, 128>}, {pipeline_mode = #tpu.pipeline_mode<synchronous>, transform_indices = @transform_5, window_bounds = array<i64: 128, 128>}, {pipeline_mode = #tpu.pipeline_mode<synchronous>, transform_indices = @transform_6, window_bounds = array<i64: 1, 128>}, {transform_indices = @transform_7, window_bounds = array<i64: 8, 128>}]} {
    %c0 = arith.constant 0 : index
    %c0_0 = arith.constant 0 : index
    %0 = vector.load %arg1[%c0, %c0_0] : memref<8x512xf32, #tpu.memory_space<vmem>>, vector<8x512xf32>
    %c0_1 = arith.constant 0 : index
    %c0_2 = arith.constant 0 : index
    %1 = vector.load %arg2[%c0_1, %c0_2] : memref<512x128xf32, #tpu.memory_space<vmem>>, vector<512x128xf32>
    %cst = arith.constant dense<0.000000e+00> : vector<8x128xf32>
    %2 = tpu.matmul %0, %1, %cst {dimension_numbers = #tpu.dot_dimension_numbers<[1], [0], [0], [1], [0, 0, 1, 1], [], []>} : vector<8x512xf32>, vector<512x128xf32>, vector<8x128xf32> -> vector<8x128xf32>
    %c0_3 = arith.constant 0 : index
    %c0_4 = arith.constant 0 : index
    %3 = vector.load %arg3[%c0_3, %c0_4] : memref<1x128xf32, #tpu.memory_space<vmem>>, vector<1x128xf32>
    %4 = vector.broadcast %3 : vector<1x128xf32> to vector<8x128xf32>
    %5 = arith.addf %2, %4 : vector<8x128xf32>
    %cst_5 = arith.constant 0.000000e+00 : f32
    %6 = vector.broadcast %cst_5 : f32 to vector<8x128xf32>
    %7 = arith.maximumf %5, %6 : vector<8x128xf32>
    %c0_6 = arith.constant 0 : index
    %c0_7 = arith.constant 0 : index
    %8 = vector.load %arg4[%c0_6, %c0_7] : memref<128x128xf32, #tpu.memory_space<vmem>>, vector<128x128xf32>
    %cst_8 = arith.constant dense<0.000000e+00> : vector<8x128xf32>
    %9 = tpu.matmul %7, %8, %cst_8 {dimension_numbers = #tpu.dot_dimension_numbers<[1], [0], [0], [1], [0, 0, 1, 1], [], []>} : vector<8x128xf32>, vector<128x128xf32>, vector<8x128xf32> -> vector<8x128xf32>
    %c0_9 = arith.constant 0 : index
    %c0_10 = arith.constant 0 : index
    %10 = vector.load %arg5[%c0_9, %c0_10] : memref<1x128xf32, #tpu.memory_space<vmem>>, vector<1x128xf32>
    %11 = vector.broadcast %10 : vector<1x128xf32> to vector<8x128xf32>
    %12 = arith.addf %9, %11 : vector<8x128xf32>
    %cst_11 = arith.constant 0.000000e+00 : f32
    %13 = vector.broadcast %cst_11 : f32 to vector<8x128xf32>
    %14 = arith.maximumf %12, %13 : vector<8x128xf32>
    %c0_12 = arith.constant 0 : index
    %c0_13 = arith.constant 0 : index
    %15 = vector.load %arg6[%c0_12, %c0_13] : memref<128x128xf32, #tpu.memory_space<vmem>>, vector<128x128xf32>
    %cst_14 = arith.constant dense<0.000000e+00> : vector<8x128xf32>
    %16 = tpu.matmul %14, %15, %cst_14 {dimension_numbers = #tpu.dot_dimension_numbers<[1], [0], [0], [1], [0, 0, 1, 1], [], []>} : vector<8x128xf32>, vector<128x128xf32>, vector<8x128xf32> -> vector<8x128xf32>
    %c0_15 = arith.constant 0 : index
    %c0_16 = arith.constant 0 : index
    %17 = vector.load %arg7[%c0_15, %c0_16] : memref<1x128xf32, #tpu.memory_space<vmem>>, vector<1x128xf32>
    %18 = vector.broadcast %17 : vector<1x128xf32> to vector<8x128xf32>
    %19 = arith.addf %16, %18 : vector<8x128xf32>
    %c0_17 = arith.constant 0 : index
    %c0_18 = arith.constant 0 : index
    %20 = vector.load %arg8[%c0_17, %c0_18] : memref<8x128xf32, #tpu.memory_space<vmem>>, vector<8x128xf32>
    tpu.vector_store %arg8[%c0_17, %c0_18], %19 {strides = array<i32>} : memref<8x128xf32, #tpu.memory_space<vmem>>, vector<8x128xf32>,
    return
  }
  func.func @transform_0(%arg0: i32) -> (i32, i32) {
    %c0_i32 = arith.constant 0 : i32
    %c0_i32_0 = arith.constant 0 : i32
    return %arg0, %c0_i32 : i32, i32
  }
  func.func @transform_1(%arg0: i32) -> (i32, i32) {
    %c0_i32 = arith.constant 0 : i32
    %c0_i32_0 = arith.constant 0 : i32
    %c0_i32_1 = arith.constant 0 : i32
    return %c0_i32, %c0_i32_0 : i32, i32
  }
  func.func @transform_2(%arg0: i32) -> (i32, i32) {
    %c0_i32 = arith.constant 0 : i32
    %c0_i32_0 = arith.constant 0 : i32
    %c0_i32_1 = arith.constant 0 : i32
    return %c0_i32, %c0_i32_0 : i32, i32
  }
  func.func @transform_3(%arg0: i32) -> (i32, i32) {
    %c0_i32 = arith.constant 0 : i32
    %c0_i32_0 = arith.constant 0 : i32
    %c0_i32_1 = arith.constant 0 : i32
    return %c0_i32, %c0_i32_0 : i32, i32
  }
  func.func @transform_4(%arg0: i32) -> (i32, i32) {
    %c0_i32 = arith.constant 0 : i32
    %c0_i32_0 = arith.constant 0 : i32
    %c0_i32_1 = arith.constant 0 : i32
    return %c0_i32, %c0_i32_0 : i32, i32
  }
  func.func @transform_5(%arg0: i32) -> (i32, i32) {
    %c0_i32 = arith.constant 0 : i32
    %c0_i32_0 = arith.constant 0 : i32
    %c0_i32_1 = arith.constant 0 : i32
    return %c0_i32, %c0_i32_0 : i32, i32
  }
  func.func @transform_6(%arg0: i32) -> (i32, i32) {
    %c0_i32 = arith.constant 0 : i32
    %c0_i32_0 = arith.constant 0 : i32
    %c0_i32_1 = arith.constant 0 : i32
    return %c0_i32, %c0_i32_0 : i32, i32
  }
  func.func @transform_7(%arg0: i32) -> (i32, i32) {
    %c0_i32 = arith.constant 0 : i32
    %c0_i32_0 = arith.constant 0 : i32
    return %arg0, %c0_i32 : i32, i32
  }
}

</mosaic_0001>

<llo_original>
// kernel: lenet3d_forward.3
$region0: #{lenet3d_forward.3}
  #allocation0 [shape = 'u32[]', space=smem, size = 0x4, offset = 0x4, fixed_abs, tag = 'smem constant byte address 0x4 - core index']
  #allocation1 [shape = 'u32[144,128]{1,0:T(1,128)}', space=vmem, size = 0x12000, scoped, tag = 'internal scratch']
  %s0 = inlined_call_operand.vmem [shape: f32[4,392,128], index: 0, kind: input, shape index: {}]
  %s1 = inlined_call_operand.vmem [shape: f32[128,128], index: 1, kind: input, shape index: {}]
  %s2 = inlined_call_operand.vmem [shape: f32[1,128], index: 2, kind: input, shape index: {}]
  %s3 = inlined_call_operand.vmem [shape: f32[392,8], index: 3, kind: output, shape index: {}]
  %s4 = sld [smem:[#allocation0]]
  $region22: #{lenet3d_forward.3} parent=0
    _
  %s6 = ssub.s32 1, %s4
  %s7 = scalar_select 0, %s6, %s4
  // Predicated region
  $region2: #{lenet3d_forward.3} parent=0 // pred_check
    _
  $region3: #{lenet3d_forward.3} parent=0 // pred_check_branch
    %9 = sbr.rel (0) target = $region5
  $region4: #{lenet3d_forward.3} parent=0 // pred_region
    _
  $region5: #{lenet3d_forward.3} parent=0 // pred_fallthru
    _
  // Predicated region
  $region6: #{lenet3d_forward.3} parent=0 // pred_check
    _
  $region7: #{lenet3d_forward.3} parent=0 // pred_check_branch
    %11 = sbr.rel (0) target = $region9
  $region8: #{lenet3d_forward.3} parent=0 // pred_region
    _
  $region9: #{lenet3d_forward.3} parent=0 // pred_fallthru
    _
  // Predicated region
  $region10: #{lenet3d_forward.3} parent=0 // pred_check
    _
  $region11: #{lenet3d_forward.3} parent=0 // pred_check_branch
    %13 = sbr.rel (0) target = $region13
  $region12: #{lenet3d_forward.3} parent=0 // pred_region
    _
  $region13: #{lenet3d_forward.3} parent=0 // pred_fallthru
    _
  %v14 = vld [vmem:[%s1] sm:$0xff]
  %v15 = vld [vmem:[%s1 + $0x8] sm:$0xff]
  %v16 = vld [vmem:[%s1 + $0x10] sm:$0xff]
  %v17 = vld [vmem:[%s1 + $0x18] sm:$0xff]
  %v18 = vld [vmem:[%s1 + $0x20] sm:$0xff]
  %v19 = vld [vmem:[%s1 + $0x28] sm:$0xff]
  %v20 = vld [vmem:[%s1 + $0x30] sm:$0xff]
  %v21 = vld [vmem:[%s1 + $0x38] sm:$0xff]
  %v22 = vld [vmem:[%s1 + $0x40] sm:$0xff]
  %v23 = vld [vmem:[%s1 + $0x48] sm:$0xff]
  %v24 = vld [vmem:[%s1 + $0x50] sm:$0xff]
  %v25 = vld [vmem:[%s1 + $0x58] sm:$0xff]
  %v26 = vld [vmem:[%s1 + $0x60] sm:$0xff]
  %v27 = vld [vmem:[%s1 + $0x68] sm:$0xff]
  %v28 = vld [vmem:[%s1 + $0x70] sm:$0xff]
  %v29 = vld [vmem:[%s1 + $0x78] sm:$0xff]
  %v30 = vld [vmem:[%s2] sm:$0x1]
  %v31 = vld [vmem:[%s0] sm:$0xff]
  %v32 = vld [vmem:[%s0 + $0x8] sm:$0xff]
  %v33 = vld [vmem:[%s0 + $0x10] sm:$0xff]
  %v34 = vld [vmem:[%s0 + $0x18] sm:$0xff]
  %v35 = vld [vmem:[%s0 + $0x20] sm:$0xff]
  %v36 = vld [vmem:[%s0 + $0x28] sm:$0xff]
  %v37 = vld [vmem:[%s0 + $0x30] sm:$0xff]
  %v38 = vld [vmem:[%s0 + $0x38] sm:$0xff]
  %v39 = vld [vmem:[%s0 + $0x40] sm:$0xff]
  %v40 = vld [vmem:[%s0 + $0x48] sm:$0xff]
  %v41 = vld [vmem:[%s0 + $0x50] sm:$0xff]
  %v42 = vld [vmem:[%s0 + $0x58] sm:$0xff]
  %v43 = vld [vmem:[%s0 + $0x60] sm:$0xff]
  %v44 = vld [vmem:[%s0 + $0x68] sm:$0xff]
  %v45 = vld [vmem:[%s0 + $0x70] sm:$0xff]
  %v46 = vld [vmem:[%s0 + $0x78] sm:$0xff]
  %v47 = vld [vmem:[%s0 + $0x80] sm:$0xff]
  %v48 = vld [vmem:[%s0 + $0x88] sm:$0xff]
  %v49 = vld [vmem:[%s0 + $0x90] sm:$0xff]
  %v50 = vld [vmem:[%s0 + $0x98] sm:$0xff]
  %v51 = vld [vmem:[%s0 + $0xa0] sm:$0xff]
  %v52 = vld [vmem:[%s0 + $0xa8] sm:$0xff]
  %v53 = vld [vmem:[%s0 + $0xb0] sm:$0xff]
  %v54 = vld [vmem:[%s0 + $0xb8] sm:$0xff]
  %v55 = vld [vmem:[%s0 + $0xc0] sm:$0xff]
  %v56 = vld [vmem:[%s0 + $0xc8] sm:$0xff]
  %v57 = vld [vmem:[%s0 + $0xd0] sm:$0xff]
  %v58 = vld [vmem:[%s0 + $0xd8] sm:$0xff]
  %v59 = vld [vmem:[%s0 + $0xe0] sm:$0xff]
  %v60 = vld [vmem:[%s0 + $0xe8] sm:$0xff]
  %v61 = vld [vmem:[%s0 + $0xf0] sm:$0xff]
  %v62 = vld [vmem:[%s0 + $0xf8] sm:$0xff]
  %v63 = vld [vmem:[%s0 + $0x100] sm:$0xff]
  %v64 = vld [vmem:[%s0 + $0x108] sm:$0xff]
  %v65 = vld [vmem:[%s0 + $0x110] sm:$0xff]
  %v66 = vld [vmem:[%s0 + $0x118] sm:$0xff]
  %v67 = vld [vmem:[%s0 + $0x120] sm:$0xff]
  %v68 = vld [vmem:[%s0 + $0x128] sm:$0xff]
  %v69 = vld [vmem:[%s0 + $0x130] sm:$0xff]
  %v70 = vld [vmem:[%s0 + $0x138] sm:$0xff]
  %v71 = vld [vmem:[%s0 + $0x140] sm:$0xff]
  %v72 = vld [vmem:[%s0 + $0x148] sm:$0xff]
  %v73 = vld [vmem:[%s0 + $0x150] sm:$0xff]
  %v74 = vld [vmem:[%s0 + $0x158] sm:$0xff]
  %v75 = vld [vmem:[%s0 + $0x160] sm:$0xff]
  %v76 = vld [vmem:[%s0 + $0x168] sm:$0xff]
  %v77 = vld [vmem:[%s0 + $0x170] sm:$0xff]
  %v78 = vld [vmem:[%s0 + $0x178] sm:$0xff]
  %v79 = vld [vmem:[%s0 + $0x180] sm:$0xff]
  %v81 = vlaneseq
  %v82 = vshrl.u32 %v81, 7
  %v83 = vsub.s32 0, %v82
  %v84 = vrot.slane %v30, %v83
  %86 = vmatprep.subr.mxu0 0.0
  %87 = vmatpush1.msra.mxu0 %v29
  %88 = vmatprep.subr.mxu0 0.0
  %89 = vmatpush1.msra.mxu0 %v28
  %90 = vmatprep.subr.mxu0 0.0
  %91 = vmatpush1.msra.mxu0 %v27
  %92 = vmatprep.subr.mxu0 0.0
  %93 = vmatpush1.msra.mxu0 %v26
  %94 = vmatprep.subr.mxu0 0.0
  %95 = vmatpush1.msra.mxu0 %v25
  %96 = vmatprep.subr.mxu0 0.0
  %97 = vmatpush1.msra.mxu0 %v24
  %98 = vmatprep.subr.mxu0 0.0
  %99 = vmatpush1.msra.mxu0 %v23
  %100 = vmatprep.subr.mxu0 0.0
  %101 = vmatpush1.msra.mxu0 %v22
  %102 = vmatprep.subr.mxu0 0.0
  %103 = vmatpush1.msra.mxu0 %v21
  %104 = vmatprep.subr.mxu0 0.0
  %105 = vmatpush1.msra.mxu0 %v20
  %106 = vmatprep.subr.mxu0 0.0
  %107 = vmatpush1.msra.mxu0 %v19
  %108 = vmatprep.subr.mxu0 0.0
  %109 = vmatpush1.msra.mxu0 %v18
  %110 = vmatprep.subr.mxu0 0.0
  %111 = vmatpush1.msra.mxu0 %v17
  %112 = vmatprep.subr.mxu0 0.0
  %113 = vmatpush1.msra.mxu0 %v16
  %114 = vmatprep.subr.mxu0 0.0
  %115 = vmatpush1.msra.mxu0 %v15
  %116 = vmatprep.subr.mxu0 0.0
  %117 = vmatpush1.msra.mxu0 %v14
  %118 = vmatprep.subr.mxu0 0.0
  %119 = vmatpush2.msra.mxu0 0.0
  %120 = vmatprep.subr.mxu0 0.0
  %121 = vmatpush2.msra.mxu0 0.0
  %122 = vmatprep.subr.mxu0 0.0
  %123 = vmatpush2.msra.mxu0 0.0
  %124 = vmatprep.subr.mxu0 0.0
  %125 = vmatpush2.msra.mxu0 0.0
  %126 = vmatprep.subr.mxu0 0.0
  %127 = vmatpush2.msra.mxu0 0.0
  %128 = vmatprep.subr.mxu0 0.0
  %129 = vmatpush2.msra.mxu0 0.0
  %130 = vmatprep.subr.mxu0 0.0
  %131 = vmatpush2.msra.mxu0 0.0
  %132 = vmatprep.subr.mxu0 0.0
  %133 = vmatpush2.msra.mxu0 0.0
  %134 = vmatprep.subr.mxu0 0.0
  %135 = vmatpush2.msra.mxu0 0.0
  %136 = vmatprep.subr.mxu0 0.0
  %137 = vmatpush2.msra.mxu0 0.0
  %138 = vmatprep.subr.mxu0 0.0
  %139 = vmatpush2.msra.mxu0 0.0
  %140 = vmatprep.subr.mxu0 0.0
  %141 = vmatpush2.msra.mxu0 0.0
  %142 = vmatprep.subr.mxu0 0.0
  %143 = vmatpush2.msra.mxu0 0.0
  %144 = vmatprep.subr.mxu0 0.0
  %145 = vmatpush2.msra.mxu0 0.0
  %146 = vmatprep.subr.mxu0 0.0
  %147 = vmatpush2.msra.mxu0 0.0
  %148 = vmatprep.subr.mxu0 0.0
  %149 = vmatpush2.msra.mxu0 0.0
  %150 = vmatprep.mubr.f32.mxu0 0.0
  %151 = vmatmul.mubr.f32.gmra.mxu0 %v31
  %v152 = vpop.f32.mrf.mxu0
  %v153 = vadd.f32 %v84, %v152
  %v154 = vpop.f32.mrf.mxu0
  %155 = vmatprep.mubr.f32.mxu0 0.0
  %156 = vmatmul.mubr.f32.gmra.mxu0 %v32
  %v157 = vpop.f32.mrf.mxu0
  %v158 = vadd.f32 %v84, %v157
  %v159 = vpop.f32.mrf.mxu0
  %160 = vmatprep.mubr.f32.mxu0 0.0
  %161 = vmatmul.mubr.f32.gmra.mxu0 %v33
  %v162 = vpop.f32.mrf.mxu0
  %v163 = vadd.f32 %v84, %v162
  %v164 = vpop.f32.mrf.mxu0
  %165 = vmatprep.mubr.f32.mxu0 0.0
  %166 = vmatmul.mubr.f32.gmra.mxu0 %v34
  %v167 = vpop.f32.mrf.mxu0
  %v168 = vadd.f32 %v84, %v167
  %v169 = vpop.f32.mrf.mxu0
  %170 = vmatprep.mubr.f32.mxu0 0.0
  %171 = vmatmul.mubr.f32.gmra.mxu0 %v35
  %v172 = vpop.f32.mrf.mxu0
  %v173 = vadd.f32 %v84, %v172
  %v174 = vpop.f32.mrf.mxu0
  %175 = vmatprep.mubr.f32.mxu0 0.0
  %176 = vmatmul.mubr.f32.gmra.mxu0 %v36
  %v177 = vpop.f32.mrf.mxu0
  %v178 = vadd.f32 %v84, %v177
  %v179 = vpop.f32.mrf.mxu0
  %180 = vmatprep.mubr.f32.mxu0 0.0
  %181 = vmatmul.mubr.f32.gmra.mxu0 %v37
  %v182 = vpop.f32.mrf.mxu0
  %v183 = vadd.f32 %v84, %v182
  %v184 = vpop.f32.mrf.mxu0
  %185 = vmatprep.mubr.f32.mxu0 0.0
  %186 = vmatmul.mubr.f32.gmra.mxu0 %v38
  %v187 = vpop.f32.mrf.mxu0
  %v188 = vadd.f32 %v84, %v187
  %v189 = vpop.f32.mrf.mxu0
  %190 = vmatprep.mubr.f32.mxu0 0.0
  %191 = vmatmul.mubr.f32.gmra.mxu0 %v39
  %v192 = vpop.f32.mrf.mxu0
  %v193 = vadd.f32 %v84, %v192
  %v194 = vpop.f32.mrf.mxu0
  %195 = vmatprep.mubr.f32.mxu0 0.0
  %196 = vmatmul.mubr.f32.gmra.mxu0 %v40
  %v197 = vpop.f32.mrf.mxu0
  %v198 = vadd.f32 %v84, %v197
  %v199 = vpop.f32.mrf.mxu0
  %200 = vmatprep.mubr.f32.mxu0 0.0
  %201 = vmatmul.mubr.f32.gmra.mxu0 %v41
  %v202 = vpop.f32.mrf.mxu0
  %v203 = vadd.f32 %v84, %v202
  %v204 = vpop.f32.mrf.mxu0
  %205 = vmatprep.mubr.f32.mxu0 0.0
  %206 = vmatmul.mubr.f32.gmra.mxu0 %v42
  %v207 = vpop.f32.mrf.mxu0
  %v208 = vadd.f32 %v84, %v207
  %v209 = vpop.f32.mrf.mxu0
  %210 = vmatprep.mubr.f32.mxu0 0.0
  %211 = vmatmul.mubr.f32.gmra.mxu0 %v43
  %v212 = vpop.f32.mrf.mxu0
  %v213 = vadd.f32 %v84, %v212
  %v214 = vpop.f32.mrf.mxu0
  %215 = vmatprep.mubr.f32.mxu0 0.0
  %216 = vmatmul.mubr.f32.gmra.mxu0 %v44
  %v217 = vpop.f32.mrf.mxu0
  %v218 = vadd.f32 %v84, %v217
  %v219 = vpop.f32.mrf.mxu0
  %220 = vmatprep.mubr.f32.mxu0 0.0
  %221 = vmatmul.mubr.f32.gmra.mxu0 %v45
  %v222 = vpop.f32.mrf.mxu0
  %v223 = vadd.f32 %v84, %v222
  %v224 = vpop.f32.mrf.mxu0
  %225 = vmatprep.mubr.f32.mxu0 0.0
  %226 = vmatmul.mubr.f32.gmra.mxu0 %v46
  %v227 = vpop.f32.mrf.mxu0
  %v228 = vadd.f32 %v84, %v227
  %v229 = vpop.f32.mrf.mxu0
  %230 = vmatprep.mubr.f32.mxu0 0.0
  %231 = vmatmul.mubr.f32.gmra.mxu0 %v47
  %v232 = vpop.f32.mrf.mxu0
  %v233 = vadd.f32 %v84, %v232
  %v234 = vpop.f32.mrf.mxu0
  %235 = vmatprep.mubr.f32.mxu0 0.0
  %236 = vmatmul.mubr.f32.gmra.mxu0 %v48
  %v237 = vpop.f32.mrf.mxu0
  %v238 = vadd.f32 %v84, %v237
  %v239 = vpop.f32.mrf.mxu0
  %240 = vmatprep.mubr.f32.mxu0 0.0
  %241 = vmatmul.mubr.f32.gmra.mxu0 %v49
  %v242 = vpop.f32.mrf.mxu0
  %v243 = vadd.f32 %v84, %v242
  %v244 = vpop.f32.mrf.mxu0
  %245 = vmatprep.mubr.f32.mxu0 0.0
  %246 = vmatmul.mubr.f32.gmra.mxu0 %v50
  %v247 = vpop.f32.mrf.mxu0
  %v248 = vadd.f32 %v84, %v247
  %v249 = vpop.f32.mrf.mxu0
  %250 = vmatprep.mubr.f32.mxu0 0.0
  %251 = vmatmul.mubr.f32.gmra.mxu0 %v51
  %v252 = vpop.f32.mrf.mxu0
  %v253 = vadd.f32 %v84, %v252
  %v254 = vpop.f32.mrf.mxu0
  %255 = vmatprep.mubr.f32.mxu0 0.0
  %256 = vmatmul.mubr.f32.gmra.mxu0 %v52
  %v257 = vpop.f32.mrf.mxu0
  %v258 = vadd.f32 %v84, %v257
  %v259 = vpop.f32.mrf.mxu0
  %260 = vmatprep.mubr.f32.mxu0 0.0
  %261 = vmatmul.mubr.f32.gmra.mxu0 %v53
  %v262 = vpop.f32.mrf.mxu0
  %v263 = vadd.f32 %v84, %v262
  %v264 = vpop.f32.mrf.mxu0
  %265 = vmatprep.mubr.f32.mxu0 0.0
  %266 = vmatmul.mubr.f32.gmra.mxu0 %v54
  %v267 = vpop.f32.mrf.mxu0
  %v268 = vadd.f32 %v84, %v267
  %v269 = vpop.f32.mrf.mxu0
  %270 = vmatprep.mubr.f32.mxu0 0.0
  %271 = vmatmul.mubr.f32.gmra.mxu0 %v55
  %v272 = vpop.f32.mrf.mxu0
  %v273 = vadd.f32 %v84, %v272
  %v274 = vpop.f32.mrf.mxu0
  %275 = vmatprep.mubr.f32.mxu0 0.0
  %276 = vmatmul.mubr.f32.gmra.mxu0 %v56
  %v277 = vpop.f32.mrf.mxu0
  %v278 = vadd.f32 %v84, %v277
  %v279 = vpop.f32.mrf.mxu0
  %280 = vmatprep.mubr.f32.mxu0 0.0
  %281 = vmatmul.mubr.f32.gmra.mxu0 %v57
  %v282 = vpop.f32.mrf.mxu0
  %v283 = vadd.f32 %v84, %v282
  %v284 = vpop.f32.mrf.mxu0
  %285 = vmatprep.mubr.f32.mxu0 0.0
  %286 = vmatmul.mubr.f32.gmra.mxu0 %v58
  %v287 = vpop.f32.mrf.mxu0
  %v288 = vadd.f32 %v84, %v287
  %v289 = vpop.f32.mrf.mxu0
  %290 = vmatprep.mubr.f32.mxu0 0.0
  %291 = vmatmul.mubr.f32.gmra.mxu0 %v59
  %v292 = vpop.f32.mrf.mxu0
  %v293 = vadd.f32 %v84, %v292
  %v294 = vpop.f32.mrf.mxu0
  %295 = vmatprep.mubr.f32.mxu0 0.0
  %296 = vmatmul.mubr.f32.gmra.mxu0 %v60
  %v297 = vpop.f32.mrf.mxu0
  %v298 = vadd.f32 %v84, %v297
  %v299 = vpop.f32.mrf.mxu0
  %300 = vmatprep.mubr.f32.mxu0 0.0
  %301 = vmatmul.mubr.f32.gmra.mxu0 %v61
  %v302 = vpop.f32.mrf.mxu0
  %v303 = vadd.f32 %v84, %v302
  %v304 = vpop.f32.mrf.mxu0
  %305 = vmatprep.mubr.f32.mxu0 0.0
  %306 = vmatmul.mubr.f32.gmra.mxu0 %v62
  %v307 = vpop.f32.mrf.mxu0
  %v308 = vadd.f32 %v84, %v307
  %v309 = vpop.f32.mrf.mxu0
  %310 = vmatprep.mubr.f32.mxu0 0.0
  %311 = vmatmul.mubr.f32.gmra.mxu0 %v63
  %v312 = vpop.f32.mrf.mxu0
  %v313 = vadd.f32 %v84, %v312
  %v314 = vpop.f32.mrf.mxu0
  %315 = vmatprep.mubr.f32.mxu0 0.0
  %316 = vmatmul.mubr.f32.gmra.mxu0 %v64
  %v317 = vpop.f32.mrf.mxu0
  %v318 = vadd.f32 %v84, %v317
  %v319 = vpop.f32.mrf.mxu0
  %320 = vmatprep.mubr.f32.mxu0 0.0
  %321 = vmatmul.mubr.f32.gmra.mxu0 %v65
  %v322 = vpop.f32.mrf.mxu0
  %v323 = vadd.f32 %v84, %v322
  %v324 = vpop.f32.mrf.mxu0
  %325 = vmatprep.mubr.f32.mxu0 0.0
  %326 = vmatmul.mubr.f32.gmra.mxu0 %v66
  %v327 = vpop.f32.mrf.mxu0
  %v328 = vadd.f32 %v84, %v327
  %v329 = vpop.f32.mrf.mxu0
  %330 = vmatprep.mubr.f32.mxu0 0.0
  %331 = vmatmul.mubr.f32.gmra.mxu0 %v67
  %v332 = vpop.f32.mrf.mxu0
  %v333 = vadd.f32 %v84, %v332
  %v334 = vpop.f32.mrf.mxu0
  %335 = vmatprep.mubr.f32.mxu0 0.0
  %336 = vmatmul.mubr.f32.gmra.mxu0 %v68
  %v337 = vpop.f32.mrf.mxu0
  %v338 = vadd.f32 %v84, %v337
  %v339 = vpop.f32.mrf.mxu0
  %340 = vmatprep.mubr.f32.mxu0 0.0
  %341 = vmatmul.mubr.f32.gmra.mxu0 %v69
  %v342 = vpop.f32.mrf.mxu0
  %v343 = vadd.f32 %v84, %v342
  %v344 = vpop.f32.mrf.mxu0
  %345 = vmatprep.mubr.f32.mxu0 0.0
  %346 = vmatmul.mubr.f32.gmra.mxu0 %v70
  %v347 = vpop.f32.mrf.mxu0
  %v348 = vadd.f32 %v84, %v347
  %v349 = vpop.f32.mrf.mxu0
  %350 = vmatprep.mubr.f32.mxu0 0.0
  %351 = vmatmul.mubr.f32.gmra.mxu0 %v71
  %v352 = vpop.f32.mrf.mxu0
  %v353 = vadd.f32 %v84, %v352
  %v354 = vpop.f32.mrf.mxu0
  %355 = vmatprep.mubr.f32.mxu0 0.0
  %356 = vmatmul.mubr.f32.gmra.mxu0 %v72
  %v357 = vpop.f32.mrf.mxu0
  %v358 = vadd.f32 %v84, %v357
  %v359 = vpop.f32.mrf.mxu0
  %360 = vmatprep.mubr.f32.mxu0 0.0
  %361 = vmatmul.mubr.f32.gmra.mxu0 %v73
  %v362 = vpop.f32.mrf.mxu0
  %v363 = vadd.f32 %v84, %v362
  %v364 = vpop.f32.mrf.mxu0
  %365 = vmatprep.mubr.f32.mxu0 0.0
  %366 = vmatmul.mubr.f32.gmra.mxu0 %v74
  %v367 = vpop.f32.mrf.mxu0
  %v368 = vadd.f32 %v84, %v367
  %v369 = vpop.f32.mrf.mxu0
  %370 = vmatprep.mubr.f32.mxu0 0.0
  %371 = vmatmul.mubr.f32.gmra.mxu0 %v75
  %v372 = vpop.f32.mrf.mxu0
  %v373 = vadd.f32 %v84, %v372
  %v374 = vpop.f32.mrf.mxu0
  %375 = vmatprep.mubr.f32.mxu0 0.0
  %376 = vmatmul.mubr.f32.gmra.mxu0 %v76
  %v377 = vpop.f32.mrf.mxu0
  %v378 = vadd.f32 %v84, %v377
  %v379 = vpop.f32.mrf.mxu0
  %380 = vmatprep.mubr.f32.mxu0 0.0
  %381 = vmatmul.mubr.f32.gmra.mxu0 %v77
  %v382 = vpop.f32.mrf.mxu0
  %v383 = vadd.f32 %v84, %v382
  %v384 = vpop.f32.mrf.mxu0
  %385 = vmatprep.mubr.f32.mxu0 0.0
  %386 = vmatmul.mubr.f32.gmra.mxu0 %v78
  %v387 = vpop.f32.mrf.mxu0
  %v388 = vadd.f32 %v84, %v387
  %v389 = vpop.f32.mrf.mxu0
  %390 = vmatprep.mubr.f32.mxu0 0.0
  %391 = vmatmul.mubr.f32.gmra.mxu0 %v79
  %v392 = vpop.f32.mrf.mxu0
  %v393 = vadd.f32 %v84, %v392
  %v394 = vpop.f32.mrf.mxu0
  %395 = vdwg.mxu0
  %v396 = vmax.f32 %v153, 0.0
  %v397 = vmax.f32 %v158, 0.0
  %v398 = vmax.f32 %v163, 0.0
  %v399 = vmax.f32 %v168, 0.0
  %v400 = vmax.f32 %v173, 0.0
  %v401 = vmax.f32 %v178, 0.0
  %v402 = vmax.f32 %v183, 0.0
  %v403 = vmax.f32 %v188, 0.0
  %v404 = vmax.f32 %v193, 0.0
  %v405 = vmax.f32 %v198, 0.0
  %v406 = vmax.f32 %v203, 0.0
  %v407 = vmax.f32 %v208, 0.0
  %v408 = vmax.f32 %v213, 0.0
  %v409 = vmax.f32 %v218, 0.0
  %v410 = vmax.f32 %v223, 0.0
  %v411 = vmax.f32 %v228, 0.0
  %v412 = vmax.f32 %v233, 0.0
  %v413 = vmax.f32 %v238, 0.0
  %v414 = vmax.f32 %v243, 0.0
  %v415 = vmax.f32 %v248, 0.0
  %v416 = vmax.f32 %v253, 0.0
  %v417 = vmax.f32 %v258, 0.0
  %v418 = vmax.f32 %v263, 0.0
  %v419 = vmax.f32 %v268, 0.0
  %v420 = vmax.f32 %v273, 0.0
  %v421 = vmax.f32 %v278, 0.0
  %v422 = vmax.f32 %v283, 0.0
  %v423 = vmax.f32 %v288, 0.0
  %v424 = vmax.f32 %v293, 0.0
  %v425 = vmax.f32 %v298, 0.0
  %v426 = vmax.f32 %v303, 0.0
  %v427 = vmax.f32 %v308, 0.0
  %v428 = vmax.f32 %v313, 0.0
  %v429 = vmax.f32 %v318, 0.0
  %v430 = vmax.f32 %v323, 0.0
  %v431 = vmax.f32 %v328, 0.0
  %v432 = vmax.f32 %v333, 0.0
  %v433 = vmax.f32 %v338, 0.0
  %v434 = vmax.f32 %v343, 0.0
  %v435 = vmax.f32 %v348, 0.0
  %v436 = vmax.f32 %v353, 0.0
  %v437 = vmax.f32 %v358, 0.0
  %v438 = vmax.f32 %v363, 0.0
  %v439 = vmax.f32 %v368, 0.0
  %v440 = vmax.f32 %v373, 0.0
  %v441 = vmax.f32 %v378, 0.0
  %v442 = vmax.f32 %v383, 0.0
  %v443 = vmax.f32 %v388, 0.0
  %v444 = vmax.f32 %v393, 0.0
  %s445 = scalar_lea.vmem %s0, 392
  %v446 = vld [vmem:[%s445] sm:$0xff]
  %v447 = vld [vmem:[%s445 + $0x8] sm:$0xff]
  %v448 = vld [vmem:[%s445 + $0x10] sm:$0xff]
  %v449 = vld [vmem:[%s445 + $0x18] sm:$0xff]
  %v450 = vld [vmem:[%s445 + $0x20] sm:$0xff]
  %v451 = vld [vmem:[%s445 + $0x28] sm:$0xff]
  %v452 = vld [vmem:[%s445 + $0x30] sm:$0xff]
  %v453 = vld [vmem:[%s445 + $0x38] sm:$0xff]
  %v454 = vld [vmem:[%s445 + $0x40] sm:$0xff]
  %v455 = vld [vmem:[%s445 + $0x48] sm:$0xff]
  %v456 = vld [vmem:[%s445 + $0x50] sm:$0xff]
  %v457 = vld [vmem:[%s445 + $0x58] sm:$0xff]
  %v458 = vld [vmem:[%s445 + $0x60] sm:$0xff]
  %v459 = vld [vmem:[%s445 + $0x68] sm:$0xff]
  %v460 = vld [vmem:[%s445 + $0x70] sm:$0xff]
  %v461 = vld [vmem:[%s445 + $0x78] sm:$0xff]
  %v462 = vld [vmem:[%s445 + $0x80] sm:$0xff]
  %v463 = vld [vmem:[%s445 + $0x88] sm:$0xff]
  %v464 = vld [vmem:[%s445 + $0x90] sm:$0xff]
  %v465 = vld [vmem:[%s445 + $0x98] sm:$0xff]
  %v466 = vld [vmem:[%s445 + $0xa0] sm:$0xff]
  %v467 = vld [vmem:[%s445 + $0xa8] sm:$0xff]
  %v468 = vld [vmem:[%s445 + $0xb0] sm:$0xff]
  %v469 = vld [vmem:[%s445 + $0xb8] sm:$0xff]
  %v470 = vld [vmem:[%s445 + $0xc0] sm:$0xff]
  %v471 = vld [vmem:[%s445 + $0xc8] sm:$0xff]
  %v472 = vld [vmem:[%s445 + $0xd0] sm:$0xff]
  %v473 = vld [vmem:[%s445 + $0xd8] sm:$0xff]
  %v474 = vld [vmem:[%s445 + $0xe0] sm:$0xff]
  %v475 = vld [vmem:[%s445 + $0xe8] sm:$0xff]
  %v476 = vld [vmem:[%s445 + $0xf0] sm:$0xff]
  %v477 = vld [vmem:[%s445 + $0xf8] sm:$0xff]
  %v478 = vld [vmem:[%s445 + $0x100] sm:$0xff]
  %v479 = vld [vmem:[%s445 + $0x108] sm:$0xff]
  %v480 = vld [vmem:[%s445 + $0x110] sm:$0xff]
  %v481 = vld [vmem:[%s445 + $0x118] sm:$0xff]
  %v482 = vld [vmem:[%s445 + $0x120] sm:$0xff]
  %v483 = vld [vmem:[%s445 + $0x128] sm:$0xff]
  %v484 = vld [vmem:[%s445 + $0x130] sm:$0xff]
  %v485 = vld [vmem:[%s445 + $0x138] sm:$0xff]
  %v486 = vld [vmem:[%s445 + $0x140] sm:$0xff]
  %v487 = vld [vmem:[%s445 + $0x148] sm:$0xff]
  %v488 = vld [vmem:[%s445 + $0x150] sm:$0xff]
  %v489 = vld [vmem:[%s445 + $0x158] sm:$0xff]
  %v490 = vld [vmem:[%s445 + $0x160] sm:$0xff]
  %v491 = vld [vmem:[%s445 + $0x168] sm:$0xff]
  %v492 = vld [vmem:[%s445 + $0x170] sm:$0xff]
  %v493 = vld [vmem:[%s445 + $0x178] sm:$0xff]
  %v494 = vld [vmem:[%s445 + $0x180] sm:$0xff]
  %495 = vmatprep.subr.mxu0 0.0
  %496 = vmatpush1.msra.mxu0 %v29
  %497 = vmatprep.subr.mxu0 0.0
  %498 = vmatpush1.msra.mxu0 %v28
  %499 = vmatprep.subr.mxu0 0.0
  %500 = vmatpush1.msra.mxu0 %v27
  %501 = vmatprep.subr.mxu0 0.0
  %502 = vmatpush1.msra.mxu0 %v26
  %503 = vmatprep.subr.mxu0 0.0
  %504 = vmatpush1.msra.mxu0 %v25
  %505 = vmatprep.subr.mxu0 0.0
  %506 = vmatpush1.msra.mxu0 %v24
  %507 = vmatprep.subr.mxu0 0.0
  %508 = vmatpush1.msra.mxu0 %v23
  %509 = vmatprep.subr.mxu0 0.0
  %510 = vmatpush1.msra.mxu0 %v22
  %511 = vmatprep.subr.mxu0 0.0
  %512 = vmatpush1.msra.mxu0 %v21
  %513 = vmatprep.subr.mxu0 0.0
  %514 = vmatpush1.msra.mxu0 %v20
  %515 = vmatprep.subr.mxu0 0.0
  %516 = vmatpush1.msra.mxu0 %v19
  %517 = vmatprep.subr.mxu0 0.0
  %518 = vmatpush1.msra.mxu0 %v18
  %519 = vmatprep.subr.mxu0 0.0
  %520 = vmatpush1.msra.mxu0 %v17
  %521 = vmatprep.subr.mxu0 0.0
  %522 = vmatpush1.msra.mxu0 %v16
  %523 = vmatprep.subr.mxu0 0.0
  %524 = vmatpush1.msra.mxu0 %v15
  %525 = vmatprep.subr.mxu0 0.0
  %526 = vmatpush1.msra.mxu0 %v14
  %527 = vmatprep.subr.mxu0 0.0
  %528 = vmatpush2.msra.mxu0 0.0
  %529 = vmatprep.subr.mxu0 0.0
  %530 = vmatpush2.msra.mxu0 0.0
  %531 = vmatprep.subr.mxu0 0.0
  %532 = vmatpush2.msra.mxu0 0.0
  %533 = vmatprep.subr.mxu0 0.0
  %534 = vmatpush2.msra.mxu0 0.0
  %535 = vmatprep.subr.mxu0 0.0
  %536 = vmatpush2.msra.mxu0 0.0
  %537 = vmatprep.subr.mxu0 0.0
  %538 = vmatpush2.msra.mxu0 0.0
  %539 = vmatprep.subr.mxu0 0.0
  %540 = vmatpush2.msra.mxu0 0.0
  %541 = vmatprep.subr.mxu0 0.0
  %542 = vmatpush2.msra.mxu0 0.0
  %543 = vmatprep.subr.mxu0 0.0
  %544 = vmatpush2.msra.mxu0 0.0
  %545 = vmatprep.subr.mxu0 0.0
  %546 = vmatpush2.msra.mxu0 0.0
  %547 = vmatprep.subr.mxu0 0.0
  %548 = vmatpush2.msra.mxu0 0.0
  %549 = vmatprep.subr.mxu0 0.0
  %550 = vmatpush2.msra.mxu0 0.0
  %551 = vmatprep.subr.mxu0 0.0
  %552 = vmatpush2.msra.mxu0 0.0
  %553 = vmatprep.subr.mxu0 0.0
  %554 = vmatpush2.msra.mxu0 0.0
  %555 = vmatprep.subr.mxu0 0.0
  %556 = vmatpush2.msra.mxu0 0.0
  %557 = vmatprep.subr.mxu0 0.0
  %558 = vmatpush2.msra.mxu0 0.0
  %559 = vmatprep.mubr.f32.mxu0 0.0
  %560 = vmatmul.mubr.f32.gmra.mxu0 %v446
  %v561 = vpop.f32.mrf.mxu0
  %v562 = vadd.f32 %v84, %v561
  %v563 = vpop.f32.mrf.mxu0
  %564 = vmatprep.mubr.f32.mxu0 0.0
  %565 = vmatmul.mubr.f32.gmra.mxu0 %v447
  %v566 = vpop.f32.mrf.mxu0
  %v567 = vadd.f32 %v84, %v566
  %v568 = vpop.f32.mrf.mxu0
  %569 = vmatprep.mubr.f32.mxu0 0.0
  %570 = vmatmul.mubr.f32.gmra.mxu0 %v448
  %v571 = vpop.f32.mrf.mxu0
  %v572 = vadd.f32 %v84, %v571
  %v573 = vpop.f32.mrf.mxu0
  %574 = vmatprep.mubr.f32.mxu0 0.0
  %575 = vmatmul.mubr.f32.gmra.mxu0 %v449
  %v576 = vpop.f32.mrf.mxu0
  %v577 = vadd.f32 %v84, %v576
  %v578 = vpop.f32.mrf.mxu0
  %579 = vmatprep.mubr.f32.mxu0 0.0
  %580 = vmatmul.mubr.f32.gmra.mxu0 %v450
  %v581 = vpop.f32.mrf.mxu0
  %v582 = vadd.f32 %v84, %v581
  %v583 = vpop.f32.mrf.mxu0
  %584 = vmatprep.mubr.f32.mxu0 0.0
  %585 = vmatmul.mubr.f32.gmra.mxu0 %v451
  %v586 = vpop.f32.mrf.mxu0
  %v587 = vadd.f32 %v84, %v586
  %v588 = vpop.f32.mrf.mxu0
  %589 = vmatprep.mubr.f32.mxu0 0.0
  %590 = vmatmul.mubr.f32.gmra.mxu0 %v452
  %v591 = vpop.f32.mrf.mxu0
  %v592 = vadd.f32 %v84, %v591
  %v593 = vpop.f32.mrf.mxu0
  %594 = vmatprep.mubr.f32.mxu0 0.0
  %595 = vmatmul.mubr.f32.gmra.mxu0 %v453
  %v596 = vpop.f32.mrf.mxu0
  %v597 = vadd.f32 %v84, %v596
  %v598 = vpop.f32.mrf.mxu0
  %599 = vmatprep.mubr.f32.mxu0 0.0
  %600 = vmatmul.mubr.f32.gmra.mxu0 %v454
  %v601 = vpop.f32.mrf.mxu0
  %v602 = vadd.f32 %v84, %v601
  %v603 = vpop.f32.mrf.mxu0
  %604 = vmatprep.mubr.f32.mxu0 0.0
  %605 = vmatmul.mubr.f32.gmra.mxu0 %v455
  %v606 = vpop.f32.mrf.mxu0
  %v607 = vadd.f32 %v84, %v606
  %v608 = vpop.f32.mrf.mxu0
  %609 = vmatprep.mubr.f32.mxu0 0.0
  %610 = vmatmul.mubr.f32.gmra.mxu0 %v456
  %v611 = vpop.f32.mrf.mxu0
  %v612 = vadd.f32 %v84, %v611
  %v613 = vpop.f32.mrf.mxu0
  %614 = vmatprep.mubr.f32.mxu0 0.0
  %615 = vmatmul.mubr.f32.gmra.mxu0 %v457
  %v616 = vpop.f32.mrf.mxu0
  %v617 = vadd.f32 %v84, %v616
  %v618 = vpop.f32.mrf.mxu0
  %619 = vmatprep.mubr.f32.mxu0 0.0
  %620 = vmatmul.mubr.f32.gmra.mxu0 %v458
  %v621 = vpop.f32.mrf.mxu0
  %v622 = vadd.f32 %v84, %v621
  %v623 = vpop.f32.mrf.mxu0
  %624 = vmatprep.mubr.f32.mxu0 0.0
  %625 = vmatmul.mubr.f32.gmra.mxu0 %v459
  %v626 = vpop.f32.mrf.mxu0
  %v627 = vadd.f32 %v84, %v626
  %v628 = vpop.f32.mrf.mxu0
  %629 = vmatprep.mubr.f32.mxu0 0.0
  %630 = vmatmul.mubr.f32.gmra.mxu0 %v460
  %v631 = vpop.f32.mrf.mxu0
  %v632 = vadd.f32 %v84, %v631
  %v633 = vpop.f32.mrf.mxu0
  %634 = vmatprep.mubr.f32.mxu0 0.0
  %635 = vmatmul.mubr.f32.gmra.mxu0 %v461
  %v636 = vpop.f32.mrf.mxu0
  %v637 = vadd.f32 %v84, %v636
  %v638 = vpop.f32.mrf.mxu0
  %639 = vmatprep.mubr.f32.mxu0 0.0
  %640 = vmatmul.mubr.f32.gmra.mxu0 %v462
  %v641 = vpop.f32.mrf.mxu0
  %v642 = vadd.f32 %v84, %v641
  %v643 = vpop.f32.mrf.mxu0
  %644 = vmatprep.mubr.f32.mxu0 0.0
  %645 = vmatmul.mubr.f32.gmra.mxu0 %v463
  %v646 = vpop.f32.mrf.mxu0
  %v647 = vadd.f32 %v84, %v646
  %v648 = vpop.f32.mrf.mxu0
  %649 = vmatprep.mubr.f32.mxu0 0.0
  %650 = vmatmul.mubr.f32.gmra.mxu0 %v464
  %v651 = vpop.f32.mrf.mxu0
  %v652 = vadd.f32 %v84, %v651
  %v653 = vpop.f32.mrf.mxu0
  %654 = vmatprep.mubr.f32.mxu0 0.0
  %655 = vmatmul.mubr.f32.gmra.mxu0 %v465
  %v656 = vpop.f32.mrf.mxu0
  %v657 = vadd.f32 %v84, %v656
  %v658 = vpop.f32.mrf.mxu0
  %659 = vmatprep.mubr.f32.mxu0 0.0
  %660 = vmatmul.mubr.f32.gmra.mxu0 %v466
  %v661 = vpop.f32.mrf.mxu0
  %v662 = vadd.f32 %v84, %v661
  %v663 = vpop.f32.mrf.mxu0
  %664 = vmatprep.mubr.f32.mxu0 0.0
  %665 = vmatmul.mubr.f32.gmra.mxu0 %v467
  %v666 = vpop.f32.mrf.mxu0
  %v667 = vadd.f32 %v84, %v666
  %v668 = vpop.f32.mrf.mxu0
  %669 = vmatprep.mubr.f32.mxu0 0.0
  %670 = vmatmul.mubr.f32.gmra.mxu0 %v468
  %v671 = vpop.f32.mrf.mxu0
  %v672 = vadd.f32 %v84, %v671
  %v673 = vpop.f32.mrf.mxu0
  %674 = vmatprep.mubr.f32.mxu0 0.0
  %675 = vmatmul.mubr.f32.gmra.mxu0 %v469
  %v676 = vpop.f32.mrf.mxu0
  %v677 = vadd.f32 %v84, %v676
  %v678 = vpop.f32.mrf.mxu0
  %679 = vmatprep.mubr.f32.mxu0 0.0
  %680 = vmatmul.mubr.f32.gmra.mxu0 %v470
  %v681 = vpop.f32.mrf.mxu0
  %v682 = vadd.f32 %v84, %v681
  %v683 = vpop.f32.mrf.mxu0
  %684 = vmatprep.mubr.f32.mxu0 0.0
  %685 = vmatmul.mubr.f32.gmra.mxu0 %v471
  %v686 = vpop.f32.mrf.mxu0
  %v687 = vadd.f32 %v84, %v686
  %v688 = vpop.f32.mrf.mxu0
  %689 = vmatprep.mubr.f32.mxu0 0.0
  %690 = vmatmul.mubr.f32.gmra.mxu0 %v472
  %v691 = vpop.f32.mrf.mxu0
  %v692 = vadd.f32 %v84, %v691
  %v693 = vpop.f32.mrf.mxu0
  %694 = vmatprep.mubr.f32.mxu0 0.0
  %695 = vmatmul.mubr.f32.gmra.mxu0 %v473
  %v696 = vpop.f32.mrf.mxu0
  %v697 = vadd.f32 %v84, %v696
  %v698 = vpop.f32.mrf.mxu0
  %699 = vmatprep.mubr.f32.mxu0 0.0
  %700 = vmatmul.mubr.f32.gmra.mxu0 %v474
  %v701 = vpop.f32.mrf.mxu0
  %v702 = vadd.f32 %v84, %v701
  %v703 = vpop.f32.mrf.mxu0
  %704 = vmatprep.mubr.f32.mxu0 0.0
  %705 = vmatmul.mubr.f32.gmra.mxu0 %v475
  %v706 = vpop.f32.mrf.mxu0
  %v707 = vadd.f32 %v84, %v706
  %v708 = vpop.f32.mrf.mxu0
  %709 = vmatprep.mubr.f32.mxu0 0.0
  %710 = vmatmul.mubr.f32.gmra.mxu0 %v476
  %v711 = vpop.f32.mrf.mxu0
  %v712 = vadd.f32 %v84, %v711
  %v713 = vpop.f32.mrf.mxu0
  %714 = vmatprep.mubr.f32.mxu0 0.0
  %715 = vmatmul.mubr.f32.gmra.mxu0 %v477
  %v716 = vpop.f32.mrf.mxu0
  %v717 = vadd.f32 %v84, %v716
  %v718 = vpop.f32.mrf.mxu0
  %719 = vmatprep.mubr.f32.mxu0 0.0
  %720 = vmatmul.mubr.f32.gmra.mxu0 %v478
  %v721 = vpop.f32.mrf.mxu0
  %v722 = vadd.f32 %v84, %v721
  %v723 = vpop.f32.mrf.mxu0
  %724 = vmatprep.mubr.f32.mxu0 0.0
  %725 = vmatmul.mubr.f32.gmra.mxu0 %v479
  %v726 = vpop.f32.mrf.mxu0
  %v727 = vadd.f32 %v84, %v726
  %v728 = vpop.f32.mrf.mxu0
  %729 = vmatprep.mubr.f32.mxu0 0.0
  %730 = vmatmul.mubr.f32.gmra.mxu0 %v480
  %v731 = vpop.f32.mrf.mxu0
  %v732 = vadd.f32 %v84, %v731
  %v733 = vpop.f32.mrf.mxu0
  %734 = vmatprep.mubr.f32.mxu0 0.0
  %735 = vmatmul.mubr.f32.gmra.mxu0 %v481
  %v736 = vpop.f32.mrf.mxu0
  %v737 = vadd.f32 %v84, %v736
  %v738 = vpop.f32.mrf.mxu0
  %739 = vmatprep.mubr.f32.mxu0 0.0
  %740 = vmatmul.mubr.f32.gmra.mxu0 %v482
  %v741 = vpop.f32.mrf.mxu0
  %v742 = vadd.f32 %v84, %v741
  %v743 = vpop.f32.mrf.mxu0
  %744 = vmatprep.mubr.f32.mxu0 0.0
  %745 = vmatmul.mubr.f32.gmra.mxu0 %v483
  %v746 = vpop.f32.mrf.mxu0
  %v747 = vadd.f32 %v84, %v746
  %v748 = vpop.f32.mrf.mxu0
  %749 = vmatprep.mubr.f32.mxu0 0.0
  %750 = vmatmul.mubr.f32.gmra.mxu0 %v484
  %v751 = vpop.f32.mrf.mxu0
  %v752 = vadd.f32 %v84, %v751
  %v753 = vpop.f32.mrf.mxu0
  %754 = vmatprep.mubr.f32.mxu0 0.0
  %755 = vmatmul.mubr.f32.gmra.mxu0 %v485
  %v756 = vpop.f32.mrf.mxu0
  %v757 = vadd.f32 %v84, %v756
  %v758 = vpop.f32.mrf.mxu0
  %759 = vmatprep.mubr.f32.mxu0 0.0
  %760 = vmatmul.mubr.f32.gmra.mxu0 %v486
  %v761 = vpop.f32.mrf.mxu0
  %v762 = vadd.f32 %v84, %v761
  %v763 = vpop.f32.mrf.mxu0
  %764 = vmatprep.mubr.f32.mxu0 0.0
  %765 = vmatmul.mubr.f32.gmra.mxu0 %v487
  %v766 = vpop.f32.mrf.mxu0
  %v767 = vadd.f32 %v84, %v766
  %v768 = vpop.f32.mrf.mxu0
  %769 = vmatprep.mubr.f32.mxu0 0.0
  %770 = vmatmul.mubr.f32.gmra.mxu0 %v488
  %v771 = vpop.f32.mrf.mxu0
  %v772 = vadd.f32 %v84, %v771
  %v773 = vpop.f32.mrf.mxu0
  %774 = vmatprep.mubr.f32.mxu0 0.0
  %775 = vmatmul.mubr.f32.gmra.mxu0 %v489
  %v776 = vpop.f32.mrf.mxu0
  %v777 = vadd.f32 %v84, %v776
  %v778 = vpop.f32.mrf.mxu0
  %779 = vmatprep.mubr.f32.mxu0 0.0
  %780 = vmatmul.mubr.f32.gmra.mxu0 %v490
  %v781 = vpop.f32.mrf.mxu0
  %v782 = vadd.f32 %v84, %v781
  %v783 = vpop.f32.mrf.mxu0
  %784 = vmatprep.mubr.f32.mxu0 0.0
  %785 = vmatmul.mubr.f32.gmra.mxu0 %v491
  %v786 = vpop.f32.mrf.mxu0
  %v787 = vadd.f32 %v84, %v786
  %v788 = vpop.f32.mrf.mxu0
  %789 = vmatprep.mubr.f32.mxu0 0.0
  %790 = vmatmul.mubr.f32.gmra.mxu0 %v492
  %v791 = vpop.f32.mrf.mxu0
  %v792 = vadd.f32 %v84, %v791
  %v793 = vpop.f32.mrf.mxu0
  %794 = vmatprep.mubr.f32.mxu0 0.0
  %795 = vmatmul.mubr.f32.gmra.mxu0 %v493
  %v796 = vpop.f32.mrf.mxu0
  %v797 = vadd.f32 %v84, %v796
  %v798 = vpop.f32.mrf.mxu0
  %799 = vmatprep.mubr.f32.mxu0 0.0
  %800 = vmatmul.mubr.f32.gmra.mxu0 %v494
  %v801 = vpop.f32.mrf.mxu0
  %v802 = vadd.f32 %v84, %v801
  %v803 = vpop.f32.mrf.mxu0
  %804 = vdwg.mxu0
  %v805 = vmax.f32 %v562, 0.0
  %v806 = vmax.f32 %v567, 0.0
  %v807 = vmax.f32 %v572, 0.0
  %v808 = vmax.f32 %v577, 0.0
  %v809 = vmax.f32 %v582, 0.0
  %v810 = vmax.f32 %v587, 0.0
  %v811 = vmax.f32 %v592, 0.0
  %v812 = vmax.f32 %v597, 0.0
  %v813 = vmax.f32 %v602, 0.0
  %v814 = vmax.f32 %v607, 0.0
  %v815 = vmax.f32 %v612, 0.0
  %v816 = vmax.f32 %v617, 0.0
  %v817 = vmax.f32 %v622, 0.0
  %v818 = vmax.f32 %v627, 0.0
  %v819 = vmax.f32 %v632, 0.0
  %v820 = vmax.f32 %v637, 0.0
  %v821 = vmax.f32 %v642, 0.0
  %v822 = vmax.f32 %v647, 0.0
  %v823 = vmax.f32 %v652, 0.0
  %v824 = vmax.f32 %v657, 0.0
  %v825 = vmax.f32 %v662, 0.0
  %v826 = vmax.f32 %v667, 0.0
  %v827 = vmax.f32 %v672, 0.0
  %v828 = vmax.f32 %v677, 0.0
  %v829 = vmax.f32 %v682, 0.0
  %v830 = vmax.f32 %v687, 0.0
  %v831 = vmax.f32 %v692, 0.0
  %v832 = vmax.f32 %v697, 0.0
  %v833 = vmax.f32 %v702, 0.0
  %v834 = vmax.f32 %v707, 0.0
  %v835 = vmax.f32 %v712, 0.0
  %v836 = vmax.f32 %v717, 0.0
  %v837 = vmax.f32 %v722, 0.0
  %v838 = vmax.f32 %v727, 0.0
  %v839 = vmax.f32 %v732, 0.0
  %v840 = vmax.f32 %v737, 0.0
  %v841 = vmax.f32 %v742, 0.0
  %v842 = vmax.f32 %v747, 0.0
  %v843 = vmax.f32 %v752, 0.0
  %v844 = vmax.f32 %v757, 0.0
  %v845 = vmax.f32 %v762, 0.0
  %v846 = vmax.f32 %v767, 0.0
  %v847 = vmax.f32 %v772, 0.0
  %v848 = vmax.f32 %v777, 0.0
  %v849 = vmax.f32 %v782, 0.0
  %v850 = vmax.f32 %v787, 0.0
  %v851 = vmax.f32 %v792, 0.0
  %v852 = vmax.f32 %v797, 0.0
  %v853 = vmax.f32 %v802, 0.0
  %v854 = vmax.f32 %v396, %v805
  %v855 = vmax.f32 %v397, %v806
  %v856 = vmax.f32 %v398, %v807
  %v857 = vmax.f32 %v399, %v808
  %v858 = vmax.f32 %v400, %v809
  %v859 = vmax.f32 %v401, %v810
  %v860 = vmax.f32 %v402, %v811
  %v861 = vmax.f32 %v403, %v812
  %v862 = vmax.f32 %v404, %v813
  %v863 = vmax.f32 %v405, %v814
  %v864 = vmax.f32 %v406, %v815
  %v865 = vmax.f32 %v407, %v816
  %v866 = vmax.f32 %v408, %v817
  %v867 = vmax.f32 %v409, %v818
  %v868 = vmax.f32 %v410, %v819
  %v869 = vmax.f32 %v411, %v820
  %v870 = vmax.f32 %v412, %v821
  %v871 = vmax.f32 %v413, %v822
  %v872 = vmax.f32 %v414, %v823
  %v873 = vmax.f32 %v415, %v824
  %v874 = vmax.f32 %v416, %v825
  %v875 = vmax.f32 %v417, %v826
  %v876 = vmax.f32 %v418, %v827
  %v877 = vmax.f32 %v419, %v828
  %v878 = vmax.f32 %v420, %v829
  %v879 = vmax.f32 %v421, %v830
  %v880 = vmax.f32 %v422, %v831
  %v881 = vmax.f32 %v423, %v832
  %v882 = vmax.f32 %v424, %v833
  %v883 = vmax.f32 %v425, %v834
  %v884 = vmax.f32 %v426, %v835
  %v885 = vmax.f32 %v427, %v836
  %v886 = vmax.f32 %v428, %v837
  %v887 = vmax.f32 %v429, %v838
  %v888 = vmax.f32 %v430, %v839
  %v889 = vmax.f32 %v431, %v840
  %v890 = vmax.f32 %v432, %v841
  %v891 = vmax.f32 %v433, %v842
  %v892 = vmax.f32 %v434, %v843
  %v893 = vmax.f32 %v435, %v844
  %v894 = vmax.f32 %v436, %v845
  %v895 = vmax.f32 %v437, %v846
  %v896 = vmax.f32 %v438, %v847
  %v897 = vmax.f32 %v439, %v848
  %v898 = vmax.f32 %v440, %v849
  %v899 = vmax.f32 %v441, %v850
  %v900 = vmax.f32 %v442, %v851
  %v901 = vmax.f32 %v443, %v852
  %v902 = vmax.f32 %v444, %v853
  %s903 = scalar_lea.vmem %s0, 784
  %v904 = vld [vmem:[%s903] sm:$0xff]
  %v905 = vld [vmem:[%s903 + $0x8] sm:$0xff]
  %v906 = vld [vmem:[%s903 + $0x10] sm:$0xff]
  %v907 = vld [vmem:[%s903 + $0x18] sm:$0xff]
  %v908 = vld [vmem:[%s903 + $0x20] sm:$0xff]
  %v909 = vld [vmem:[%s903 + $0x28] sm:$0xff]
  %v910 = vld [vmem:[%s903 + $0x30] sm:$0xff]
  %v911 = vld [vmem:[%s903 + $0x38] sm:$0xff]
  %v912 = vld [vmem:[%s903 + $0x40] sm:$0xff]
  %v913 = vld [vmem:[%s903 + $0x48] sm:$0xff]
  %v914 = vld [vmem:[%s903 + $0x50] sm:$0xff]
  %v915 = vld [vmem:[%s903 + $0x58] sm:$0xff]
  %v916 = vld [vmem:[%s903 + $0x60] sm:$0xff]
  %v917 = vld [vmem:[%s903 + $0x68] sm:$0xff]
  %v918 = vld [vmem:[%s903 + $0x70] sm:$0xff]
  %v919 = vld [vmem:[%s903 + $0x78] sm:$0xff]
  %v920 = vld [vmem:[%s903 + $0x80] sm:$0xff]
  %v921 = vld [vmem:[%s903 + $0x88] sm:$0xff]
  %v922 = vld [vmem:[%s903 + $0x90] sm:$0xff]
  %v923 = vld [vmem:[%s903 + $0x98] sm:$0xff]
  %v924 = vld [vmem:[%s903 + $0xa0] sm:$0xff]
  %v925 = vld [vmem:[%s903 + $0xa8] sm:$0xff]
  %v926 = vld [vmem:[%s903 + $0xb0] sm:$0xff]
  %v927 = vld [vmem:[%s903 + $0xb8] sm:$0xff]
  %v928 = vld [vmem:[%s903 + $0xc0] sm:$0xff]
  %v929 = vld [vmem:[%s903 + $0xc8] sm:$0xff]
  %v930 = vld [vmem:[%s903 + $0xd0] sm:$0xff]
  %v931 = vld [vmem:[%s903 + $0xd8] sm:$0xff]
  %v932 = vld [vmem:[%s903 + $0xe0] sm:$0xff]
  %v933 = vld [vmem:[%s903 + $0xe8] sm:$0xff]
  %v934 = vld [vmem:[%s903 + $0xf0] sm:$0xff]
  %v935 = vld [vmem:[%s903 + $0xf8] sm:$0xff]
  %v936 = vld [vmem:[%s903 + $0x100] sm:$0xff]
  %v937 = vld [vmem:[%s903 + $0x108] sm:$0xff]
  %v938 = vld [vmem:[%s903 + $0x110] sm:$0xff]
  %v939 = vld [vmem:[%s903 + $0x118] sm:$0xff]
  %v940 = vld [vmem:[%s903 + $0x120] sm:$0xff]
  %v941 = vld [vmem:[%s903 + $0x128] sm:$0xff]
  %v942 = vld [vmem:[%s903 + $0x130] sm:$0xff]
  %v943 = vld [vmem:[%s903 + $0x138] sm:$0xff]
  %v944 = vld [vmem:[%s903 + $0x140] sm:$0xff]
  %v945 = vld [vmem:[%s903 + $0x148] sm:$0xff]
  %v946 = vld [vmem:[%s903 + $0x150] sm:$0xff]
  %v947 = vld [vmem:[%s903 + $0x158] sm:$0xff]
  %v948 = vld [vmem:[%s903 + $0x160] sm:$0xff]
  %v949 = vld [vmem:[%s903 + $0x168] sm:$0xff]
  %v950 = vld [vmem:[%s903 + $0x170] sm:$0xff]
  %v951 = vld [vmem:[%s903 + $0x178] sm:$0xff]
  %v952 = vld [vmem:[%s903 + $0x180] sm:$0xff]
  %953 = vmatprep.subr.mxu0 0.0
  %954 = vmatpush1.msra.mxu0 %v29
  %955 = vmatprep.subr.mxu0 0.0
  %956 = vmatpush1.msra.mxu0 %v28
  %957 = vmatprep.subr.mxu0 0.0
  %958 = vmatpush1.msra.mxu0 %v27
  %959 = vmatprep.subr.mxu0 0.0
  %960 = vmatpush1.msra.mxu0 %v26
  %961 = vmatprep.subr.mxu0 0.0
  %962 = vmatpush1.msra.mxu0 %v25
  %963 = vmatprep.subr.mxu0 0.0
  %964 = vmatpush1.msra.mxu0 %v24
  %965 = vmatprep.subr.mxu0 0.0
  %966 = vmatpush1.msra.mxu0 %v23
  %967 = vmatprep.subr.mxu0 0.0
  %968 = vmatpush1.msra.mxu0 %v22
  %969 = vmatprep.subr.mxu0 0.0
  %970 = vmatpush1.msra.mxu0 %v21
  %971 = vmatprep.subr.mxu0 0.0
  %972 = vmatpush1.msra.mxu0 %v20
  %973 = vmatprep.subr.mxu0 0.0
  %974 = vmatpush1.msra.mxu0 %v19
  %975 = vmatprep.subr.mxu0 0.0
  %976 = vmatpush1.msra.mxu0 %v18
  %977 = vmatprep.subr.mxu0 0.0
  %978 = vmatpush1.msra.mxu0 %v17
  %979 = vmatprep.subr.mxu0 0.0
  %980 = vmatpush1.msra.mxu0 %v16
  %981 = vmatprep.subr.mxu0 0.0
  %982 = vmatpush1.msra.mxu0 %v15
  %983 = vmatprep.subr.mxu0 0.0
  %984 = vmatpush1.msra.mxu0 %v14
  %985 = vmatprep.subr.mxu0 0.0
  %986 = vmatpush2.msra.mxu0 0.0
  %987 = vmatprep.subr.mxu0 0.0
  %988 = vmatpush2.msra.mxu0 0.0
  %989 = vmatprep.subr.mxu0 0.0
  %990 = vmatpush2.msra.mxu0 0.0
  %991 = vmatprep.subr.mxu0 0.0
  %992 = vmatpush2.msra.mxu0 0.0
  %993 = vmatprep.subr.mxu0 0.0
  %994 = vmatpush2.msra.mxu0 0.0
  %995 = vmatprep.subr.mxu0 0.0
  %996 = vmatpush2.msra.mxu0 0.0
  %997 = vmatprep.subr.mxu0 0.0
  %998 = vmatpush2.msra.mxu0 0.0
  %999 = vmatprep.subr.mxu0 0.0
  %1000 = vmatpush2.msra.mxu0 0.0
  %1001 = vmatprep.subr.mxu0 0.0
  %1002 = vmatpush2.msra.mxu0 0.0
  %1003 = vmatprep.subr.mxu0 0.0
  %1004 = vmatpush2.msra.mxu0 0.0
  %1005 = vmatprep.subr.mxu0 0.0
  %1006 = vmatpush2.msra.mxu0 0.0
  %1007 = vmatprep.subr.mxu0 0.0
  %1008 = vmatpush2.msra.mxu0 0.0
  %1009 = vmatprep.subr.mxu0 0.0
  %1010 = vmatpush2.msra.mxu0 0.0
  %1011 = vmatprep.subr.mxu0 0.0
  %1012 = vmatpush2.msra.mxu0 0.0
  %1013 = vmatprep.subr.mxu0 0.0
  %1014 = vmatpush2.msra.mxu0 0.0
  %1015 = vmatprep.subr.mxu0 0.0
  %1016 = vmatpush2.msra.mxu0 0.0
  %1017 = vmatprep.mubr.f32.mxu0 0.0
  %1018 = vmatmul.mubr.f32.gmra.mxu0 %v904
  %v1019 = vpop.f32.mrf.mxu0
  %v1020 = vadd.f32 %v84, %v1019
  %v1021 = vpop.f32.mrf.mxu0
  %1022 = vmatprep.mubr.f32.mxu0 0.0
  %1023 = vmatmul.mubr.f32.gmra.mxu0 %v905
  %v1024 = vpop.f32.mrf.mxu0
  %v1025 = vadd.f32 %v84, %v1024
  %v1026 = vpop.f32.mrf.mxu0
  %1027 = vmatprep.mubr.f32.mxu0 0.0
  %1028 = vmatmul.mubr.f32.gmra.mxu0 %v906
  %v1029 = vpop.f32.mrf.mxu0
  %v1030 = vadd.f32 %v84, %v1029
  %v1031 = vpop.f32.mrf.mxu0
  %1032 = vmatprep.mubr.f32.mxu0 0.0
  %1033 = vmatmul.mubr.f32.gmra.mxu0 %v907
  %v1034 = vpop.f32.mrf.mxu0
  %v1035 = vadd.f32 %v84, %v1034
  %v1036 = vpop.f32.mrf.mxu0
  %1037 = vmatprep.mubr.f32.mxu0 0.0
  %1038 = vmatmul.mubr.f32.gmra.mxu0 %v908
  %v1039 = vpop.f32.mrf.mxu0
  %v1040 = vadd.f32 %v84, %v1039
  %v1041 = vpop.f32.mrf.mxu0
  %1042 = vmatprep.mubr.f32.mxu0 0.0
  %1043 = vmatmul.mubr.f32.gmra.mxu0 %v909
  %v1044 = vpop.f32.mrf.mxu0
  %v1045 = vadd.f32 %v84, %v1044
  %v1046 = vpop.f32.mrf.mxu0
  %1047 = vmatprep.mubr.f32.mxu0 0.0
  %1048 = vmatmul.mubr.f32.gmra.mxu0 %v910
  %v1049 = vpop.f32.mrf.mxu0
  %v1050 = vadd.f32 %v84, %v1049
  %v1051 = vpop.f32.mrf.mxu0
  %1052 = vmatprep.mubr.f32.mxu0 0.0
  %1053 = vmatmul.mubr.f32.gmra.mxu0 %v911
  %v1054 = vpop.f32.mrf.mxu0
  %v1055 = vadd.f32 %v84, %v1054
  %v1056 = vpop.f32.mrf.mxu0
  %1057 = vmatprep.mubr.f32.mxu0 0.0
  %1058 = vmatmul.mubr.f32.gmra.mxu0 %v912
  %v1059 = vpop.f32.mrf.mxu0
  %v1060 = vadd.f32 %v84, %v1059
  %v1061 = vpop.f32.mrf.mxu0
  %1062 = vmatprep.mubr.f32.mxu0 0.0
  %1063 = vmatmul.mubr.f32.gmra.mxu0 %v913
  %v1064 = vpop.f32.mrf.mxu0
  %v1065 = vadd.f32 %v84, %v1064
  %v1066 = vpop.f32.mrf.mxu0
  %1067 = vmatprep.mubr.f32.mxu0 0.0
  %1068 = vmatmul.mubr.f32.gmra.mxu0 %v914
  %v1069 = vpop.f32.mrf.mxu0
  %v1070 = vadd.f32 %v84, %v1069
  %v1071 = vpop.f32.mrf.mxu0
  %1072 = vmatprep.mubr.f32.mxu0 0.0
  %1073 = vmatmul.mubr.f32.gmra.mxu0 %v915
  %v1074 = vpop.f32.mrf.mxu0
  %v1075 = vadd.f32 %v84, %v1074
  %v1076 = vpop.f32.mrf.mxu0
  %1077 = vmatprep.mubr.f32.mxu0 0.0
  %1078 = vmatmul.mubr.f32.gmra.mxu0 %v916
  %v1079 = vpop.f32.mrf.mxu0
  %v1080 = vadd.f32 %v84, %v1079
  %v1081 = vpop.f32.mrf.mxu0
  %1082 = vmatprep.mubr.f32.mxu0 0.0
  %1083 = vmatmul.mubr.f32.gmra.mxu0 %v917
  %v1084 = vpop.f32.mrf.mxu0
  %v1085 = vadd.f32 %v84, %v1084
  %v1086 = vpop.f32.mrf.mxu0
  %1087 = vmatprep.mubr.f32.mxu0 0.0
  %1088 = vmatmul.mubr.f32.gmra.mxu0 %v918
  %v1089 = vpop.f32.mrf.mxu0
  %v1090 = vadd.f32 %v84, %v1089
  %v1091 = vpop.f32.mrf.mxu0
  %1092 = vmatprep.mubr.f32.mxu0 0.0
  %1093 = vmatmul.mubr.f32.gmra.mxu0 %v919
  %v1094 = vpop.f32.mrf.mxu0
  %v1095 = vadd.f32 %v84, %v1094
  %v1096 = vpop.f32.mrf.mxu0
  %1097 = vmatprep.mubr.f32.mxu0 0.0
  %1098 = vmatmul.mubr.f32.gmra.mxu0 %v920
  %v1099 = vpop.f32.mrf.mxu0
  %v1100 = vadd.f32 %v84, %v1099
  %v1101 = vpop.f32.mrf.mxu0
  %1102 = vmatprep.mubr.f32.mxu0 0.0
  %1103 = vmatmul.mubr.f32.gmra.mxu0 %v921
  %v1104 = vpop.f32.mrf.mxu0
  %v1105 = vadd.f32 %v84, %v1104
  %v1106 = vpop.f32.mrf.mxu0
  %1107 = vmatprep.mubr.f32.mxu0 0.0
  %1108 = vmatmul.mubr.f32.gmra.mxu0 %v922
  %v1109 = vpop.f32.mrf.mxu0
  %v1110 = vadd.f32 %v84, %v1109
  %v1111 = vpop.f32.mrf.mxu0
  %1112 = vmatprep.mubr.f32.mxu0 0.0
  %1113 = vmatmul.mubr.f32.gmra.mxu0 %v923
  %v1114 = vpop.f32.mrf.mxu0
  %v1115 = vadd.f32 %v84, %v1114
  %v1116 = vpop.f32.mrf.mxu0
  %1117 = vmatprep.mubr.f32.mxu0 0.0
  %1118 = vmatmul.mubr.f32.gmra.mxu0 %v924
  %v1119 = vpop.f32.mrf.mxu0
  %v1120 = vadd.f32 %v84, %v1119
  %v1121 = vpop.f32.mrf.mxu0
  %1122 = vmatprep.mubr.f32.mxu0 0.0
  %1123 = vmatmul.mubr.f32.gmra.mxu0 %v925
  %v1124 = vpop.f32.mrf.mxu0
  %v1125 = vadd.f32 %v84, %v1124
  %v1126 = vpop.f32.mrf.mxu0
  %1127 = vmatprep.mubr.f32.mxu0 0.0
  %1128 = vmatmul.mubr.f32.gmra.mxu0 %v926
  %v1129 = vpop.f32.mrf.mxu0
  %v1130 = vadd.f32 %v84, %v1129
  %v1131 = vpop.f32.mrf.mxu0
  %1132 = vmatprep.mubr.f32.mxu0 0.0
  %1133 = vmatmul.mubr.f32.gmra.mxu0 %v927
  %v1134 = vpop.f32.mrf.mxu0
  %v1135 = vadd.f32 %v84, %v1134
  %v1136 = vpop.f32.mrf.mxu0
  %1137 = vmatprep.mubr.f32.mxu0 0.0
  %1138 = vmatmul.mubr.f32.gmra.mxu0 %v928
  %v1139 = vpop.f32.mrf.mxu0
  %v1140 = vadd.f32 %v84, %v1139
  %v1141 = vpop.f32.mrf.mxu0
  %1142 = vmatprep.mubr.f32.mxu0 0.0
  %1143 = vmatmul.mubr.f32.gmra.mxu0 %v929
  %v1144 = vpop.f32.mrf.mxu0
  %v1145 = vadd.f32 %v84, %v1144
  %v1146 = vpop.f32.mrf.mxu0
  %1147 = vmatprep.mubr.f32.mxu0 0.0
  %1148 = vmatmul.mubr.f32.gmra.mxu0 %v930
  %v1149 = vpop.f32.mrf.mxu0
  %v1150 = vadd.f32 %v84, %v1149
  %v1151 = vpop.f32.mrf.mxu0
  %1152 = vmatprep.mubr.f32.mxu0 0.0
  %1153 = vmatmul.mubr.f32.gmra.mxu0 %v931
  %v1154 = vpop.f32.mrf.mxu0
  %v1155 = vadd.f32 %v84, %v1154
  %v1156 = vpop.f32.mrf.mxu0
  %1157 = vmatprep.mubr.f32.mxu0 0.0
  %1158 = vmatmul.mubr.f32.gmra.mxu0 %v932
  %v1159 = vpop.f32.mrf.mxu0
  %v1160 = vadd.f32 %v84, %v1159
  %v1161 = vpop.f32.mrf.mxu0
  %1162 = vmatprep.mubr.f32.mxu0 0.0
  %1163 = vmatmul.mubr.f32.gmra.mxu0 %v933
  %v1164 = vpop.f32.mrf.mxu0
  %v1165 = vadd.f32 %v84, %v1164
  %v1166 = vpop.f32.mrf.mxu0
  %1167 = vmatprep.mubr.f32.mxu0 0.0
  %1168 = vmatmul.mubr.f32.gmra.mxu0 %v934
  %v1169 = vpop.f32.mrf.mxu0
  %v1170 = vadd.f32 %v84, %v1169
  %v1171 = vpop.f32.mrf.mxu0
  %1172 = vmatprep.mubr.f32.mxu0 0.0
  %1173 = vmatmul.mubr.f32.gmra.mxu0 %v935
  %v1174 = vpop.f32.mrf.mxu0
  %v1175 = vadd.f32 %v84, %v1174
  %v1176 = vpop.f32.mrf.mxu0
  %1177 = vmatprep.mubr.f32.mxu0 0.0
  %1178 = vmatmul.mubr.f32.gmra.mxu0 %v936
  %v1179 = vpop.f32.mrf.mxu0
  %v1180 = vadd.f32 %v84, %v1179
  %v1181 = vpop.f32.mrf.mxu0
  %1182 = vmatprep.mubr.f32.mxu0 0.0
  %1183 = vmatmul.mubr.f32.gmra.mxu0 %v937
  %v1184 = vpop.f32.mrf.mxu0
  %v1185 = vadd.f32 %v84, %v1184
  %v1186 = vpop.f32.mrf.mxu0
  %1187 = vmatprep.mubr.f32.mxu0 0.0
  %1188 = vmatmul.mubr.f32.gmra.mxu0 %v938
  %v1189 = vpop.f32.mrf.mxu0
  %v1190 = vadd.f32 %v84, %v1189
  %v1191 = vpop.f32.mrf.mxu0
  %1192 = vmatprep.mubr.f32.mxu0 0.0
  %1193 = vmatmul.mubr.f32.gmra.mxu0 %v939
  %v1194 = vpop.f32.mrf.mxu0
  %v1195 = vadd.f32 %v84, %v1194
  %v1196 = vpop.f32.mrf.mxu0
  %1197 = vmatprep.mubr.f32.mxu0 0.0
  %1198 = vmatmul.mubr.f32.gmra.mxu0 %v940
  %v1199 = vpop.f32.mrf.mxu0
  %v1200 = vadd.f32 %v84, %v1199
  %v1201 = vpop.f32.mrf.mxu0
  %1202 = vmatprep.mubr.f32.mxu0 0.0
  %1203 = vmatmul.mubr.f32.gmra.mxu0 %v941
  %v1204 = vpop.f32.mrf.mxu0
  %v1205 = vadd.f32 %v84, %v1204
  %v1206 = vpop.f32.mrf.mxu0
  %1207 = vmatprep.mubr.f32.mxu0 0.0
  %1208 = vmatmul.mubr.f32.gmra.mxu0 %v942
  %v1209 = vpop.f32.mrf.mxu0
  %v1210 = vadd.f32 %v84, %v1209
  %v1211 = vpop.f32.mrf.mxu0
  %1212 = vmatprep.mubr.f32.mxu0 0.0
  %1213 = vmatmul.mubr.f32.gmra.mxu0 %v943
  %v1214 = vpop.f32.mrf.mxu0
  %v1215 = vadd.f32 %v84, %v1214
  %v1216 = vpop.f32.mrf.mxu0
  %1217 = vmatprep.mubr.f32.mxu0 0.0
  %1218 = vmatmul.mubr.f32.gmra.mxu0 %v944
  %v1219 = vpop.f32.mrf.mxu0
  %v1220 = vadd.f32 %v84, %v1219
  %v1221 = vpop.f32.mrf.mxu0
  %1222 = vmatprep.mubr.f32.mxu0 0.0
  %1223 = vmatmul.mubr.f32.gmra.mxu0 %v945
  %v1224 = vpop.f32.mrf.mxu0
  %v1225 = vadd.f32 %v84, %v1224
  %v1226 = vpop.f32.mrf.mxu0
  %1227 = vmatprep.mubr.f32.mxu0 0.0
  %1228 = vmatmul.mubr.f32.gmra.mxu0 %v946
  %v1229 = vpop.f32.mrf.mxu0
  %v1230 = vadd.f32 %v84, %v1229
  %v1231 = vpop.f32.mrf.mxu0
  %1232 = vmatprep.mubr.f32.mxu0 0.0
  %1233 = vmatmul.mubr.f32.gmra.mxu0 %v947
  %v1234 = vpop.f32.mrf.mxu0
  %v1235 = vadd.f32 %v84, %v1234
  %v1236 = vpop.f32.mrf.mxu0
  %1237 = vmatprep.mubr.f32.mxu0 0.0
  %1238 = vmatmul.mubr.f32.gmra.mxu0 %v948
  %v1239 = vpop.f32.mrf.mxu0
  %v1240 = vadd.f32 %v84, %v1239
  %v1241 = vpop.f32.mrf.mxu0
  %1242 = vmatprep.mubr.f32.mxu0 0.0
  %1243 = vmatmul.mubr.f32.gmra.mxu0 %v949
  %v1244 = vpop.f32.mrf.mxu0
  %v1245 = vadd.f32 %v84, %v1244
  %v1246 = vpop.f32.mrf.mxu0
  %1247 = vmatprep.mubr.f32.mxu0 0.0
  %1248 = vmatmul.mubr.f32.gmra.mxu0 %v950
  %v1249 = vpop.f32.mrf.mxu0
  %v1250 = vadd.f32 %v84, %v1249
  %v1251 = vpop.f32.mrf.mxu0
  %1252 = vmatprep.mubr.f32.mxu0 0.0
  %1253 = vmatmul.mubr.f32.gmra.mxu0 %v951
  %v1254 = vpop.f32.mrf.mxu0
  %v1255 = vadd.f32 %v84, %v1254
  %v1256 = vpop.f32.mrf.mxu0
  %1257 = vmatprep.mubr.f32.mxu0 0.0
  %1258 = vmatmul.mubr.f32.gmra.mxu0 %v952
  %v1259 = vpop.f32.mrf.mxu0
  %v1260 = vadd.f32 %v84, %v1259
  %v1261 = vpop.f32.mrf.mxu0
  %1262 = vdwg.mxu0
  %v1263 = vmax.f32 %v1020, 0.0
  %v1264 = vmax.f32 %v1025, 0.0
  %v1265 = vmax.f32 %v1030, 0.0
  %v1266 = vmax.f32 %v1035, 0.0
  %v1267 = vmax.f32 %v1040, 0.0
  %v1268 = vmax.f32 %v1045, 0.0
  %v1269 = vmax.f32 %v1050, 0.0
  %v1270 = vmax.f32 %v1055, 0.0
  %v1271 = vmax.f32 %v1060, 0.0
  %v1272 = vmax.f32 %v1065, 0.0
  %v1273 = vmax.f32 %v1070, 0.0
  %v1274 = vmax.f32 %v1075, 0.0
  %v1275 = vmax.f32 %v1080, 0.0
  %v1276 = vmax.f32 %v1085, 0.0
  %v1277 = vmax.f32 %v1090, 0.0
  %v1278 = vmax.f32 %v1095, 0.0
  %v1279 = vmax.f32 %v1100, 0.0
  %v1280 = vmax.f32 %v1105, 0.0
  %v1281 = vmax.f32 %v1110, 0.0
  %v1282 = vmax.f32 %v1115, 0.0
  %v1283 = vmax.f32 %v1120, 0.0
  %v1284 = vmax.f32 %v1125, 0.0
  %v1285 = vmax.f32 %v1130, 0.0
  %v1286 = vmax.f32 %v1135, 0.0
  %v1287 = vmax.f32 %v1140, 0.0
  %v1288 = vmax.f32 %v1145, 0.0
  %v1289 = vmax.f32 %v1150, 0.0
  %v1290 = vmax.f32 %v1155, 0.0
  %v1291 = vmax.f32 %v1160, 0.0
  %v1292 = vmax.f32 %v1165, 0.0
  %v1293 = vmax.f32 %v1170, 0.0
  %v1294 = vmax.f32 %v1175, 0.0
  %v1295 = vmax.f32 %v1180, 0.0
  %v1296 = vmax.f32 %v1185, 0.0
  %v1297 = vmax.f32 %v1190, 0.0
  %v1298 = vmax.f32 %v1195, 0.0
  %v1299 = vmax.f32 %v1200, 0.0
  %v1300 = vmax.f32 %v1205, 0.0
  %v1301 = vmax.f32 %v1210, 0.0
  %v1302 = vmax.f32 %v1215, 0.0
  %v1303 = vmax.f32 %v1220, 0.0
  %v1304 = vmax.f32 %v1225, 0.0
  %v1305 = vmax.f32 %v1230, 0.0
  %v1306 = vmax.f32 %v1235, 0.0
  %v1307 = vmax.f32 %v1240, 0.0
  %v1308 = vmax.f32 %v1245, 0.0
  %v1309 = vmax.f32 %v1250, 0.0
  %v1310 = vmax.f32 %v1255, 0.0
  %v1311 = vmax.f32 %v1260, 0.0
  %v1312 = vmax.f32 %v854, %v1263
  %v1313 = vmax.f32 %v855, %v1264
  %v1314 = vmax.f32 %v856, %v1265
  %v1315 = vmax.f32 %v857, %v1266
  %v1316 = vmax.f32 %v858, %v1267
  %v1317 = vmax.f32 %v859, %v1268
  %v1318 = vmax.f32 %v860, %v1269
  %v1319 = vmax.f32 %v861, %v1270
  %v1320 = vmax.f32 %v862, %v1271
  %v1321 = vmax.f32 %v863, %v1272
  %v1322 = vmax.f32 %v864, %v1273
  %v1323 = vmax.f32 %v865, %v1274
  %v1324 = vmax.f32 %v866, %v1275
  %v1325 = vmax.f32 %v867, %v1276
  %v1326 = vmax.f32 %v868, %v1277
  %v1327 = vmax.f32 %v869, %v1278
  %v1328 = vmax.f32 %v870, %v1279
  %v1329 = vmax.f32 %v871, %v1280
  %v1330 = vmax.f32 %v872, %v1281
  %v1331 = vmax.f32 %v873, %v1282
  %v1332 = vmax.f32 %v874, %v1283
  %v1333 = vmax.f32 %v875, %v1284
  %v1334 = vmax.f32 %v876, %v1285
  %v1335 = vmax.f32 %v877, %v1286
  %v1336 = vmax.f32 %v878, %v1287
  %v1337 = vmax.f32 %v879, %v1288
  %v1338 = vmax.f32 %v880, %v1289
  %v1339 = vmax.f32 %v881, %v1290
  %v1340 = vmax.f32 %v882, %v1291
  %v1341 = vmax.f32 %v883, %v1292
  %v1342 = vmax.f32 %v884, %v1293
  %v1343 = vmax.f32 %v885, %v1294
  %v1344 = vmax.f32 %v886, %v1295
  %v1345 = vmax.f32 %v887, %v1296
  %v1346 = vmax.f32 %v888, %v1297
  %v1347 = vmax.f32 %v889, %v1298
  %v1348 = vmax.f32 %v890, %v1299
  %v1349 = vmax.f32 %v891, %v1300
  %v1350 = vmax.f32 %v892, %v1301
  %v1351 = vmax.f32 %v893, %v1302
  %v1352 = vmax.f32 %v894, %v1303
  %v1353 = vmax.f32 %v895, %v1304
  %v1354 = vmax.f32 %v896, %v1305
  %v1355 = vmax.f32 %v897, %v1306
  %v1356 = vmax.f32 %v898, %v1307
  %v1357 = vmax.f32 %v899, %v1308
  %v1358 = vmax.f32 %v900, %v1309
  %v1359 = vmax.f32 %v901, %v1310
  %v1360 = vmax.f32 %v902, %v1311
  %s1361 = scalar_lea.vmem %s0, 1176
  %v1362 = vld [vmem:[%s1361] sm:$0xff]
  %v1363 = vld [vmem:[%s1361 + $0x8] sm:$0xff]
  %v1364 = vld [vmem:[%s1361 + $0x10] sm:$0xff]
  %v1365 = vld [vmem:[%s1361 + $0x18] sm:$0xff]
  %v1366 = vld [vmem:[%s1361 + $0x20] sm:$0xff]
  %v1367 = vld [vmem:[%s1361 + $0x28] sm:$0xff]
  %v1368 = vld [vmem:[%s1361 + $0x30] sm:$0xff]
  %v1369 = vld [vmem:[%s1361 + $0x38] sm:$0xff]
  %v1370 = vld [vmem:[%s1361 + $0x40] sm:$0xff]
  %v1371 = vld [vmem:[%s1361 + $0x48] sm:$0xff]
  %v1372 = vld [vmem:[%s1361 + $0x50] sm:$0xff]
  %v1373 = vld [vmem:[%s1361 + $0x58] sm:$0xff]
  %v1374 = vld [vmem:[%s1361 + $0x60] sm:$0xff]
  %v1375 = vld [vmem:[%s1361 + $0x68] sm:$0xff]
  %v1376 = vld [vmem:[%s1361 + $0x70] sm:$0xff]
  %v1377 = vld [vmem:[%s1361 + $0x78] sm:$0xff]
  %v1378 = vld [vmem:[%s1361 + $0x80] sm:$0xff]
  %v1379 = vld [vmem:[%s1361 + $0x88] sm:$0xff]
  %v1380 = vld [vmem:[%s1361 + $0x90] sm:$0xff]
  %v1381 = vld [vmem:[%s1361 + $0x98] sm:$0xff]
  %v1382 = vld [vmem:[%s1361 + $0xa0] sm:$0xff]
  %v1383 = vld [vmem:[%s1361 + $0xa8] sm:$0xff]
  %v1384 = vld [vmem:[%s1361 + $0xb0] sm:$0xff]
  %v1385 = vld [vmem:[%s1361 + $0xb8] sm:$0xff]
  %v1386 = vld [vmem:[%s1361 + $0xc0] sm:$0xff]
  %v1387 = vld [vmem:[%s1361 + $0xc8] sm:$0xff]
  %v1388 = vld [vmem:[%s1361 + $0xd0] sm:$0xff]
  %v1389 = vld [vmem:[%s1361 + $0xd8] sm:$0xff]
  %v1390 = vld [vmem:[%s1361 + $0xe0] sm:$0xff]
  %v1391 = vld [vmem:[%s1361 + $0xe8] sm:$0xff]
  %v1392 = vld [vmem:[%s1361 + $0xf0] sm:$0xff]
  %v1393 = vld [vmem:[%s1361 + $0xf8] sm:$0xff]
  %v1394 = vld [vmem:[%s1361 + $0x100] sm:$0xff]
  %v1395 = vld [vmem:[%s1361 + $0x108] sm:$0xff]
  %v1396 = vld [vmem:[%s1361 + $0x110] sm:$0xff]
  %v1397 = vld [vmem:[%s1361 + $0x118] sm:$0xff]
  %v1398 = vld [vmem:[%s1361 + $0x120] sm:$0xff]
  %v1399 = vld [vmem:[%s1361 + $0x128] sm:$0xff]
  %v1400 = vld [vmem:[%s1361 + $0x130] sm:$0xff]
  %v1401 = vld [vmem:[%s1361 + $0x138] sm:$0xff]
  %v1402 = vld [vmem:[%s1361 + $0x140] sm:$0xff]
  %v1403 = vld [vmem:[%s1361 + $0x148] sm:$0xff]
  %v1404 = vld [vmem:[%s1361 + $0x150] sm:$0xff]
  %v1405 = vld [vmem:[%s1361 + $0x158] sm:$0xff]
  %v1406 = vld [vmem:[%s1361 + $0x160] sm:$0xff]
  %v1407 = vld [vmem:[%s1361 + $0x168] sm:$0xff]
  %v1408 = vld [vmem:[%s1361 + $0x170] sm:$0xff]
  %v1409 = vld [vmem:[%s1361 + $0x178] sm:$0xff]
  %v1410 = vld [vmem:[%s1361 + $0x180] sm:$0xff]
  %1411 = vmatprep.subr.mxu0 0.0
  %1412 = vmatpush1.msra.mxu0 %v29
  %1413 = vmatprep.subr.mxu0 0.0
  %1414 = vmatpush1.msra.mxu0 %v28
  %1415 = vmatprep.subr.mxu0 0.0
  %1416 = vmatpush1.msra.mxu0 %v27
  %1417 = vmatprep.subr.mxu0 0.0
  %1418 = vmatpush1.msra.mxu0 %v26
  %1419 = vmatprep.subr.mxu0 0.0
  %1420 = vmatpush1.msra.mxu0 %v25
  %1421 = vmatprep.subr.mxu0 0.0
  %1422 = vmatpush1.msra.mxu0 %v24
  %1423 = vmatprep.subr.mxu0 0.0
  %1424 = vmatpush1.msra.mxu0 %v23
  %1425 = vmatprep.subr.mxu0 0.0
  %1426 = vmatpush1.msra.mxu0 %v22
  %1427 = vmatprep.subr.mxu0 0.0
  %1428 = vmatpush1.msra.mxu0 %v21
  %1429 = vmatprep.subr.mxu0 0.0
  %1430 = vmatpush1.msra.mxu0 %v20
  %1431 = vmatprep.subr.mxu0 0.0
  %1432 = vmatpush1.msra.mxu0 %v19
  %1433 = vmatprep.subr.mxu0 0.0
  %1434 = vmatpush1.msra.mxu0 %v18
  %1435 = vmatprep.subr.mxu0 0.0
  %1436 = vmatpush1.msra.mxu0 %v17
  %1437 = vmatprep.subr.mxu0 0.0
  %1438 = vmatpush1.msra.mxu0 %v16
  %1439 = vmatprep.subr.mxu0 0.0
  %1440 = vmatpush1.msra.mxu0 %v15
  %1441 = vmatprep.subr.mxu0 0.0
  %1442 = vmatpush1.msra.mxu0 %v14
  %1443 = vmatprep.subr.mxu0 0.0
  %1444 = vmatpush2.msra.mxu0 0.0
  %1445 = vmatprep.subr.mxu0 0.0
  %1446 = vmatpush2.msra.mxu0 0.0
  %1447 = vmatprep.subr.mxu0 0.0
  %1448 = vmatpush2.msra.mxu0 0.0
  %1449 = vmatprep.subr.mxu0 0.0
  %1450 = vmatpush2.msra.mxu0 0.0
  %1451 = vmatprep.subr.mxu0 0.0
  %1452 = vmatpush2.msra.mxu0 0.0
  %1453 = vmatprep.subr.mxu0 0.0
  %1454 = vmatpush2.msra.mxu0 0.0
  %1455 = vmatprep.subr.mxu0 0.0
  %1456 = vmatpush2.msra.mxu0 0.0
  %1457 = vmatprep.subr.mxu0 0.0
  %1458 = vmatpush2.msra.mxu0 0.0
  %1459 = vmatprep.subr.mxu0 0.0
  %1460 = vmatpush2.msra.mxu0 0.0
  %1461 = vmatprep.subr.mxu0 0.0
  %1462 = vmatpush2.msra.mxu0 0.0
  %1463 = vmatprep.subr.mxu0 0.0
  %1464 = vmatpush2.msra.mxu0 0.0
  %1465 = vmatprep.subr.mxu0 0.0
  %1466 = vmatpush2.msra.mxu0 0.0
  %1467 = vmatprep.subr.mxu0 0.0
  %1468 = vmatpush2.msra.mxu0 0.0
  %1469 = vmatprep.subr.mxu0 0.0
  %1470 = vmatpush2.msra.mxu0 0.0
  %1471 = vmatprep.subr.mxu0 0.0
  %1472 = vmatpush2.msra.mxu0 0.0
  %1473 = vmatprep.subr.mxu0 0.0
  %1474 = vmatpush2.msra.mxu0 0.0
  %1475 = vmatprep.mubr.f32.mxu0 0.0
  %1476 = vmatmul.mubr.f32.gmra.mxu0 %v1362
  %v1477 = vpop.f32.mrf.mxu0
  %v1478 = vadd.f32 %v84, %v1477
  %v1479 = vpop.f32.mrf.mxu0
  %1480 = vmatprep.mubr.f32.mxu0 0.0
  %1481 = vmatmul.mubr.f32.gmra.mxu0 %v1363
  %v1482 = vpop.f32.mrf.mxu0
  %v1483 = vadd.f32 %v84, %v1482
  %v1484 = vpop.f32.mrf.mxu0
  %1485 = vmatprep.mubr.f32.mxu0 0.0
  %1486 = vmatmul.mubr.f32.gmra.mxu0 %v1364
  %v1487 = vpop.f32.mrf.mxu0
  %v1488 = vadd.f32 %v84, %v1487
  %v1489 = vpop.f32.mrf.mxu0
  %1490 = vmatprep.mubr.f32.mxu0 0.0
  %1491 = vmatmul.mubr.f32.gmra.mxu0 %v1365
  %v1492 = vpop.f32.mrf.mxu0
  %v1493 = vadd.f32 %v84, %v1492
  %v1494 = vpop.f32.mrf.mxu0
  %1495 = vmatprep.mubr.f32.mxu0 0.0
  %1496 = vmatmul.mubr.f32.gmra.mxu0 %v1366
  %v1497 = vpop.f32.mrf.mxu0
  %v1498 = vadd.f32 %v84, %v1497
  %v1499 = vpop.f32.mrf.mxu0
  %1500 = vmatprep.mubr.f32.mxu0 0.0
  %1501 = vmatmul.mubr.f32.gmra.mxu0 %v1367
  %v1502 = vpop.f32.mrf.mxu0
  %v1503 = vadd.f32 %v84, %v1502
  %v1504 = vpop.f32.mrf.mxu0
  %1505 = vmatprep.mubr.f32.mxu0 0.0
  %1506 = vmatmul.mubr.f32.gmra.mxu0 %v1368
  %v1507 = vpop.f32.mrf.mxu0
  %v1508 = vadd.f32 %v84, %v1507
  %v1509 = vpop.f32.mrf.mxu0
  %1510 = vmatprep.mubr.f32.mxu0 0.0
  %1511 = vmatmul.mubr.f32.gmra.mxu0 %v1369
  %v1512 = vpop.f32.mrf.mxu0
  %v1513 = vadd.f32 %v84, %v1512
  %v1514 = vpop.f32.mrf.mxu0
  %1515 = vmatprep.mubr.f32.mxu0 0.0
  %1516 = vmatmul.mubr.f32.gmra.mxu0 %v1370
  %v1517 = vpop.f32.mrf.mxu0
  %v1518 = vadd.f32 %v84, %v1517
  %v1519 = vpop.f32.mrf.mxu0
  %1520 = vmatprep.mubr.f32.mxu0 0.0
  %1521 = vmatmul.mubr.f32.gmra.mxu0 %v1371
  %v1522 = vpop.f32.mrf.mxu0
  %v1523 = vadd.f32 %v84, %v1522
  %v1524 = vpop.f32.mrf.mxu0
  %1525 = vmatprep.mubr.f32.mxu0 0.0
  %1526 = vmatmul.mubr.f32.gmra.mxu0 %v1372
  %v1527 = vpop.f32.mrf.mxu0
  %v1528 = vadd.f32 %v84, %v1527
  %v1529 = vpop.f32.mrf.mxu0
  %1530 = vmatprep.mubr.f32.mxu0 0.0
  %1531 = vmatmul.mubr.f32.gmra.mxu0 %v1373
  %v1532 = vpop.f32.mrf.mxu0
  %v1533 = vadd.f32 %v84, %v1532
  %v1534 = vpop.f32.mrf.mxu0
  %1535 = vmatprep.mubr.f32.mxu0 0.0
  %1536 = vmatmul.mubr.f32.gmra.mxu0 %v1374
  %v1537 = vpop.f32.mrf.mxu0
  %v1538 = vadd.f32 %v84, %v1537
  %v1539 = vpop.f32.mrf.mxu0
  %1540 = vmatprep.mubr.f32.mxu0 0.0
  %1541 = vmatmul.mubr.f32.gmra.mxu0 %v1375
  %v1542 = vpop.f32.mrf.mxu0
  %v1543 = vadd.f32 %v84, %v1542
  %v1544 = vpop.f32.mrf.mxu0
  %1545 = vmatprep.mubr.f32.mxu0 0.0
  %1546 = vmatmul.mubr.f32.gmra.mxu0 %v1376
  %v1547 = vpop.f32.mrf.mxu0
  %v1548 = vadd.f32 %v84, %v1547
  %v1549 = vpop.f32.mrf.mxu0
  %1550 = vmatprep.mubr.f32.mxu0 0.0
  %1551 = vmatmul.mubr.f32.gmra.mxu0 %v1377
  %v1552 = vpop.f32.mrf.mxu0
  %v1553 = vadd.f32 %v84, %v1552
  %v1554 = vpop.f32.mrf.mxu0
  %1555 = vmatprep.mubr.f32.mxu0 0.0
  %1556 = vmatmul.mubr.f32.gmra.mxu0 %v1378
  %v1557 = vpop.f32.mrf.mxu0
  %v1558 = vadd.f32 %v84, %v1557
  %v1559 = vpop.f32.mrf.mxu0
  %1560 = vmatprep.mubr.f32.mxu0 0.0
  %1561 = vmatmul.mubr.f32.gmra.mxu0 %v1379
  %v1562 = vpop.f32.mrf.mxu0
  %v1563 = vadd.f32 %v84, %v1562
  %v1564 = vpop.f32.mrf.mxu0
  %1565 = vmatprep.mubr.f32.mxu0 0.0
  %1566 = vmatmul.mubr.f32.gmra.mxu0 %v1380
  %v1567 = vpop.f32.mrf.mxu0
  %v1568 = vadd.f32 %v84, %v1567
  %v1569 = vpop.f32.mrf.mxu0
  %1570 = vmatprep.mubr.f32.mxu0 0.0
  %1571 = vmatmul.mubr.f32.gmra.mxu0 %v1381
  %v1572 = vpop.f32.mrf.mxu0
  %v1573 = vadd.f32 %v84, %v1572
  %v1574 = vpop.f32.mrf.mxu0
  %1575 = vmatprep.mubr.f32.mxu0 0.0
  %1576 = vmatmul.mubr.f32.gmra.mxu0 %v1382
  %v1577 = vpop.f32.mrf.mxu0
  %v1578 = vadd.f32 %v84, %v1577
  %v1579 = vpop.f32.mrf.mxu0
  %1580 = vmatprep.mubr.f32.mxu0 0.0
  %1581 = vmatmul.mubr.f32.gmra.mxu0 %v1383
  %v1582 = vpop.f32.mrf.mxu0
  %v1583 = vadd.f32 %v84, %v1582
  %v1584 = vpop.f32.mrf.mxu0
  %1585 = vmatprep.mubr.f32.mxu0 0.0
  %1586 = vmatmul.mubr.f32.gmra.mxu0 %v1384
  %v1587 = vpop.f32.mrf.mxu0
  %v1588 = vadd.f32 %v84, %v1587
  %v1589 = vpop.f32.mrf.mxu0
  %1590 = vmatprep.mubr.f32.mxu0 0.0
  %1591 = vmatmul.mubr.f32.gmra.mxu0 %v1385
  %v1592 = vpop.f32.mrf.mxu0
  %v1593 = vadd.f32 %v84, %v1592
  %v1594 = vpop.f32.mrf.mxu0
  %1595 = vmatprep.mubr.f32.mxu0 0.0
  %1596 = vmatmul.mubr.f32.gmra.mxu0 %v1386
  %v1597 = vpop.f32.mrf.mxu0
  %v1598 = vadd.f32 %v84, %v1597
  %v1599 = vpop.f32.mrf.mxu0
  %1600 = vmatprep.mubr.f32.mxu0 0.0
  %1601 = vmatmul.mubr.f32.gmra.mxu0 %v1387
  %v1602 = vpop.f32.mrf.mxu0
  %v1603 = vadd.f32 %v84, %v1602
  %v1604 = vpop.f32.mrf.mxu0
  %1605 = vmatprep.mubr.f32.mxu0 0.0
  %1606 = vmatmul.mubr.f32.gmra.mxu0 %v1388
  %v1607 = vpop.f32.mrf.mxu0
  %v1608 = vadd.f32 %v84, %v1607
  %v1609 = vpop.f32.mrf.mxu0
  %1610 = vmatprep.mubr.f32.mxu0 0.0
  %1611 = vmatmul.mubr.f32.gmra.mxu0 %v1389
  %v1612 = vpop.f32.mrf.mxu0
  %v1613 = vadd.f32 %v84, %v1612
  %v1614 = vpop.f32.mrf.mxu0
  %1615 = vmatprep.mubr.f32.mxu0 0.0
  %1616 = vmatmul.mubr.f32.gmra.mxu0 %v1390
  %v1617 = vpop.f32.mrf.mxu0
  %v1618 = vadd.f32 %v84, %v1617
  %v1619 = vpop.f32.mrf.mxu0
  %1620 = vmatprep.mubr.f32.mxu0 0.0
  %1621 = vmatmul.mubr.f32.gmra.mxu0 %v1391
  %v1622 = vpop.f32.mrf.mxu0
  %v1623 = vadd.f32 %v84, %v1622
  %v1624 = vpop.f32.mrf.mxu0
  %1625 = vmatprep.mubr.f32.mxu0 0.0
  %1626 = vmatmul.mubr.f32.gmra.mxu0 %v1392
  %v1627 = vpop.f32.mrf.mxu0
  %v1628 = vadd.f32 %v84, %v1627
  %v1629 = vpop.f32.mrf.mxu0
  %1630 = vmatprep.mubr.f32.mxu0 0.0
  %1631 = vmatmul.mubr.f32.gmra.mxu0 %v1393
  %v1632 = vpop.f32.mrf.mxu0
  %v1633 = vadd.f32 %v84, %v1632
  %v1634 = vpop.f32.mrf.mxu0
  %1635 = vmatprep.mubr.f32.mxu0 0.0
  %1636 = vmatmul.mubr.f32.gmra.mxu0 %v1394
  %v1637 = vpop.f32.mrf.mxu0
  %v1638 = vadd.f32 %v84, %v1637
  %v1639 = vpop.f32.mrf.mxu0
  %1640 = vmatprep.mubr.f32.mxu0 0.0
  %1641 = vmatmul.mubr.f32.gmra.mxu0 %v1395
  %v1642 = vpop.f32.mrf.mxu0
  %v1643 = vadd.f32 %v84, %v1642
  %v1644 = vpop.f32.mrf.mxu0
  %1645 = vmatprep.mubr.f32.mxu0 0.0
  %1646 = vmatmul.mubr.f32.gmra.mxu0 %v1396
  %v1647 = vpop.f32.mrf.mxu0
  %v1648 = vadd.f32 %v84, %v1647
  %v1649 = vpop.f32.mrf.mxu0
  %1650 = vmatprep.mubr.f32.mxu0 0.0
  %1651 = vmatmul.mubr.f32.gmra.mxu0 %v1397
  %v1652 = vpop.f32.mrf.mxu0
  %v1653 = vadd.f32 %v84, %v1652
  %v1654 = vpop.f32.mrf.mxu0
  %1655 = vmatprep.mubr.f32.mxu0 0.0
  %1656 = vmatmul.mubr.f32.gmra.mxu0 %v1398
  %v1657 = vpop.f32.mrf.mxu0
  %v1658 = vadd.f32 %v84, %v1657
  %v1659 = vpop.f32.mrf.mxu0
  %1660 = vmatprep.mubr.f32.mxu0 0.0
  %1661 = vmatmul.mubr.f32.gmra.mxu0 %v1399
  %v1662 = vpop.f32.mrf.mxu0
  %v1663 = vadd.f32 %v84, %v1662
  %v1664 = vpop.f32.mrf.mxu0
  %1665 = vmatprep.mubr.f32.mxu0 0.0
  %1666 = vmatmul.mubr.f32.gmra.mxu0 %v1400
  %v1667 = vpop.f32.mrf.mxu0
  %v1668 = vadd.f32 %v84, %v1667
  %v1669 = vpop.f32.mrf.mxu0
  %1670 = vmatprep.mubr.f32.mxu0 0.0
  %1671 = vmatmul.mubr.f32.gmra.mxu0 %v1401
  %v1672 = vpop.f32.mrf.mxu0
  %v1673 = vadd.f32 %v84, %v1672
  %v1674 = vpop.f32.mrf.mxu0
  %1675 = vmatprep.mubr.f32.mxu0 0.0
  %1676 = vmatmul.mubr.f32.gmra.mxu0 %v1402
  %v1677 = vpop.f32.mrf.mxu0
  %v1678 = vadd.f32 %v84, %v1677
  %v1679 = vpop.f32.mrf.mxu0
  %1680 = vmatprep.mubr.f32.mxu0 0.0
  %1681 = vmatmul.mubr.f32.gmra.mxu0 %v1403
  %v1682 = vpop.f32.mrf.mxu0
  %v1683 = vadd.f32 %v84, %v1682
  %v1684 = vpop.f32.mrf.mxu0
  %1685 = vmatprep.mubr.f32.mxu0 0.0
  %1686 = vmatmul.mubr.f32.gmra.mxu0 %v1404
  %v1687 = vpop.f32.mrf.mxu0
  %v1688 = vadd.f32 %v84, %v1687
  %v1689 = vpop.f32.mrf.mxu0
  %1690 = vmatprep.mubr.f32.mxu0 0.0
  %1691 = vmatmul.mubr.f32.gmra.mxu0 %v1405
  %v1692 = vpop.f32.mrf.mxu0
  %v1693 = vadd.f32 %v84, %v1692
  %v1694 = vpop.f32.mrf.mxu0
  %1695 = vmatprep.mubr.f32.mxu0 0.0
  %1696 = vmatmul.mubr.f32.gmra.mxu0 %v1406
  %v1697 = vpop.f32.mrf.mxu0
  %v1698 = vadd.f32 %v84, %v1697
  %v1699 = vpop.f32.mrf.mxu0
  %1700 = vmatprep.mubr.f32.mxu0 0.0
  %1701 = vmatmul.mubr.f32.gmra.mxu0 %v1407
  %v1702 = vpop.f32.mrf.mxu0
  %v1703 = vadd.f32 %v84, %v1702
  %v1704 = vpop.f32.mrf.mxu0
  %1705 = vmatprep.mubr.f32.mxu0 0.0
  %1706 = vmatmul.mubr.f32.gmra.mxu0 %v1408
  %v1707 = vpop.f32.mrf.mxu0
  %v1708 = vadd.f32 %v84, %v1707
  %v1709 = vpop.f32.mrf.mxu0
  %1710 = vmatprep.mubr.f32.mxu0 0.0
  %1711 = vmatmul.mubr.f32.gmra.mxu0 %v1409
  %v1712 = vpop.f32.mrf.mxu0
  %v1713 = vadd.f32 %v84, %v1712
  %v1714 = vpop.f32.mrf.mxu0
  %1715 = vmatprep.mubr.f32.mxu0 0.0
  %1716 = vmatmul.mubr.f32.gmra.mxu0 %v1410
  %v1717 = vpop.f32.mrf.mxu0
  %v1718 = vadd.f32 %v84, %v1717
  %v1719 = vpop.f32.mrf.mxu0
  %1720 = vdwg.mxu0
  %v1721 = vmax.f32 %v1478, 0.0
  %v1722 = vmax.f32 %v1483, 0.0
  %v1723 = vmax.f32 %v1488, 0.0
  %v1724 = vmax.f32 %v1493, 0.0
  %v1725 = vmax.f32 %v1498, 0.0
  %v1726 = vmax.f32 %v1503, 0.0
  %v1727 = vmax.f32 %v1508, 0.0
  %v1728 = vmax.f32 %v1513, 0.0
  %v1729 = vmax.f32 %v1518, 0.0
  %v1730 = vmax.f32 %v1523, 0.0
  %v1731 = vmax.f32 %v1528, 0.0
  %v1732 = vmax.f32 %v1533, 0.0
  %v1733 = vmax.f32 %v1538, 0.0
  %v1734 = vmax.f32 %v1543, 0.0
  %v1735 = vmax.f32 %v1548, 0.0
  %v1736 = vmax.f32 %v1553, 0.0
  %v1737 = vmax.f32 %v1558, 0.0
  %v1738 = vmax.f32 %v1563, 0.0
  %v1739 = vmax.f32 %v1568, 0.0
  %v1740 = vmax.f32 %v1573, 0.0
  %v1741 = vmax.f32 %v1578, 0.0
  %v1742 = vmax.f32 %v1583, 0.0
  %v1743 = vmax.f32 %v1588, 0.0
  %v1744 = vmax.f32 %v1593, 0.0
  %v1745 = vmax.f32 %v1598, 0.0
  %v1746 = vmax.f32 %v1603, 0.0
  %v1747 = vmax.f32 %v1608, 0.0
  %v1748 = vmax.f32 %v1613, 0.0
  %v1749 = vmax.f32 %v1618, 0.0
  %v1750 = vmax.f32 %v1623, 0.0
  %v1751 = vmax.f32 %v1628, 0.0
  %v1752 = vmax.f32 %v1633, 0.0
  %v1753 = vmax.f32 %v1638, 0.0
  %v1754 = vmax.f32 %v1643, 0.0
  %v1755 = vmax.f32 %v1648, 0.0
  %v1756 = vmax.f32 %v1653, 0.0
  %v1757 = vmax.f32 %v1658, 0.0
  %v1758 = vmax.f32 %v1663, 0.0
  %v1759 = vmax.f32 %v1668, 0.0
  %v1760 = vmax.f32 %v1673, 0.0
  %v1761 = vmax.f32 %v1678, 0.0
  %v1762 = vmax.f32 %v1683, 0.0
  %v1763 = vmax.f32 %v1688, 0.0
  %v1764 = vmax.f32 %v1693, 0.0
  %v1765 = vmax.f32 %v1698, 0.0
  %v1766 = vmax.f32 %v1703, 0.0
  %v1767 = vmax.f32 %v1708, 0.0
  %v1768 = vmax.f32 %v1713, 0.0
  %v1769 = vmax.f32 %v1718, 0.0
  %v1770 = vmax.f32 %v1312, %v1721
  %v1771 = vmax.f32 %v1313, %v1722
  %v1772 = vmax.f32 %v1314, %v1723
  %v1773 = vmax.f32 %v1315, %v1724
  %v1774 = vmax.f32 %v1316, %v1725
  %v1775 = vmax.f32 %v1317, %v1726
  %v1776 = vmax.f32 %v1318, %v1727
  %v1777 = vmax.f32 %v1319, %v1728
  %v1778 = vmax.f32 %v1320, %v1729
  %v1779 = vmax.f32 %v1321, %v1730
  %v1780 = vmax.f32 %v1322, %v1731
  %v1781 = vmax.f32 %v1323, %v1732
  %v1782 = vmax.f32 %v1324, %v1733
  %v1783 = vmax.f32 %v1325, %v1734
  %v1784 = vmax.f32 %v1326, %v1735
  %v1785 = vmax.f32 %v1327, %v1736
  %v1786 = vmax.f32 %v1328, %v1737
  %v1787 = vmax.f32 %v1329, %v1738
  %v1788 = vmax.f32 %v1330, %v1739
  %v1789 = vmax.f32 %v1331, %v1740
  %v1790 = vmax.f32 %v1332, %v1741
  %v1791 = vmax.f32 %v1333, %v1742
  %v1792 = vmax.f32 %v1334, %v1743
  %v1793 = vmax.f32 %v1335, %v1744
  %v1794 = vmax.f32 %v1336, %v1745
  %v1795 = vmax.f32 %v1337, %v1746
  %v1796 = vmax.f32 %v1338, %v1747
  %v1797 = vmax.f32 %v1339, %v1748
  %v1798 = vmax.f32 %v1340, %v1749
  %v1799 = vmax.f32 %v1341, %v1750
  %v1800 = vmax.f32 %v1342, %v1751
  %v1801 = vmax.f32 %v1343, %v1752
  %v1802 = vmax.f32 %v1344, %v1753
  %v1803 = vmax.f32 %v1345, %v1754
  %v1804 = vmax.f32 %v1346, %v1755
  %v1805 = vmax.f32 %v1347, %v1756
  %v1806 = vmax.f32 %v1348, %v1757
  %v1807 = vmax.f32 %v1349, %v1758
  %v1808 = vmax.f32 %v1350, %v1759
  %v1809 = vmax.f32 %v1351, %v1760
  %v1810 = vmax.f32 %v1352, %v1761
  %v1811 = vmax.f32 %v1353, %v1762
  %v1812 = vmax.f32 %v1354, %v1763
  %v1813 = vmax.f32 %v1355, %v1764
  %v1814 = vmax.f32 %v1356, %v1765
  %v1815 = vmax.f32 %v1357, %v1766
  %v1816 = vmax.f32 %v1358, %v1767
  %v1817 = vmax.f32 %v1359, %v1768
  %v1818 = vmax.f32 %v1360, %v1769
  %vm1819 = vcmask 64512
  %1820 = vst.msk [vmem:[%s3] sm:$0xff] %vm1819, %v1770
  %1821 = vst.msk [vmem:[%s3 + $0x8] sm:$0xff] %vm1819, %v1771
  %1822 = vst.msk [vmem:[%s3 + $0x10] sm:$0xff] %vm1819, %v1772
  %1823 = vst.msk [vmem:[%s3 + $0x18] sm:$0xff] %vm1819, %v1773
  %1824 = vst.msk [vmem:[%s3 + $0x20] sm:$0xff] %vm1819, %v1774
  %1825 = vst.msk [vmem:[%s3 + $0x28] sm:$0xff] %vm1819, %v1775
  %1826 = vst.msk [vmem:[%s3 + $0x30] sm:$0xff] %vm1819, %v1776
  %1827 = vst.msk [vmem:[%s3 + $0x38] sm:$0xff] %vm1819, %v1777
  %1828 = vst.msk [vmem:[%s3 + $0x40] sm:$0xff] %vm1819, %v1778
  %1829 = vst.msk [vmem:[%s3 + $0x48] sm:$0xff] %vm1819, %v1779
  %1830 = vst.msk [vmem:[%s3 + $0x50] sm:$0xff] %vm1819, %v1780
  %1831 = vst.msk [vmem:[%s3 + $0x58] sm:$0xff] %vm1819, %v1781
  %1832 = vst.msk [vmem:[%s3 + $0x60] sm:$0xff] %vm1819, %v1782
  %1833 = vst.msk [vmem:[%s3 + $0x68] sm:$0xff] %vm1819, %v1783
  %1834 = vst.msk [vmem:[%s3 + $0x70] sm:$0xff] %vm1819, %v1784
  %1835 = vst.msk [vmem:[%s3 + $0x78] sm:$0xff] %vm1819, %v1785
  %1836 = vst.msk [vmem:[%s3 + $0x80] sm:$0xff] %vm1819, %v1786
  %1837 = vst.msk [vmem:[%s3 + $0x88] sm:$0xff] %vm1819, %v1787
  %1838 = vst.msk [vmem:[%s3 + $0x90] sm:$0xff] %vm1819, %v1788
  %1839 = vst.msk [vmem:[%s3 + $0x98] sm:$0xff] %vm1819, %v1789
  %1840 = vst.msk [vmem:[%s3 + $0xa0] sm:$0xff] %vm1819, %v1790
  %1841 = vst.msk [vmem:[%s3 + $0xa8] sm:$0xff] %vm1819, %v1791
  %1842 = vst.msk [vmem:[%s3 + $0xb0] sm:$0xff] %vm1819, %v1792
  %1843 = vst.msk [vmem:[%s3 + $0xb8] sm:$0xff] %vm1819, %v1793
  %1844 = vst.msk [vmem:[%s3 + $0xc0] sm:$0xff] %vm1819, %v1794
  %1845 = vst.msk [vmem:[%s3 + $0xc8] sm:$0xff] %vm1819, %v1795
  %1846 = vst.msk [vmem:[%s3 + $0xd0] sm:$0xff] %vm1819, %v1796
  %1847 = vst.msk [vmem:[%s3 + $0xd8] sm:$0xff] %vm1819, %v1797
  %1848 = vst.msk [vmem:[%s3 + $0xe0] sm:$0xff] %vm1819, %v1798
  %1849 = vst.msk [vmem:[%s3 + $0xe8] sm:$0xff] %vm1819, %v1799
  %1850 = vst.msk [vmem:[%s3 + $0xf0] sm:$0xff] %vm1819, %v1800
  %1851 = vst.msk [vmem:[%s3 + $0xf8] sm:$0xff] %vm1819, %v1801
  %1852 = vst.msk [vmem:[%s3 + $0x100] sm:$0xff] %vm1819, %v1802
  %1853 = vst.msk [vmem:[%s3 + $0x108] sm:$0xff] %vm1819, %v1803
  %1854 = vst.msk [vmem:[%s3 + $0x110] sm:$0xff] %vm1819, %v1804
  %1855 = vst.msk [vmem:[%s3 + $0x118] sm:$0xff] %vm1819, %v1805
  %1856 = vst.msk [vmem:[%s3 + $0x120] sm:$0xff] %vm1819, %v1806
  %1857 = vst.msk [vmem:[%s3 + $0x128] sm:$0xff] %vm1819, %v1807
  %1858 = vst.msk [vmem:[%s3 + $0x130] sm:$0xff] %vm1819, %v1808
  %1859 = vst.msk [vmem:[%s3 + $0x138] sm:$0xff] %vm1819, %v1809
  %1860 = vst.msk [vmem:[%s3 + $0x140] sm:$0xff] %vm1819, %v1810
  %1861 = vst.msk [vmem:[%s3 + $0x148] sm:$0xff] %vm1819, %v1811
  %1862 = vst.msk [vmem:[%s3 + $0x150] sm:$0xff] %vm1819, %v1812
  %1863 = vst.msk [vmem:[%s3 + $0x158] sm:$0xff] %vm1819, %v1813
  %1864 = vst.msk [vmem:[%s3 + $0x160] sm:$0xff] %vm1819, %v1814
  %1865 = vst.msk [vmem:[%s3 + $0x168] sm:$0xff] %vm1819, %v1815
  %1866 = vst.msk [vmem:[%s3 + $0x170] sm:$0xff] %vm1819, %v1816
  %1867 = vst.msk [vmem:[%s3 + $0x178] sm:$0xff] %vm1819, %v1817
  %1868 = vst.msk [vmem:[%s3 + $0x180] sm:$0xff] %vm1819, %v1818
  // Predicated region
  $region14: #{lenet3d_forward.3} parent=0 // pred_check
    _
  $region15: #{lenet3d_forward.3} parent=0 // pred_check_branch
    %1870 = sbr.rel (0) target = $region17
  $region16: #{lenet3d_forward.3} parent=0 // pred_region
    _
  $region17: #{lenet3d_forward.3} parent=0 // pred_fallthru
    _
  // Predicated region
  $region18: #{lenet3d_forward.3} parent=0 // pred_check
    _
  $region19: #{lenet3d_forward.3} parent=0 // pred_check_branch
    %1872 = sbr.rel (0) target = $region21
  $region20: #{lenet3d_forward.3} parent=0 // pred_region
    _
  $region21: #{lenet3d_forward.3} parent=0 // pred_fallthru
    _

// kernel: lenet3d_forward.4
$region0: #{lenet3d_forward.4}
  #allocation0 [shape = 'u32[]', space=smem, size = 0x4, offset = 0x4, fixed_abs, tag = 'smem constant byte address 0x4 - core index']
  #allocation1 [shape = 'u32[144,128]{1,0:T(1,128)}', space=vmem, size = 0x12000, scoped, tag = 'internal scratch']
  %s0 = inlined_call_operand.vmem [shape: f32[4,56,256], index: 0, kind: input, shape index: {}]
  %s1 = inlined_call_operand.vmem [shape: f32[256,128], index: 1, kind: input, shape index: {}]
  %s2 = inlined_call_operand.vmem [shape: f32[1,128], index: 2, kind: input, shape index: {}]
  %s3 = inlined_call_operand.vmem [shape: f32[56,16], index: 3, kind: output, shape index: {}]
  %s4 = sld [smem:[#allocation0]]
  $region22: #{lenet3d_forward.4} parent=0
    _
  %s6 = ssub.s32 1, %s4
  %s7 = scalar_select 0, %s6, %s4
  // Predicated region
  $region2: #{lenet3d_forward.4} parent=0 // pred_check
    _
  $region3: #{lenet3d_forward.4} parent=0 // pred_check_branch
    %9 = sbr.rel (0) target = $region5
  $region4: #{lenet3d_forward.4} parent=0 // pred_region
    _
  $region5: #{lenet3d_forward.4} parent=0 // pred_fallthru
    _
  // Predicated region
  $region6: #{lenet3d_forward.4} parent=0 // pred_check
    _
  $region7: #{lenet3d_forward.4} parent=0 // pred_check_branch
    %11 = sbr.rel (0) target = $region9
  $region8: #{lenet3d_forward.4} parent=0 // pred_region
    _
  $region9: #{lenet3d_forward.4} parent=0 // pred_fallthru
    _
  // Predicated region
  $region10: #{lenet3d_forward.4} parent=0 // pred_check
    _
  $region11: #{lenet3d_forward.4} parent=0 // pred_check_branch
    %13 = sbr.rel (0) target = $region13
  $region12: #{lenet3d_forward.4} parent=0 // pred_region
    _
  $region13: #{lenet3d_forward.4} parent=0 // pred_fallthru
    _
  %v14 = vld [vmem:[%s1] sm:$0xff]
  %v15 = vld [vmem:[%s1 + $0x8] sm:$0xff]
  %v16 = vld [vmem:[%s1 + $0x10] sm:$0xff]
  %v17 = vld [vmem:[%s1 + $0x18] sm:$0xff]
  %v18 = vld [vmem:[%s1 + $0x20] sm:$0xff]
  %v19 = vld [vmem:[%s1 + $0x28] sm:$0xff]
  %v20 = vld [vmem:[%s1 + $0x30] sm:$0xff]
  %v21 = vld [vmem:[%s1 + $0x38] sm:$0xff]
  %v22 = vld [vmem:[%s1 + $0x40] sm:$0xff]
  %v23 = vld [vmem:[%s1 + $0x48] sm:$0xff]
  %v24 = vld [vmem:[%s1 + $0x50] sm:$0xff]
  %v25 = vld [vmem:[%s1 + $0x58] sm:$0xff]
  %v26 = vld [vmem:[%s1 + $0x60] sm:$0xff]
  %v27 = vld [vmem:[%s1 + $0x68] sm:$0xff]
  %v28 = vld [vmem:[%s1 + $0x70] sm:$0xff]
  %v29 = vld [vmem:[%s1 + $0x78] sm:$0xff]
  %v30 = vld [vmem:[%s1 + $0x80] sm:$0xff]
  %v31 = vld [vmem:[%s1 + $0x88] sm:$0xff]
  %v32 = vld [vmem:[%s1 + $0x90] sm:$0xff]
  %v33 = vld [vmem:[%s1 + $0x98] sm:$0xff]
  %v34 = vld [vmem:[%s1 + $0xa0] sm:$0xff]
  %v35 = vld [vmem:[%s1 + $0xa8] sm:$0xff]
  %v36 = vld [vmem:[%s1 + $0xb0] sm:$0xff]
  %v37 = vld [vmem:[%s1 + $0xb8] sm:$0xff]
  %v38 = vld [vmem:[%s1 + $0xc0] sm:$0xff]
  %v39 = vld [vmem:[%s1 + $0xc8] sm:$0xff]
  %v40 = vld [vmem:[%s1 + $0xd0] sm:$0xff]
  %v41 = vld [vmem:[%s1 + $0xd8] sm:$0xff]
  %v42 = vld [vmem:[%s1 + $0xe0] sm:$0xff]
  %v43 = vld [vmem:[%s1 + $0xe8] sm:$0xff]
  %v44 = vld [vmem:[%s1 + $0xf0] sm:$0xff]
  %v45 = vld [vmem:[%s1 + $0xf8] sm:$0xff]
  %v46 = vld [vmem:[%s2] sm:$0x1]
  %v47 = vld [vmem:[%s0] sm:$0xff]
  %v48 = vld [vmem:[%s0 + $0x8] sm:$0xff]
  %v49 = vld [vmem:[%s0 + $0x10] sm:$0xff]
  %v50 = vld [vmem:[%s0 + $0x18] sm:$0xff]
  %v51 = vld [vmem:[%s0 + $0x20] sm:$0xff]
  %v52 = vld [vmem:[%s0 + $0x28] sm:$0xff]
  %v53 = vld [vmem:[%s0 + $0x30] sm:$0xff]
  %v54 = vld [vmem:[%s0 + $0x38] sm:$0xff]
  %v55 = vld [vmem:[%s0 + $0x40] sm:$0xff]
  %v56 = vld [vmem:[%s0 + $0x48] sm:$0xff]
  %v57 = vld [vmem:[%s0 + $0x50] sm:$0xff]
  %v58 = vld [vmem:[%s0 + $0x58] sm:$0xff]
  %v59 = vld [vmem:[%s0 + $0x60] sm:$0xff]
  %v60 = vld [vmem:[%s0 + $0x68] sm:$0xff]
  %v62 = vlaneseq
  %v63 = vshrl.u32 %v62, 7
  %v64 = vsub.s32 0, %v63
  %v65 = vrot.slane %v46, %v64
  %67 = vmatprep.subr.mxu0 0.0
  %68 = vmatpush1.msra.mxu0 %v29
  %69 = vmatprep.subr.mxu0 0.0
  %70 = vmatpush1.msra.mxu0 %v28
  %71 = vmatprep.subr.mxu0 0.0
  %72 = vmatpush1.msra.mxu0 %v27
  %73 = vmatprep.subr.mxu0 0.0
  %74 = vmatpush1.msra.mxu0 %v26
  %75 = vmatprep.subr.mxu0 0.0
  %76 = vmatpush1.msra.mxu0 %v25
  %77 = vmatprep.subr.mxu0 0.0
  %78 = vmatpush1.msra.mxu0 %v24
  %79 = vmatprep.subr.mxu0 0.0
  %80 = vmatpush1.msra.mxu0 %v23
  %81 = vmatprep.subr.mxu0 0.0
  %82 = vmatpush1.msra.mxu0 %v22
  %83 = vmatprep.subr.mxu0 0.0
  %84 = vmatpush1.msra.mxu0 %v21
  %85 = vmatprep.subr.mxu0 0.0
  %86 = vmatpush1.msra.mxu0 %v20
  %87 = vmatprep.subr.mxu0 0.0
  %88 = vmatpush1.msra.mxu0 %v19
  %89 = vmatprep.subr.mxu0 0.0
  %90 = vmatpush1.msra.mxu0 %v18
  %91 = vmatprep.subr.mxu0 0.0
  %92 = vmatpush1.msra.mxu0 %v17
  %93 = vmatprep.subr.mxu0 0.0
  %94 = vmatpush1.msra.mxu0 %v16
  %95 = vmatprep.subr.mxu0 0.0
  %96 = vmatpush1.msra.mxu0 %v15
  %97 = vmatprep.subr.mxu0 0.0
  %98 = vmatpush1.msra.mxu0 %v14
  %99 = vmatprep.subr.mxu0 0.0
  %100 = vmatpush2.msra.mxu0 %v45
  %101 = vmatprep.subr.mxu0 0.0
  %102 = vmatpush2.msra.mxu0 %v44
  %103 = vmatprep.subr.mxu0 0.0
  %104 = vmatpush2.msra.mxu0 %v43
  %105 = vmatprep.subr.mxu0 0.0
  %106 = vmatpush2.msra.mxu0 %v42
  %107 = vmatprep.subr.mxu0 0.0
  %108 = vmatpush2.msra.mxu0 %v41
  %109 = vmatprep.subr.mxu0 0.0
  %110 = vmatpush2.msra.mxu0 %v40
  %111 = vmatprep.subr.mxu0 0.0
  %112 = vmatpush2.msra.mxu0 %v39
  %113 = vmatprep.subr.mxu0 0.0
  %114 = vmatpush2.msra.mxu0 %v38
  %115 = vmatprep.subr.mxu0 0.0
  %116 = vmatpush2.msra.mxu0 %v37
  %117 = vmatprep.subr.mxu0 0.0
  %118 = vmatpush2.msra.mxu0 %v36
  %119 = vmatprep.subr.mxu0 0.0
  %120 = vmatpush2.msra.mxu0 %v35
  %121 = vmatprep.subr.mxu0 0.0
  %122 = vmatpush2.msra.mxu0 %v34
  %123 = vmatprep.subr.mxu0 0.0
  %124 = vmatpush2.msra.mxu0 %v33
  %125 = vmatprep.subr.mxu0 0.0
  %126 = vmatpush2.msra.mxu0 %v32
  %127 = vmatprep.subr.mxu0 0.0
  %128 = vmatpush2.msra.mxu0 %v31
  %129 = vmatprep.subr.mxu0 0.0
  %130 = vmatpush2.msra.mxu0 %v30
  %131 = vmatprep.mubr.f32.mxu0 %v48
  %132 = vmatmul.mubr.f32.gmra.mxu0 %v47
  %v133 = vpop.f32.mrf.mxu0
  %v134 = vadd.f32 %v65, %v133
  %v135 = vpop.f32.mrf.mxu0
  %136 = vmatprep.mubr.f32.mxu0 %v50
  %137 = vmatmul.mubr.f32.gmra.mxu0 %v49
  %v138 = vpop.f32.mrf.mxu0
  %v139 = vadd.f32 %v65, %v138
  %v140 = vpop.f32.mrf.mxu0
  %141 = vmatprep.mubr.f32.mxu0 %v52
  %142 = vmatmul.mubr.f32.gmra.mxu0 %v51
  %v143 = vpop.f32.mrf.mxu0
  %v144 = vadd.f32 %v65, %v143
  %v145 = vpop.f32.mrf.mxu0
  %146 = vmatprep.mubr.f32.mxu0 %v54
  %147 = vmatmul.mubr.f32.gmra.mxu0 %v53
  %v148 = vpop.f32.mrf.mxu0
  %v149 = vadd.f32 %v65, %v148
  %v150 = vpop.f32.mrf.mxu0
  %151 = vmatprep.mubr.f32.mxu0 %v56
  %152 = vmatmul.mubr.f32.gmra.mxu0 %v55
  %v153 = vpop.f32.mrf.mxu0
  %v154 = vadd.f32 %v65, %v153
  %v155 = vpop.f32.mrf.mxu0
  %156 = vmatprep.mubr.f32.mxu0 %v58
  %157 = vmatmul.mubr.f32.gmra.mxu0 %v57
  %v158 = vpop.f32.mrf.mxu0
  %v159 = vadd.f32 %v65, %v158
  %v160 = vpop.f32.mrf.mxu0
  %161 = vmatprep.mubr.f32.mxu0 %v60
  %162 = vmatmul.mubr.f32.gmra.mxu0 %v59
  %v163 = vpop.f32.mrf.mxu0
  %v164 = vadd.f32 %v65, %v163
  %v165 = vpop.f32.mrf.mxu0
  %166 = vdwg.mxu0
  %v167 = vmax.f32 %v134, 0.0
  %v168 = vmax.f32 %v139, 0.0
  %v169 = vmax.f32 %v144, 0.0
  %v170 = vmax.f32 %v149, 0.0
  %v171 = vmax.f32 %v154, 0.0
  %v172 = vmax.f32 %v159, 0.0
  %v173 = vmax.f32 %v164, 0.0
  %s174 = scalar_lea.vmem %s0, 112
  %v175 = vld [vmem:[%s174] sm:$0xff]
  %v176 = vld [vmem:[%s174 + $0x8] sm:$0xff]
  %v177 = vld [vmem:[%s174 + $0x10] sm:$0xff]
  %v178 = vld [vmem:[%s174 + $0x18] sm:$0xff]
  %v179 = vld [vmem:[%s174 + $0x20] sm:$0xff]
  %v180 = vld [vmem:[%s174 + $0x28] sm:$0xff]
  %v181 = vld [vmem:[%s174 + $0x30] sm:$0xff]
  %v182 = vld [vmem:[%s174 + $0x38] sm:$0xff]
  %v183 = vld [vmem:[%s174 + $0x40] sm:$0xff]
  %v184 = vld [vmem:[%s174 + $0x48] sm:$0xff]
  %v185 = vld [vmem:[%s174 + $0x50] sm:$0xff]
  %v186 = vld [vmem:[%s174 + $0x58] sm:$0xff]
  %v187 = vld [vmem:[%s174 + $0x60] sm:$0xff]
  %v188 = vld [vmem:[%s174 + $0x68] sm:$0xff]
  %189 = vmatprep.subr.mxu0 0.0
  %190 = vmatpush1.msra.mxu0 %v29
  %191 = vmatprep.subr.mxu0 0.0
  %192 = vmatpush1.msra.mxu0 %v28
  %193 = vmatprep.subr.mxu0 0.0
  %194 = vmatpush1.msra.mxu0 %v27
  %195 = vmatprep.subr.mxu0 0.0
  %196 = vmatpush1.msra.mxu0 %v26
  %197 = vmatprep.subr.mxu0 0.0
  %198 = vmatpush1.msra.mxu0 %v25
  %199 = vmatprep.subr.mxu0 0.0
  %200 = vmatpush1.msra.mxu0 %v24
  %201 = vmatprep.subr.mxu0 0.0
  %202 = vmatpush1.msra.mxu0 %v23
  %203 = vmatprep.subr.mxu0 0.0
  %204 = vmatpush1.msra.mxu0 %v22
  %205 = vmatprep.subr.mxu0 0.0
  %206 = vmatpush1.msra.mxu0 %v21
  %207 = vmatprep.subr.mxu0 0.0
  %208 = vmatpush1.msra.mxu0 %v20
  %209 = vmatprep.subr.mxu0 0.0
  %210 = vmatpush1.msra.mxu0 %v19
  %211 = vmatprep.subr.mxu0 0.0
  %212 = vmatpush1.msra.mxu0 %v18
  %213 = vmatprep.subr.mxu0 0.0
  %214 = vmatpush1.msra.mxu0 %v17
  %215 = vmatprep.subr.mxu0 0.0
  %216 = vmatpush1.msra.mxu0 %v16
  %217 = vmatprep.subr.mxu0 0.0
  %218 = vmatpush1.msra.mxu0 %v15
  %219 = vmatprep.subr.mxu0 0.0
  %220 = vmatpush1.msra.mxu0 %v14
  %221 = vmatprep.subr.mxu0 0.0
  %222 = vmatpush2.msra.mxu0 %v45
  %223 = vmatprep.subr.mxu0 0.0
  %224 = vmatpush2.msra.mxu0 %v44
  %225 = vmatprep.subr.mxu0 0.0
  %226 = vmatpush2.msra.mxu0 %v43
  %227 = vmatprep.subr.mxu0 0.0
  %228 = vmatpush2.msra.mxu0 %v42
  %229 = vmatprep.subr.mxu0 0.0
  %230 = vmatpush2.msra.mxu0 %v41
  %231 = vmatprep.subr.mxu0 0.0
  %232 = vmatpush2.msra.mxu0 %v40
  %233 = vmatprep.subr.mxu0 0.0
  %234 = vmatpush2.msra.mxu0 %v39
  %235 = vmatprep.subr.mxu0 0.0
  %236 = vmatpush2.msra.mxu0 %v38
  %237 = vmatprep.subr.mxu0 0.0
  %238 = vmatpush2.msra.mxu0 %v37
  %239 = vmatprep.subr.mxu0 0.0
  %240 = vmatpush2.msra.mxu0 %v36
  %241 = vmatprep.subr.mxu0 0.0
  %242 = vmatpush2.msra.mxu0 %v35
  %243 = vmatprep.subr.mxu0 0.0
  %244 = vmatpush2.msra.mxu0 %v34
  %245 = vmatprep.subr.mxu0 0.0
  %246 = vmatpush2.msra.mxu0 %v33
  %247 = vmatprep.subr.mxu0 0.0
  %248 = vmatpush2.msra.mxu0 %v32
  %249 = vmatprep.subr.mxu0 0.0
  %250 = vmatpush2.msra.mxu0 %v31
  %251 = vmatprep.subr.mxu0 0.0
  %252 = vmatpush2.msra.mxu0 %v30
  %253 = vmatprep.mubr.f32.mxu0 %v176
  %254 = vmatmul.mubr.f32.gmra.mxu0 %v175
  %v255 = vpop.f32.mrf.mxu0
  %v256 = vadd.f32 %v65, %v255
  %v257 = vpop.f32.mrf.mxu0
  %258 = vmatprep.mubr.f32.mxu0 %v178
  %259 = vmatmul.mubr.f32.gmra.mxu0 %v177
  %v260 = vpop.f32.mrf.mxu0
  %v261 = vadd.f32 %v65, %v260
  %v262 = vpop.f32.mrf.mxu0
  %263 = vmatprep.mubr.f32.mxu0 %v180
  %264 = vmatmul.mubr.f32.gmra.mxu0 %v179
  %v265 = vpop.f32.mrf.mxu0
  %v266 = vadd.f32 %v65, %v265
  %v267 = vpop.f32.mrf.mxu0
  %268 = vmatprep.mubr.f32.mxu0 %v182
  %269 = vmatmul.mubr.f32.gmra.mxu0 %v181
  %v270 = vpop.f32.mrf.mxu0
  %v271 = vadd.f32 %v65, %v270
  %v272 = vpop.f32.mrf.mxu0
  %273 = vmatprep.mubr.f32.mxu0 %v184
  %274 = vmatmul.mubr.f32.gmra.mxu0 %v183
  %v275 = vpop.f32.mrf.mxu0
  %v276 = vadd.f32 %v65, %v275
  %v277 = vpop.f32.mrf.mxu0
  %278 = vmatprep.mubr.f32.mxu0 %v186
  %279 = vmatmul.mubr.f32.gmra.mxu0 %v185
  %v280 = vpop.f32.mrf.mxu0
  %v281 = vadd.f32 %v65, %v280
  %v282 = vpop.f32.mrf.mxu0
  %283 = vmatprep.mubr.f32.mxu0 %v188
  %284 = vmatmul.mubr.f32.gmra.mxu0 %v187
  %v285 = vpop.f32.mrf.mxu0
  %v286 = vadd.f32 %v65, %v285
  %v287 = vpop.f32.mrf.mxu0
  %288 = vdwg.mxu0
  %v289 = vmax.f32 %v256, 0.0
  %v290 = vmax.f32 %v261, 0.0
  %v291 = vmax.f32 %v266, 0.0
  %v292 = vmax.f32 %v271, 0.0
  %v293 = vmax.f32 %v276, 0.0
  %v294 = vmax.f32 %v281, 0.0
  %v295 = vmax.f32 %v286, 0.0
  %v296 = vmax.f32 %v167, %v289
  %v297 = vmax.f32 %v168, %v290
  %v298 = vmax.f32 %v169, %v291
  %v299 = vmax.f32 %v170, %v292
  %v300 = vmax.f32 %v171, %v293
  %v301 = vmax.f32 %v172, %v294
  %v302 = vmax.f32 %v173, %v295
  %s303 = scalar_lea.vmem %s0, 224
  %v304 = vld [vmem:[%s303] sm:$0xff]
  %v305 = vld [vmem:[%s303 + $0x8] sm:$0xff]
  %v306 = vld [vmem:[%s303 + $0x10] sm:$0xff]
  %v307 = vld [vmem:[%s303 + $0x18] sm:$0xff]
  %v308 = vld [vmem:[%s303 + $0x20] sm:$0xff]
  %v309 = vld [vmem:[%s303 + $0x28] sm:$0xff]
  %v310 = vld [vmem:[%s303 + $0x30] sm:$0xff]
  %v311 = vld [vmem:[%s303 + $0x38] sm:$0xff]
  %v312 = vld [vmem:[%s303 + $0x40] sm:$0xff]
  %v313 = vld [vmem:[%s303 + $0x48] sm:$0xff]
  %v314 = vld [vmem:[%s303 + $0x50] sm:$0xff]
  %v315 = vld [vmem:[%s303 + $0x58] sm:$0xff]
  %v316 = vld [vmem:[%s303 + $0x60] sm:$0xff]
  %v317 = vld [vmem:[%s303 + $0x68] sm:$0xff]
  %318 = vmatprep.subr.mxu0 0.0
  %319 = vmatpush1.msra.mxu0 %v29
  %320 = vmatprep.subr.mxu0 0.0
  %321 = vmatpush1.msra.mxu0 %v28
  %322 = vmatprep.subr.mxu0 0.0
  %323 = vmatpush1.msra.mxu0 %v27
  %324 = vmatprep.subr.mxu0 0.0
  %325 = vmatpush1.msra.mxu0 %v26
  %326 = vmatprep.subr.mxu0 0.0
  %327 = vmatpush1.msra.mxu0 %v25
  %328 = vmatprep.subr.mxu0 0.0
  %329 = vmatpush1.msra.mxu0 %v24
  %330 = vmatprep.subr.mxu0 0.0
  %331 = vmatpush1.msra.mxu0 %v23
  %332 = vmatprep.subr.mxu0 0.0
  %333 = vmatpush1.msra.mxu0 %v22
  %334 = vmatprep.subr.mxu0 0.0
  %335 = vmatpush1.msra.mxu0 %v21
  %336 = vmatprep.subr.mxu0 0.0
  %337 = vmatpush1.msra.mxu0 %v20
  %338 = vmatprep.subr.mxu0 0.0
  %339 = vmatpush1.msra.mxu0 %v19
  %340 = vmatprep.subr.mxu0 0.0
  %341 = vmatpush1.msra.mxu0 %v18
  %342 = vmatprep.subr.mxu0 0.0
  %343 = vmatpush1.msra.mxu0 %v17
  %344 = vmatprep.subr.mxu0 0.0
  %345 = vmatpush1.msra.mxu0 %v16
  %346 = vmatprep.subr.mxu0 0.0
  %347 = vmatpush1.msra.mxu0 %v15
  %348 = vmatprep.subr.mxu0 0.0
  %349 = vmatpush1.msra.mxu0 %v14
  %350 = vmatprep.subr.mxu0 0.0
  %351 = vmatpush2.msra.mxu0 %v45
  %352 = vmatprep.subr.mxu0 0.0
  %353 = vmatpush2.msra.mxu0 %v44
  %354 = vmatprep.subr.mxu0 0.0
  %355 = vmatpush2.msra.mxu0 %v43
  %356 = vmatprep.subr.mxu0 0.0
  %357 = vmatpush2.msra.mxu0 %v42
  %358 = vmatprep.subr.mxu0 0.0
  %359 = vmatpush2.msra.mxu0 %v41
  %360 = vmatprep.subr.mxu0 0.0
  %361 = vmatpush2.msra.mxu0 %v40
  %362 = vmatprep.subr.mxu0 0.0
  %363 = vmatpush2.msra.mxu0 %v39
  %364 = vmatprep.subr.mxu0 0.0
  %365 = vmatpush2.msra.mxu0 %v38
  %366 = vmatprep.subr.mxu0 0.0
  %367 = vmatpush2.msra.mxu0 %v37
  %368 = vmatprep.subr.mxu0 0.0
  %369 = vmatpush2.msra.mxu0 %v36
  %370 = vmatprep.subr.mxu0 0.0
  %371 = vmatpush2.msra.mxu0 %v35
  %372 = vmatprep.subr.mxu0 0.0
  %373 = vmatpush2.msra.mxu0 %v34
  %374 = vmatprep.subr.mxu0 0.0
  %375 = vmatpush2.msra.mxu0 %v33
  %376 = vmatprep.subr.mxu0 0.0
  %377 = vmatpush2.msra.mxu0 %v32
  %378 = vmatprep.subr.mxu0 0.0
  %379 = vmatpush2.msra.mxu0 %v31
  %380 = vmatprep.subr.mxu0 0.0
  %381 = vmatpush2.msra.mxu0 %v30
  %382 = vmatprep.mubr.f32.mxu0 %v305
  %383 = vmatmul.mubr.f32.gmra.mxu0 %v304
  %v384 = vpop.f32.mrf.mxu0
  %v385 = vadd.f32 %v65, %v384
  %v386 = vpop.f32.mrf.mxu0
  %387 = vmatprep.mubr.f32.mxu0 %v307
  %388 = vmatmul.mubr.f32.gmra.mxu0 %v306
  %v389 = vpop.f32.mrf.mxu0
  %v390 = vadd.f32 %v65, %v389
  %v391 = vpop.f32.mrf.mxu0
  %392 = vmatprep.mubr.f32.mxu0 %v309
  %393 = vmatmul.mubr.f32.gmra.mxu0 %v308
  %v394 = vpop.f32.mrf.mxu0
  %v395 = vadd.f32 %v65, %v394
  %v396 = vpop.f32.mrf.mxu0
  %397 = vmatprep.mubr.f32.mxu0 %v311
  %398 = vmatmul.mubr.f32.gmra.mxu0 %v310
  %v399 = vpop.f32.mrf.mxu0
  %v400 = vadd.f32 %v65, %v399
  %v401 = vpop.f32.mrf.mxu0
  %402 = vmatprep.mubr.f32.mxu0 %v313
  %403 = vmatmul.mubr.f32.gmra.mxu0 %v312
  %v404 = vpop.f32.mrf.mxu0
  %v405 = vadd.f32 %v65, %v404
  %v406 = vpop.f32.mrf.mxu0
  %407 = vmatprep.mubr.f32.mxu0 %v315
  %408 = vmatmul.mubr.f32.gmra.mxu0 %v314
  %v409 = vpop.f32.mrf.mxu0
  %v410 = vadd.f32 %v65, %v409
  %v411 = vpop.f32.mrf.mxu0
  %412 = vmatprep.mubr.f32.mxu0 %v317
  %413 = vmatmul.mubr.f32.gmra.mxu0 %v316
  %v414 = vpop.f32.mrf.mxu0
  %v415 = vadd.f32 %v65, %v414
  %v416 = vpop.f32.mrf.mxu0
  %417 = vdwg.mxu0
  %v418 = vmax.f32 %v385, 0.0
  %v419 = vmax.f32 %v390, 0.0
  %v420 = vmax.f32 %v395, 0.0
  %v421 = vmax.f32 %v400, 0.0
  %v422 = vmax.f32 %v405, 0.0
  %v423 = vmax.f32 %v410, 0.0
  %v424 = vmax.f32 %v415, 0.0
  %v425 = vmax.f32 %v296, %v418
  %v426 = vmax.f32 %v297, %v419
  %v427 = vmax.f32 %v298, %v420
  %v428 = vmax.f32 %v299, %v421
  %v429 = vmax.f32 %v300, %v422
  %v430 = vmax.f32 %v301, %v423
  %v431 = vmax.f32 %v302, %v424
  %s432 = scalar_lea.vmem %s0, 336
  %v433 = vld [vmem:[%s432] sm:$0xff]
  %v434 = vld [vmem:[%s432 + $0x8] sm:$0xff]
  %v435 = vld [vmem:[%s432 + $0x10] sm:$0xff]
  %v436 = vld [vmem:[%s432 + $0x18] sm:$0xff]
  %v437 = vld [vmem:[%s432 + $0x20] sm:$0xff]
  %v438 = vld [vmem:[%s432 + $0x28] sm:$0xff]
  %v439 = vld [vmem:[%s432 + $0x30] sm:$0xff]
  %v440 = vld [vmem:[%s432 + $0x38] sm:$0xff]
  %v441 = vld [vmem:[%s432 + $0x40] sm:$0xff]
  %v442 = vld [vmem:[%s432 + $0x48] sm:$0xff]
  %v443 = vld [vmem:[%s432 + $0x50] sm:$0xff]
  %v444 = vld [vmem:[%s432 + $0x58] sm:$0xff]
  %v445 = vld [vmem:[%s432 + $0x60] sm:$0xff]
  %v446 = vld [vmem:[%s432 + $0x68] sm:$0xff]
  %447 = vmatprep.subr.mxu0 0.0
  %448 = vmatpush1.msra.mxu0 %v29
  %449 = vmatprep.subr.mxu0 0.0
  %450 = vmatpush1.msra.mxu0 %v28
  %451 = vmatprep.subr.mxu0 0.0
  %452 = vmatpush1.msra.mxu0 %v27
  %453 = vmatprep.subr.mxu0 0.0
  %454 = vmatpush1.msra.mxu0 %v26
  %455 = vmatprep.subr.mxu0 0.0
  %456 = vmatpush1.msra.mxu0 %v25
  %457 = vmatprep.subr.mxu0 0.0
  %458 = vmatpush1.msra.mxu0 %v24
  %459 = vmatprep.subr.mxu0 0.0
  %460 = vmatpush1.msra.mxu0 %v23
  %461 = vmatprep.subr.mxu0 0.0
  %462 = vmatpush1.msra.mxu0 %v22
  %463 = vmatprep.subr.mxu0 0.0
  %464 = vmatpush1.msra.mxu0 %v21
  %465 = vmatprep.subr.mxu0 0.0
  %466 = vmatpush1.msra.mxu0 %v20
  %467 = vmatprep.subr.mxu0 0.0
  %468 = vmatpush1.msra.mxu0 %v19
  %469 = vmatprep.subr.mxu0 0.0
  %470 = vmatpush1.msra.mxu0 %v18
  %471 = vmatprep.subr.mxu0 0.0
  %472 = vmatpush1.msra.mxu0 %v17
  %473 = vmatprep.subr.mxu0 0.0
  %474 = vmatpush1.msra.mxu0 %v16
  %475 = vmatprep.subr.mxu0 0.0
  %476 = vmatpush1.msra.mxu0 %v15
  %477 = vmatprep.subr.mxu0 0.0
  %478 = vmatpush1.msra.mxu0 %v14
  %479 = vmatprep.subr.mxu0 0.0
  %480 = vmatpush2.msra.mxu0 %v45
  %481 = vmatprep.subr.mxu0 0.0
  %482 = vmatpush2.msra.mxu0 %v44
  %483 = vmatprep.subr.mxu0 0.0
  %484 = vmatpush2.msra.mxu0 %v43
  %485 = vmatprep.subr.mxu0 0.0
  %486 = vmatpush2.msra.mxu0 %v42
  %487 = vmatprep.subr.mxu0 0.0
  %488 = vmatpush2.msra.mxu0 %v41
  %489 = vmatprep.subr.mxu0 0.0
  %490 = vmatpush2.msra.mxu0 %v40
  %491 = vmatprep.subr.mxu0 0.0
  %492 = vmatpush2.msra.mxu0 %v39
  %493 = vmatprep.subr.mxu0 0.0
  %494 = vmatpush2.msra.mxu0 %v38
  %495 = vmatprep.subr.mxu0 0.0
  %496 = vmatpush2.msra.mxu0 %v37
  %497 = vmatprep.subr.mxu0 0.0
  %498 = vmatpush2.msra.mxu0 %v36
  %499 = vmatprep.subr.mxu0 0.0
  %500 = vmatpush2.msra.mxu0 %v35
  %501 = vmatprep.subr.mxu0 0.0
  %502 = vmatpush2.msra.mxu0 %v34
  %503 = vmatprep.subr.mxu0 0.0
  %504 = vmatpush2.msra.mxu0 %v33
  %505 = vmatprep.subr.mxu0 0.0
  %506 = vmatpush2.msra.mxu0 %v32
  %507 = vmatprep.subr.mxu0 0.0
  %508 = vmatpush2.msra.mxu0 %v31
  %509 = vmatprep.subr.mxu0 0.0
  %510 = vmatpush2.msra.mxu0 %v30
  %511 = vmatprep.mubr.f32.mxu0 %v434
  %512 = vmatmul.mubr.f32.gmra.mxu0 %v433
  %v513 = vpop.f32.mrf.mxu0
  %v514 = vadd.f32 %v65, %v513
  %v515 = vpop.f32.mrf.mxu0
  %516 = vmatprep.mubr.f32.mxu0 %v436
  %517 = vmatmul.mubr.f32.gmra.mxu0 %v435
  %v518 = vpop.f32.mrf.mxu0
  %v519 = vadd.f32 %v65, %v518
  %v520 = vpop.f32.mrf.mxu0
  %521 = vmatprep.mubr.f32.mxu0 %v438
  %522 = vmatmul.mubr.f32.gmra.mxu0 %v437
  %v523 = vpop.f32.mrf.mxu0
  %v524 = vadd.f32 %v65, %v523
  %v525 = vpop.f32.mrf.mxu0
  %526 = vmatprep.mubr.f32.mxu0 %v440
  %527 = vmatmul.mubr.f32.gmra.mxu0 %v439
  %v528 = vpop.f32.mrf.mxu0
  %v529 = vadd.f32 %v65, %v528
  %v530 = vpop.f32.mrf.mxu0
  %531 = vmatprep.mubr.f32.mxu0 %v442
  %532 = vmatmul.mubr.f32.gmra.mxu0 %v441
  %v533 = vpop.f32.mrf.mxu0
  %v534 = vadd.f32 %v65, %v533
  %v535 = vpop.f32.mrf.mxu0
  %536 = vmatprep.mubr.f32.mxu0 %v444
  %537 = vmatmul.mubr.f32.gmra.mxu0 %v443
  %v538 = vpop.f32.mrf.mxu0
  %v539 = vadd.f32 %v65, %v538
  %v540 = vpop.f32.mrf.mxu0
  %541 = vmatprep.mubr.f32.mxu0 %v446
  %542 = vmatmul.mubr.f32.gmra.mxu0 %v445
  %v543 = vpop.f32.mrf.mxu0
  %v544 = vadd.f32 %v65, %v543
  %v545 = vpop.f32.mrf.mxu0
  %546 = vdwg.mxu0
  %v547 = vmax.f32 %v514, 0.0
  %v548 = vmax.f32 %v519, 0.0
  %v549 = vmax.f32 %v524, 0.0
  %v550 = vmax.f32 %v529, 0.0
  %v551 = vmax.f32 %v534, 0.0
  %v552 = vmax.f32 %v539, 0.0
  %v553 = vmax.f32 %v544, 0.0
  %v554 = vmax.f32 %v425, %v547
  %v555 = vmax.f32 %v426, %v548
  %v556 = vmax.f32 %v427, %v549
  %v557 = vmax.f32 %v428, %v550
  %v558 = vmax.f32 %v429, %v551
  %v559 = vmax.f32 %v430, %v552
  %v560 = vmax.f32 %v431, %v553
  %vm561 = vcmask 130048
  %562 = vst.msk [vmem:[%s3] sm:$0xff] %vm561, %v554
  %563 = vst.msk [vmem:[%s3 + $0x8] sm:$0xff] %vm561, %v555
  %564 = vst.msk [vmem:[%s3 + $0x10] sm:$0xff] %vm561, %v556
  %565 = vst.msk [vmem:[%s3 + $0x18] sm:$0xff] %vm561, %v557
  %566 = vst.msk [vmem:[%s3 + $0x20] sm:$0xff] %vm561, %v558
  %567 = vst.msk [vmem:[%s3 + $0x28] sm:$0xff] %vm561, %v559
  %568 = vst.msk [vmem:[%s3 + $0x30] sm:$0xff] %vm561, %v560
  // Predicated region
  $region14: #{lenet3d_forward.4} parent=0 // pred_check
    _
  $region15: #{lenet3d_forward.4} parent=0 // pred_check_branch
    %570 = sbr.rel (0) target = $region17
  $region16: #{lenet3d_forward.4} parent=0 // pred_region
    _
  $region17: #{lenet3d_forward.4} parent=0 // pred_fallthru
    _
  // Predicated region
  $region18: #{lenet3d_forward.4} parent=0 // pred_check
    _
  $region19: #{lenet3d_forward.4} parent=0 // pred_check_branch
    %572 = sbr.rel (0) target = $region21
  $region20: #{lenet3d_forward.4} parent=0 // pred_region
    _
  $region21: #{lenet3d_forward.4} parent=0 // pred_fallthru
    _

// kernel: lenet3d_forward.5
$region0: #{lenet3d_forward.5}
  #allocation0 [shape = 'u32[]', space=smem, size = 0x4, offset = 0x4, fixed_abs, tag = 'smem constant byte address 0x4 - core index']
  #allocation1 [shape = 'u32[144,128]{1,0:T(1,128)}', space=vmem, size = 0x12000, scoped, tag = 'internal scratch']
  %s0 = inlined_call_operand.vmem [shape: f32[8,512], index: 0, kind: input, shape index: {}]
  %s1 = inlined_call_operand.vmem [shape: f32[512,128], index: 1, kind: input, shape index: {}]
  %s2 = inlined_call_operand.vmem [shape: f32[1,128], index: 2, kind: input, shape index: {}]
  %s3 = inlined_call_operand.vmem [shape: f32[128,128], index: 3, kind: input, shape index: {}]
  %s4 = inlined_call_operand.vmem [shape: f32[1,128], index: 4, kind: input, shape index: {}]
  %s5 = inlined_call_operand.vmem [shape: f32[128,128], index: 5, kind: input, shape index: {}]
  %s6 = inlined_call_operand.vmem [shape: f32[1,128], index: 6, kind: input, shape index: {}]
  %s7 = inlined_call_operand.vmem [shape: f32[8,128], index: 7, kind: output, shape index: {}]
  %s8 = sld [smem:[#allocation0]]
  $region38: #{lenet3d_forward.5} parent=0
    _
  %s10 = ssub.s32 1, %s8
  %s11 = scalar_select 0, %s10, %s8
  // Predicated region
  $region2: #{lenet3d_forward.5} parent=0 // pred_check
    _
  $region3: #{lenet3d_forward.5} parent=0 // pred_check_branch
    %13 = sbr.rel (0) target = $region5
  $region4: #{lenet3d_forward.5} parent=0 // pred_region
    _
  $region5: #{lenet3d_forward.5} parent=0 // pred_fallthru
    _
  // Predicated region
  $region6: #{lenet3d_forward.5} parent=0 // pred_check
    _
  $region7: #{lenet3d_forward.5} parent=0 // pred_check_branch
    %15 = sbr.rel (0) target = $region9
  $region8: #{lenet3d_forward.5} parent=0 // pred_region
    _
  $region9: #{lenet3d_forward.5} parent=0 // pred_fallthru
    _
  // Predicated region
  $region10: #{lenet3d_forward.5} parent=0 // pred_check
    _
  $region11: #{lenet3d_forward.5} parent=0 // pred_check_branch
    %17 = sbr.rel (0) target = $region13
  $region12: #{lenet3d_forward.5} parent=0 // pred_region
    _
  $region13: #{lenet3d_forward.5} parent=0 // pred_fallthru
    _
  // Predicated region
  $region14: #{lenet3d_forward.5} parent=0 // pred_check
    _
  $region15: #{lenet3d_forward.5} parent=0 // pred_check_branch
    %19 = sbr.rel (0) target = $region17
  $region16: #{lenet3d_forward.5} parent=0 // pred_region
    _
  $region17: #{lenet3d_forward.5} parent=0 // pred_fallthru
    _
  // Predicated region
  $region18: #{lenet3d_forward.5} parent=0 // pred_check
    _
  $region19: #{lenet3d_forward.5} parent=0 // pred_check_branch
    %21 = sbr.rel (0) target = $region21
  $region20: #{lenet3d_forward.5} parent=0 // pred_region
    _
  $region21: #{lenet3d_forward.5} parent=0 // pred_fallthru
    _
  // Predicated region
  $region22: #{lenet3d_forward.5} parent=0 // pred_check
    _
  $region23: #{lenet3d_forward.5} parent=0 // pred_check_branch
    %23 = sbr.rel (0) target = $region25
  $region24: #{lenet3d_forward.5} parent=0 // pred_region
    _
  $region25: #{lenet3d_forward.5} parent=0 // pred_fallthru
    _
  // Predicated region
  $region26: #{lenet3d_forward.5} parent=0 // pred_check
    _
  $region27: #{lenet3d_forward.5} parent=0 // pred_check_branch
    %25 = sbr.rel (0) target = $region29
  $region28: #{lenet3d_forward.5} parent=0 // pred_region
    _
  $region29: #{lenet3d_forward.5} parent=0 // pred_fallthru
    _
  %v26 = vld [vmem:[%s0] sm:$0xff]
  %v27 = vld [vmem:[%s0 + $0x8] sm:$0xff]
  %v28 = vld [vmem:[%s0 + $0x10] sm:$0xff]
  %v29 = vld [vmem:[%s0 + $0x18] sm:$0xff]
  %v30 = vld [vmem:[%s1] sm:$0xff]
  %v31 = vld [vmem:[%s1 + $0x8] sm:$0xff]
  %v32 = vld [vmem:[%s1 + $0x10] sm:$0xff]
  %v33 = vld [vmem:[%s1 + $0x18] sm:$0xff]
  %v34 = vld [vmem:[%s1 + $0x20] sm:$0xff]
  %v35 = vld [vmem:[%s1 + $0x28] sm:$0xff]
  %v36 = vld [vmem:[%s1 + $0x30] sm:$0xff]
  %v37 = vld [vmem:[%s1 + $0x38] sm:$0xff]
  %v38 = vld [vmem:[%s1 + $0x40] sm:$0xff]
  %v39 = vld [vmem:[%s1 + $0x48] sm:$0xff]
  %v40 = vld [vmem:[%s1 + $0x50] sm:$0xff]
  %v41 = vld [vmem:[%s1 + $0x58] sm:$0xff]
  %v42 = vld [vmem:[%s1 + $0x60] sm:$0xff]
  %v43 = vld [vmem:[%s1 + $0x68] sm:$0xff]
  %v44 = vld [vmem:[%s1 + $0x70] sm:$0xff]
  %v45 = vld [vmem:[%s1 + $0x78] sm:$0xff]
  %v46 = vld [vmem:[%s1 + $0x80] sm:$0xff]
  %v47 = vld [vmem:[%s1 + $0x88] sm:$0xff]
  %v48 = vld [vmem:[%s1 + $0x90] sm:$0xff]
  %v49 = vld [vmem:[%s1 + $0x98] sm:$0xff]
  %v50 = vld [vmem:[%s1 + $0xa0] sm:$0xff]
  %v51 = vld [vmem:[%s1 + $0xa8] sm:$0xff]
  %v52 = vld [vmem:[%s1 + $0xb0] sm:$0xff]
  %v53 = vld [vmem:[%s1 + $0xb8] sm:$0xff]
  %v54 = vld [vmem:[%s1 + $0xc0] sm:$0xff]
  %v55 = vld [vmem:[%s1 + $0xc8] sm:$0xff]
  %v56 = vld [vmem:[%s1 + $0xd0] sm:$0xff]
  %v57 = vld [vmem:[%s1 + $0xd8] sm:$0xff]
  %v58 = vld [vmem:[%s1 + $0xe0] sm:$0xff]
  %v59 = vld [vmem:[%s1 + $0xe8] sm:$0xff]
  %v60 = vld [vmem:[%s1 + $0xf0] sm:$0xff]
  %v61 = vld [vmem:[%s1 + $0xf8] sm:$0xff]
  %v62 = vld [vmem:[%s1 + $0x100] sm:$0xff]
  %v63 = vld [vmem:[%s1 + $0x108] sm:$0xff]
  %v64 = vld [vmem:[%s1 + $0x110] sm:$0xff]
  %v65 = vld [vmem:[%s1 + $0x118] sm:$0xff]
  %v66 = vld [vmem:[%s1 + $0x120] sm:$0xff]
  %v67 = vld [vmem:[%s1 + $0x128] sm:$0xff]
  %v68 = vld [vmem:[%s1 + $0x130] sm:$0xff]
  %v69 = vld [vmem:[%s1 + $0x138] sm:$0xff]
  %v70 = vld [vmem:[%s1 + $0x140] sm:$0xff]
  %v71 = vld [vmem:[%s1 + $0x148] sm:$0xff]
  %v72 = vld [vmem:[%s1 + $0x150] sm:$0xff]
  %v73 = vld [vmem:[%s1 + $0x158] sm:$0xff]
  %v74 = vld [vmem:[%s1 + $0x160] sm:$0xff]
  %v75 = vld [vmem:[%s1 + $0x168] sm:$0xff]
  %v76 = vld [vmem:[%s1 + $0x170] sm:$0xff]
  %v77 = vld [vmem:[%s1 + $0x178] sm:$0xff]
  %v78 = vld [vmem:[%s1 + $0x180] sm:$0xff]
  %v79 = vld [vmem:[%s1 + $0x188] sm:$0xff]
  %v80 = vld [vmem:[%s1 + $0x190] sm:$0xff]
  %v81 = vld [vmem:[%s1 + $0x198] sm:$0xff]
  %v82 = vld [vmem:[%s1 + $0x1a0] sm:$0xff]
  %v83 = vld [vmem:[%s1 + $0x1a8] sm:$0xff]
  %v84 = vld [vmem:[%s1 + $0x1b0] sm:$0xff]
  %v85 = vld [vmem:[%s1 + $0x1b8] sm:$0xff]
  %v86 = vld [vmem:[%s1 + $0x1c0] sm:$0xff]
  %v87 = vld [vmem:[%s1 + $0x1c8] sm:$0xff]
  %v88 = vld [vmem:[%s1 + $0x1d0] sm:$0xff]
  %v89 = vld [vmem:[%s1 + $0x1d8] sm:$0xff]
  %v90 = vld [vmem:[%s1 + $0x1e0] sm:$0xff]
  %v91 = vld [vmem:[%s1 + $0x1e8] sm:$0xff]
  %v92 = vld [vmem:[%s1 + $0x1f0] sm:$0xff]
  %v93 = vld [vmem:[%s1 + $0x1f8] sm:$0xff]
  %v94 = vld [vmem:[%s2] sm:$0x1]
  %v96 = vlaneseq
  %v97 = vshrl.u32 %v96, 7
  %v98 = vsub.s32 0, %v97
  %v99 = vrot.slane %v94, %v98
  %101 = vmatprep.subr.mxu0 0.0
  %102 = vmatpush1.msra.mxu0 %v45
  %103 = vmatprep.subr.mxu0 0.0
  %104 = vmatpush1.msra.mxu0 %v44
  %105 = vmatprep.subr.mxu0 0.0
  %106 = vmatpush1.msra.mxu0 %v43
  %107 = vmatprep.subr.mxu0 0.0
  %108 = vmatpush1.msra.mxu0 %v42
  %109 = vmatprep.subr.mxu0 0.0
  %110 = vmatpush1.msra.mxu0 %v41
  %111 = vmatprep.subr.mxu0 0.0
  %112 = vmatpush1.msra.mxu0 %v40
  %113 = vmatprep.subr.mxu0 0.0
  %114 = vmatpush1.msra.mxu0 %v39
  %115 = vmatprep.subr.mxu0 0.0
  %116 = vmatpush1.msra.mxu0 %v38
  %117 = vmatprep.subr.mxu0 0.0
  %118 = vmatpush1.msra.mxu0 %v37
  %119 = vmatprep.subr.mxu0 0.0
  %120 = vmatpush1.msra.mxu0 %v36
  %121 = vmatprep.subr.mxu0 0.0
  %122 = vmatpush1.msra.mxu0 %v35
  %123 = vmatprep.subr.mxu0 0.0
  %124 = vmatpush1.msra.mxu0 %v34
  %125 = vmatprep.subr.mxu0 0.0
  %126 = vmatpush1.msra.mxu0 %v33
  %127 = vmatprep.subr.mxu0 0.0
  %128 = vmatpush1.msra.mxu0 %v32
  %129 = vmatprep.subr.mxu0 0.0
  %130 = vmatpush1.msra.mxu0 %v31
  %131 = vmatprep.subr.mxu0 0.0
  %132 = vmatpush1.msra.mxu0 %v30
  %133 = vmatprep.subr.mxu0 0.0
  %134 = vmatpush2.msra.mxu0 %v61
  %135 = vmatprep.subr.mxu0 0.0
  %136 = vmatpush2.msra.mxu0 %v60
  %137 = vmatprep.subr.mxu0 0.0
  %138 = vmatpush2.msra.mxu0 %v59
  %139 = vmatprep.subr.mxu0 0.0
  %140 = vmatpush2.msra.mxu0 %v58
  %141 = vmatprep.subr.mxu0 0.0
  %142 = vmatpush2.msra.mxu0 %v57
  %143 = vmatprep.subr.mxu0 0.0
  %144 = vmatpush2.msra.mxu0 %v56
  %145 = vmatprep.subr.mxu0 0.0
  %146 = vmatpush2.msra.mxu0 %v55
  %147 = vmatprep.subr.mxu0 0.0
  %148 = vmatpush2.msra.mxu0 %v54
  %149 = vmatprep.subr.mxu0 0.0
  %150 = vmatpush2.msra.mxu0 %v53
  %151 = vmatprep.subr.mxu0 0.0
  %152 = vmatpush2.msra.mxu0 %v52
  %153 = vmatprep.subr.mxu0 0.0
  %154 = vmatpush2.msra.mxu0 %v51
  %155 = vmatprep.subr.mxu0 0.0
  %156 = vmatpush2.msra.mxu0 %v50
  %157 = vmatprep.subr.mxu0 0.0
  %158 = vmatpush2.msra.mxu0 %v49
  %159 = vmatprep.subr.mxu0 0.0
  %160 = vmatpush2.msra.mxu0 %v48
  %161 = vmatprep.subr.mxu0 0.0
  %162 = vmatpush2.msra.mxu0 %v47
  %163 = vmatprep.subr.mxu0 0.0
  %164 = vmatpush2.msra.mxu0 %v46
  %165 = vmatprep.mubr.f32.mxu0 %v27
  %166 = vmatmul.mubr.f32.gmra.mxu0 %v26
  %v167 = vpop.f32.mrf.mxu0
  %v168 = vadd.f32 %v99, %v167
  %v169 = vpop.f32.mrf.mxu0
  %170 = vdwg.mxu0
  %171 = vmatprep.subr.mxu0 0.0
  %172 = vmatpush1.msra.mxu0 %v77
  %173 = vmatprep.subr.mxu0 0.0
  %174 = vmatpush1.msra.mxu0 %v76
  %175 = vmatprep.subr.mxu0 0.0
  %176 = vmatpush1.msra.mxu0 %v75
  %177 = vmatprep.subr.mxu0 0.0
  %178 = vmatpush1.msra.mxu0 %v74
  %179 = vmatprep.subr.mxu0 0.0
  %180 = vmatpush1.msra.mxu0 %v73
  %181 = vmatprep.subr.mxu0 0.0
  %182 = vmatpush1.msra.mxu0 %v72
  %183 = vmatprep.subr.mxu0 0.0
  %184 = vmatpush1.msra.mxu0 %v71
  %185 = vmatprep.subr.mxu0 0.0
  %186 = vmatpush1.msra.mxu0 %v70
  %187 = vmatprep.subr.mxu0 0.0
  %188 = vmatpush1.msra.mxu0 %v69
  %189 = vmatprep.subr.mxu0 0.0
  %190 = vmatpush1.msra.mxu0 %v68
  %191 = vmatprep.subr.mxu0 0.0
  %192 = vmatpush1.msra.mxu0 %v67
  %193 = vmatprep.subr.mxu0 0.0
  %194 = vmatpush1.msra.mxu0 %v66
  %195 = vmatprep.subr.mxu0 0.0
  %196 = vmatpush1.msra.mxu0 %v65
  %197 = vmatprep.subr.mxu0 0.0
  %198 = vmatpush1.msra.mxu0 %v64
  %199 = vmatprep.subr.mxu0 0.0
  %200 = vmatpush1.msra.mxu0 %v63
  %201 = vmatprep.subr.mxu0 0.0
  %202 = vmatpush1.msra.mxu0 %v62
  %203 = vmatprep.subr.mxu0 0.0
  %204 = vmatpush2.msra.mxu0 %v93
  %205 = vmatprep.subr.mxu0 0.0
  %206 = vmatpush2.msra.mxu0 %v92
  %207 = vmatprep.subr.mxu0 0.0
  %208 = vmatpush2.msra.mxu0 %v91
  %209 = vmatprep.subr.mxu0 0.0
  %210 = vmatpush2.msra.mxu0 %v90
  %211 = vmatprep.subr.mxu0 0.0
  %212 = vmatpush2.msra.mxu0 %v89
  %213 = vmatprep.subr.mxu0 0.0
  %214 = vmatpush2.msra.mxu0 %v88
  %215 = vmatprep.subr.mxu0 0.0
  %216 = vmatpush2.msra.mxu0 %v87
  %217 = vmatprep.subr.mxu0 0.0
  %218 = vmatpush2.msra.mxu0 %v86
  %219 = vmatprep.subr.mxu0 0.0
  %220 = vmatpush2.msra.mxu0 %v85
  %221 = vmatprep.subr.mxu0 0.0
  %222 = vmatpush2.msra.mxu0 %v84
  %223 = vmatprep.subr.mxu0 0.0
  %224 = vmatpush2.msra.mxu0 %v83
  %225 = vmatprep.subr.mxu0 0.0
  %226 = vmatpush2.msra.mxu0 %v82
  %227 = vmatprep.subr.mxu0 0.0
  %228 = vmatpush2.msra.mxu0 %v81
  %229 = vmatprep.subr.mxu0 0.0
  %230 = vmatpush2.msra.mxu0 %v80
  %231 = vmatprep.subr.mxu0 0.0
  %232 = vmatpush2.msra.mxu0 %v79
  %233 = vmatprep.subr.mxu0 0.0
  %234 = vmatpush2.msra.mxu0 %v78
  %235 = vmatprep.mubr.f32.mxu0 %v29
  %236 = vmatmul.mubr.f32.gmra.mxu0 %v28
  %v237 = vpop.f32.mrf.mxu0
  %v238 = vadd.f32 %v168, %v237
  %v239 = vpop.f32.mrf.mxu0
  %240 = vdwg.mxu0
  %v241 = vmax.f32 %v238, 0.0
  %v242 = vld [vmem:[%s3] sm:$0xff]
  %v243 = vld [vmem:[%s3 + $0x8] sm:$0xff]
  %v244 = vld [vmem:[%s3 + $0x10] sm:$0xff]
  %v245 = vld [vmem:[%s3 + $0x18] sm:$0xff]
  %v246 = vld [vmem:[%s3 + $0x20] sm:$0xff]
  %v247 = vld [vmem:[%s3 + $0x28] sm:$0xff]
  %v248 = vld [vmem:[%s3 + $0x30] sm:$0xff]
  %v249 = vld [vmem:[%s3 + $0x38] sm:$0xff]
  %v250 = vld [vmem:[%s3 + $0x40] sm:$0xff]
  %v251 = vld [vmem:[%s3 + $0x48] sm:$0xff]
  %v252 = vld [vmem:[%s3 + $0x50] sm:$0xff]
  %v253 = vld [vmem:[%s3 + $0x58] sm:$0xff]
  %v254 = vld [vmem:[%s3 + $0x60] sm:$0xff]
  %v255 = vld [vmem:[%s3 + $0x68] sm:$0xff]
  %v256 = vld [vmem:[%s3 + $0x70] sm:$0xff]
  %v257 = vld [vmem:[%s3 + $0x78] sm:$0xff]
  %v258 = vld [vmem:[%s4] sm:$0x1]
  %v260 = vlaneseq
  %v261 = vshrl.u32 %v260, 7
  %v262 = vsub.s32 0, %v261
  %v263 = vrot.slane %v258, %v262
  %265 = vmatprep.subr.mxu0 0.0
  %266 = vmatpush1.msra.mxu0 %v257
  %267 = vmatprep.subr.mxu0 0.0
  %268 = vmatpush1.msra.mxu0 %v256
  %269 = vmatprep.subr.mxu0 0.0
  %270 = vmatpush1.msra.mxu0 %v255
  %271 = vmatprep.subr.mxu0 0.0
  %272 = vmatpush1.msra.mxu0 %v254
  %273 = vmatprep.subr.mxu0 0.0
  %274 = vmatpush1.msra.mxu0 %v253
  %275 = vmatprep.subr.mxu0 0.0
  %276 = vmatpush1.msra.mxu0 %v252
  %277 = vmatprep.subr.mxu0 0.0
  %278 = vmatpush1.msra.mxu0 %v251
  %279 = vmatprep.subr.mxu0 0.0
  %280 = vmatpush1.msra.mxu0 %v250
  %281 = vmatprep.subr.mxu0 0.0
  %282 = vmatpush1.msra.mxu0 %v249
  %283 = vmatprep.subr.mxu0 0.0
  %284 = vmatpush1.msra.mxu0 %v248
  %285 = vmatprep.subr.mxu0 0.0
  %286 = vmatpush1.msra.mxu0 %v247
  %287 = vmatprep.subr.mxu0 0.0
  %288 = vmatpush1.msra.mxu0 %v246
  %289 = vmatprep.subr.mxu0 0.0
  %290 = vmatpush1.msra.mxu0 %v245
  %291 = vmatprep.subr.mxu0 0.0
  %292 = vmatpush1.msra.mxu0 %v244
  %293 = vmatprep.subr.mxu0 0.0
  %294 = vmatpush1.msra.mxu0 %v243
  %295 = vmatprep.subr.mxu0 0.0
  %296 = vmatpush1.msra.mxu0 %v242
  %297 = vmatprep.subr.mxu0 0.0
  %298 = vmatpush2.msra.mxu0 0.0
  %299 = vmatprep.subr.mxu0 0.0
  %300 = vmatpush2.msra.mxu0 0.0
  %301 = vmatprep.subr.mxu0 0.0
  %302 = vmatpush2.msra.mxu0 0.0
  %303 = vmatprep.subr.mxu0 0.0
  %304 = vmatpush2.msra.mxu0 0.0
  %305 = vmatprep.subr.mxu0 0.0
  %306 = vmatpush2.msra.mxu0 0.0
  %307 = vmatprep.subr.mxu0 0.0
  %308 = vmatpush2.msra.mxu0 0.0
  %309 = vmatprep.subr.mxu0 0.0
  %310 = vmatpush2.msra.mxu0 0.0
  %311 = vmatprep.subr.mxu0 0.0
  %312 = vmatpush2.msra.mxu0 0.0
  %313 = vmatprep.subr.mxu0 0.0
  %314 = vmatpush2.msra.mxu0 0.0
  %315 = vmatprep.subr.mxu0 0.0
  %316 = vmatpush2.msra.mxu0 0.0
  %317 = vmatprep.subr.mxu0 0.0
  %318 = vmatpush2.msra.mxu0 0.0
  %319 = vmatprep.subr.mxu0 0.0
  %320 = vmatpush2.msra.mxu0 0.0
  %321 = vmatprep.subr.mxu0 0.0
  %322 = vmatpush2.msra.mxu0 0.0
  %323 = vmatprep.subr.mxu0 0.0
  %324 = vmatpush2.msra.mxu0 0.0
  %325 = vmatprep.subr.mxu0 0.0
  %326 = vmatpush2.msra.mxu0 0.0
  %327 = vmatprep.subr.mxu0 0.0
  %328 = vmatpush2.msra.mxu0 0.0
  %329 = vmatprep.mubr.f32.mxu0 0.0
  %330 = vmatmul.mubr.f32.gmra.mxu0 %v241
  %v331 = vpop.f32.mrf.mxu0
  %v332 = vadd.f32 %v263, %v331
  %v333 = vpop.f32.mrf.mxu0
  %334 = vdwg.mxu0
  %v335 = vmax.f32 %v332, 0.0
  %v336 = vld [vmem:[%s5] sm:$0xff]
  %v337 = vld [vmem:[%s5 + $0x8] sm:$0xff]
  %v338 = vld [vmem:[%s5 + $0x10] sm:$0xff]
  %v339 = vld [vmem:[%s5 + $0x18] sm:$0xff]
  %v340 = vld [vmem:[%s5 + $0x20] sm:$0xff]
  %v341 = vld [vmem:[%s5 + $0x28] sm:$0xff]
  %v342 = vld [vmem:[%s5 + $0x30] sm:$0xff]
  %v343 = vld [vmem:[%s5 + $0x38] sm:$0xff]
  %v344 = vld [vmem:[%s5 + $0x40] sm:$0xff]
  %v345 = vld [vmem:[%s5 + $0x48] sm:$0xff]
  %v346 = vld [vmem:[%s5 + $0x50] sm:$0xff]
  %v347 = vld [vmem:[%s5 + $0x58] sm:$0xff]
  %v348 = vld [vmem:[%s5 + $0x60] sm:$0xff]
  %v349 = vld [vmem:[%s5 + $0x68] sm:$0xff]
  %v350 = vld [vmem:[%s5 + $0x70] sm:$0xff]
  %v351 = vld [vmem:[%s5 + $0x78] sm:$0xff]
  %v352 = vld [vmem:[%s6] sm:$0x1]
  %v354 = vlaneseq
  %v355 = vshrl.u32 %v354, 7
  %v356 = vsub.s32 0, %v355
  %v357 = vrot.slane %v352, %v356
  %359 = vmatprep.subr.mxu0 0.0
  %360 = vmatpush1.msra.mxu0 %v351
  %361 = vmatprep.subr.mxu0 0.0
  %362 = vmatpush1.msra.mxu0 %v350
  %363 = vmatprep.subr.mxu0 0.0
  %364 = vmatpush1.msra.mxu0 %v349
  %365 = vmatprep.subr.mxu0 0.0
  %366 = vmatpush1.msra.mxu0 %v348
  %367 = vmatprep.subr.mxu0 0.0
  %368 = vmatpush1.msra.mxu0 %v347
  %369 = vmatprep.subr.mxu0 0.0
  %370 = vmatpush1.msra.mxu0 %v346
  %371 = vmatprep.subr.mxu0 0.0
  %372 = vmatpush1.msra.mxu0 %v345
  %373 = vmatprep.subr.mxu0 0.0
  %374 = vmatpush1.msra.mxu0 %v344
  %375 = vmatprep.subr.mxu0 0.0
  %376 = vmatpush1.msra.mxu0 %v343
  %377 = vmatprep.subr.mxu0 0.0
  %378 = vmatpush1.msra.mxu0 %v342
  %379 = vmatprep.subr.mxu0 0.0
  %380 = vmatpush1.msra.mxu0 %v341
  %381 = vmatprep.subr.mxu0 0.0
  %382 = vmatpush1.msra.mxu0 %v340
  %383 = vmatprep.subr.mxu0 0.0
  %384 = vmatpush1.msra.mxu0 %v339
  %385 = vmatprep.subr.mxu0 0.0
  %386 = vmatpush1.msra.mxu0 %v338
  %387 = vmatprep.subr.mxu0 0.0
  %388 = vmatpush1.msra.mxu0 %v337
  %389 = vmatprep.subr.mxu0 0.0
  %390 = vmatpush1.msra.mxu0 %v336
  %391 = vmatprep.subr.mxu0 0.0
  %392 = vmatpush2.msra.mxu0 0.0
  %393 = vmatprep.subr.mxu0 0.0
  %394 = vmatpush2.msra.mxu0 0.0
  %395 = vmatprep.subr.mxu0 0.0
  %396 = vmatpush2.msra.mxu0 0.0
  %397 = vmatprep.subr.mxu0 0.0
  %398 = vmatpush2.msra.mxu0 0.0
  %399 = vmatprep.subr.mxu0 0.0
  %400 = vmatpush2.msra.mxu0 0.0
  %401 = vmatprep.subr.mxu0 0.0
  %402 = vmatpush2.msra.mxu0 0.0
  %403 = vmatprep.subr.mxu0 0.0
  %404 = vmatpush2.msra.mxu0 0.0
  %405 = vmatprep.subr.mxu0 0.0
  %406 = vmatpush2.msra.mxu0 0.0
  %407 = vmatprep.subr.mxu0 0.0
  %408 = vmatpush2.msra.mxu0 0.0
  %409 = vmatprep.subr.mxu0 0.0
  %410 = vmatpush2.msra.mxu0 0.0
  %411 = vmatprep.subr.mxu0 0.0
  %412 = vmatpush2.msra.mxu0 0.0
  %413 = vmatprep.subr.mxu0 0.0
  %414 = vmatpush2.msra.mxu0 0.0
  %415 = vmatprep.subr.mxu0 0.0
  %416 = vmatpush2.msra.mxu0 0.0
  %417 = vmatprep.subr.mxu0 0.0
  %418 = vmatpush2.msra.mxu0 0.0
  %419 = vmatprep.subr.mxu0 0.0
  %420 = vmatpush2.msra.mxu0 0.0
  %421 = vmatprep.subr.mxu0 0.0
  %422 = vmatpush2.msra.mxu0 0.0
  %423 = vmatprep.mubr.f32.mxu0 0.0
  %424 = vmatmul.mubr.f32.gmra.mxu0 %v335
  %v425 = vpop.f32.mrf.mxu0
  %v426 = vadd.f32 %v357, %v425
  %v427 = vpop.f32.mrf.mxu0
  %428 = vdwg.mxu0
  %429 = vst [vmem:[%s7] sm:$0xff] %v426
  // Predicated region
  $region30: #{lenet3d_forward.5} parent=0 // pred_check
    _
  $region31: #{lenet3d_forward.5} parent=0 // pred_check_branch
    %431 = sbr.rel (0) target = $region33
  $region32: #{lenet3d_forward.5} parent=0 // pred_region
    _
  $region33: #{lenet3d_forward.5} parent=0 // pred_fallthru
    _
  // Predicated region
  $region34: #{lenet3d_forward.5} parent=0 // pred_check
    _
  $region35: #{lenet3d_forward.5} parent=0 // pred_check_branch
    %433 = sbr.rel (0) target = $region37
  $region36: #{lenet3d_forward.5} parent=0 // pred_region
    _
  $region37: #{lenet3d_forward.5} parent=0 // pred_fallthru
    _

</llo_original>
